<compile_context>
chip_gen: v7x
topology: tpu7x:2x2x1
jax: 0.10.0
libtpu: 0.0.40
codegen_flags: <defaults>
</compile_context>

<pallas_src>
import jax
import jax.numpy as jnp
from jax.experimental import pallas as pl
from jax.experimental.pallas import tpu as pltpu

IN_FEATURES = 32 * 32 * 3   # 3072
HIDDEN = 512
OUT_FEATURES = 10
OUT_PAD = 128               # lane-aligned padded output width
TILE_B_MAX = 512            # max batch tile (multiple of 8, fills MXU M-dim)


def mlp_kernel(x_ref, w1_ref, b1_ref, w2_ref, b2_ref, w3_ref, b3_ref, o_ref):
    """Fused 3-layer MLP on one (tile_b, 3072) batch tile.

    x arrives f32 (no wrapper cast pass); cast to bf16 here for the MXU.
    Accumulation + bias + ReLU in f32.
    """
    x = x_ref[...].astype(jnp.bfloat16)                                  # (tile_b, 3072) bf16
    h1 = jnp.dot(x, w1_ref[...], preferred_element_type=jnp.float32)     # (tile_b, 512) f32
    h1 = jnp.maximum(h1 + b1_ref[...], 0.0).astype(jnp.bfloat16)
    h2 = jnp.dot(h1, w2_ref[...], preferred_element_type=jnp.float32)    # (tile_b, 512) f32
    h2 = jnp.maximum(h2 + b2_ref[...], 0.0).astype(jnp.bfloat16)
    o = jnp.dot(h2, w3_ref[...], preferred_element_type=jnp.float32)     # (tile_b, 128) f32
    o_ref[...] = o + b3_ref[...]


def prepare_params(w1, b1, w2, b2, w3, b3):
    """One-time parameter prep: bf16 weight cast + lane-pad of the last layer."""
    w3_p = jnp.zeros((HIDDEN, OUT_PAD), jnp.float32).at[:, :OUT_FEATURES].set(w3)
    b3_p = jnp.zeros((1, OUT_PAD), jnp.float32).at[:, :OUT_FEATURES].set(b3)
    return (
        w1.astype(jnp.bfloat16),
        b1.reshape(1, HIDDEN).astype(jnp.float32),
        w2.astype(jnp.bfloat16),
        b2.reshape(1, HIDDEN).astype(jnp.float32),
        w3_p.astype(jnp.bfloat16),
        b3_p,
    )


def _round_up(n, m):
    return ((n + m - 1) // m) * m


def _choose_tile_b(batch, max_tile=TILE_B_MAX):
    """Adaptive batch tile: minimal padding at small B, >=2 tiles when possible
    (so both v7x TensorCores get work), capped at max_tile for big batches."""
    b8 = _round_up(batch, 8)
    if b8 <= 8:
        return 8
    n_tiles = max(2, -(-b8 // max_tile))
    return _round_up(-(-b8 // n_tiles), 8)


@jax.jit
def mlp_forward(x_nchw, w1, b1, w2, b2, w3_p, b3_p):
    """x_nchw: (B, 3, 32, 32) f32.  Params from prepare_params.  Returns (B, 10) f32 logits."""
    B = x_nchw.shape[0]
    x_flat = x_nchw.reshape(B, -1)               # identical to nn.Flatten; free view, stays f32

    tile_b = _choose_tile_b(B)                   # trace-time (shapes are static under jit)
    n_tiles = -(-B // tile_b)
    B_pad = n_tiles * tile_b
    if B_pad != B:                               # tiny pad at small B; no-op when B % tile_b == 0
        x_flat = jnp.pad(x_flat, ((0, B_pad - B), (0, 0)))

    const = lambda i: (0, 0)                     # weights/biases resident across grid steps
    resident = pl.Buffered(1)                    # single-buffer blocks whose index never changes

    out_padded = pl.pallas_call(
        mlp_kernel,
        out_shape=jax.ShapeDtypeStruct((B_pad, OUT_PAD), jnp.float32),
        grid=(n_tiles,),
        in_specs=[
            pl.BlockSpec((tile_b, IN_FEATURES), lambda i: (i, 0)),               # x tile (pipelined)
            pl.BlockSpec((IN_FEATURES, HIDDEN), const, pipeline_mode=resident),  # W1 (resident)
            pl.BlockSpec((1, HIDDEN), const, pipeline_mode=resident),            # b1
            pl.BlockSpec((HIDDEN, HIDDEN), const, pipeline_mode=resident),       # W2
            pl.BlockSpec((1, HIDDEN), const, pipeline_mode=resident),            # b2
            pl.BlockSpec((HIDDEN, OUT_PAD), const, pipeline_mode=resident),      # W3 (padded)
            pl.BlockSpec((1, OUT_PAD), const, pipeline_mode=resident),           # b3 (padded)
        ],
        out_specs=pl.BlockSpec((tile_b, OUT_PAD), lambda i: (i, 0)),
        compiler_params=pltpu.CompilerParams(
            dimension_semantics=("parallel",),        # megacore sharding on v7x
            vmem_limit_bytes=48 * 1024 * 1024,        # below v7x's 64 MiB physical VMEM
        ),
    )(x_flat, w1, b1, w2, b2, w3_p, b3_p)

    return out_padded[:B, :OUT_FEATURES]


def init_params(key):
    """Deterministic init mimicking torch.nn.Linear default (U[-1/sqrt(fan_in), +])."""
    k1, k2, k3, k4, k5, k6 = jax.random.split(key, 6)

    def lin(kw, kb, fan_in, fan_out):
        bound = 1.0 / jnp.sqrt(fan_in)
        w = jax.random.uniform(kw, (fan_in, fan_out), jnp.float32, -bound, bound)
        b = jax.random.uniform(kb, (fan_out,), jnp.float32, -bound, bound)
        return w, b

    w1, b1 = lin(k1, k2, IN_FEATURES, HIDDEN)
    w2, b2 = lin(k3, k4, HIDDEN, HIDDEN)
    w3, b3 = lin(k5, k6, HIDDEN, OUT_FEATURES)
    return w1, b1, w2, b2, w3, b3


if __name__ == "__main__":
    key = jax.random.PRNGKey(0)
    kx, kp = jax.random.split(key)

    # Small batch, CIFAR-like input implied by the 32*32*3 flatten.
    x = jax.random.normal(kx, (2, 3, 32, 32), jnp.float32)
    raw_params = init_params(kp)
    params = prepare_params(*raw_params)      # one-time bf16 cast + W3 lane pad

    logits = mlp_forward(x, *params)
    jax.block_until_ready(logits)
    assert logits.shape == (2, 10)

    w1, b1, w2, b2, w3, b3 = raw_params

    def ref_bf16(xin):
        """Same mixed-precision math in pure JAX (tight tolerance)."""
        xb = xin.reshape(xin.shape[0], -1).astype(jnp.bfloat16)
        h1 = jnp.maximum(
            jnp.dot(xb, w1.astype(jnp.bfloat16), preferred_element_type=jnp.float32) + b1, 0.0
        ).astype(jnp.bfloat16)
        h2 = jnp.maximum(
            jnp.dot(h1, w2.astype(jnp.bfloat16), preferred_element_type=jnp.float32) + b2, 0.0
        ).astype(jnp.bfloat16)
        return jnp.dot(h2, w3.astype(jnp.bfloat16), preferred_element_type=jnp.float32) + b3

    def ref_f32(xin):
        """Full-f32 PyTorch semantics (loose tolerance for bf16 weights)."""
        xf = xin.reshape(xin.shape[0], -1)
        h = jnp.maximum(xf @ w1 + b1, 0.0)
        h = jnp.maximum(h @ w2 + b2, 0.0)
        return h @ w3 + b3

    assert jnp.allclose(logits, ref_bf16(x), atol=1e-3, rtol=1e-3)
    assert jnp.allclose(logits, ref_f32(x), atol=1e-1, rtol=1e-1)

    # Second shape: exercises the two-tile grid + batch-padding path (B=13 -> tile 8, 2 tiles).
    x2 = jax.random.normal(jax.random.PRNGKey(1), (13, 3, 32, 32), jnp.float32)
    logits2 = mlp_forward(x2, *params)
    jax.block_until_ready(logits2)
    assert logits2.shape == (13, 10)
    assert jnp.allclose(logits2, ref_bf16(x2), atol=1e-3, rtol=1e-3)

    print("KERNEL_OK")
</pallas_src>

<mosaic_0001>
module attributes {stable_mosaic.version = 11 : i64} {
  func.func @mlp_kernel(%arg0: i32, %arg1: memref<8x3072xf32, #tpu.memory_space<vmem>>, %arg2: memref<3072x512xbf16, #tpu.memory_space<vmem>>, %arg3: memref<1x512xf32, #tpu.memory_space<vmem>>, %arg4: memref<512x512xbf16, #tpu.memory_space<vmem>>, %arg5: memref<1x512xf32, #tpu.memory_space<vmem>>, %arg6: memref<512x128xbf16, #tpu.memory_space<vmem>>, %arg7: memref<1x128xf32, #tpu.memory_space<vmem>>, %arg8: memref<8x128xf32, #tpu.memory_space<vmem>>) attributes {dimension_semantics = [#tpu.dimension_semantics<parallel>], iteration_bounds = array<i64: 1>, scalar_prefetch = 0 : i64, scratch_operands = 0 : i64, tpu.core_type = #tpu.core_type<tc>, window_params = [{transform_indices = @transform_0, window_bounds = array<i64: 8, 3072>}, {pipeline_mode = #tpu.pipeline_mode<synchronous>, transform_indices = @transform_1, window_bounds = array<i64: 3072, 512>}, {pipeline_mode = #tpu.pipeline_mode<synchronous>, transform_indices = @transform_2, window_bounds = array<i64: 1, 512>}, {pipeline_mode = #tpu.pipeline_mode<synchronous>, transform_indices = @transform_3, window_bounds = array<i64: 512, 512>}, {pipeline_mode = #tpu.pipeline_mode<synchronous>, transform_indices = @transform_4, window_bounds = array<i64: 1, 512>}, {pipeline_mode = #tpu.pipeline_mode<synchronous>, transform_indices = @transform_5, window_bounds = array<i64: 512, 128>}, {pipeline_mode = #tpu.pipeline_mode<synchronous>, transform_indices = @transform_6, window_bounds = array<i64: 1, 128>}, {transform_indices = @transform_7, window_bounds = array<i64: 8, 128>}]} {
    %c0 = arith.constant 0 : index
    %c0_0 = arith.constant 0 : index
    %0 = vector.load %arg1[%c0, %c0_0] : memref<8x3072xf32, #tpu.memory_space<vmem>>, vector<8x3072xf32>
    %1 = arith.truncf %0 : vector<8x3072xf32> to vector<8x3072xbf16>
    %c0_1 = arith.constant 0 : index
    %c0_2 = arith.constant 0 : index
    %2 = vector.load %arg2[%c0_1, %c0_2] : memref<3072x512xbf16, #tpu.memory_space<vmem>>, vector<3072x512xbf16>
    %cst = arith.constant dense<0.000000e+00> : vector<8x512xf32>
    %3 = tpu.matmul %1, %2, %cst {dimension_numbers = #tpu.dot_dimension_numbers<[1], [0], [0], [1], [0, 0, 1, 1], [], []>} : vector<8x3072xbf16>, vector<3072x512xbf16>, vector<8x512xf32> -> vector<8x512xf32>
    %c0_3 = arith.constant 0 : index
    %c0_4 = arith.constant 0 : index
    %4 = vector.load %arg3[%c0_3, %c0_4] : memref<1x512xf32, #tpu.memory_space<vmem>>, vector<1x512xf32>
    %5 = vector.broadcast %4 : vector<1x512xf32> to vector<8x512xf32>
    %6 = arith.addf %3, %5 : vector<8x512xf32>
    %cst_5 = arith.constant 0.000000e+00 : f32
    %7 = vector.broadcast %cst_5 : f32 to vector<8x512xf32>
    %8 = arith.maximumf %6, %7 : vector<8x512xf32>
    %9 = arith.truncf %8 : vector<8x512xf32> to vector<8x512xbf16>
    %c0_6 = arith.constant 0 : index
    %c0_7 = arith.constant 0 : index
    %10 = vector.load %arg4[%c0_6, %c0_7] : memref<512x512xbf16, #tpu.memory_space<vmem>>, vector<512x512xbf16>
    %cst_8 = arith.constant dense<0.000000e+00> : vector<8x512xf32>
    %11 = tpu.matmul %9, %10, %cst_8 {dimension_numbers = #tpu.dot_dimension_numbers<[1], [0], [0], [1], [0, 0, 1, 1], [], []>} : vector<8x512xbf16>, vector<512x512xbf16>, vector<8x512xf32> -> vector<8x512xf32>
    %c0_9 = arith.constant 0 : index
    %c0_10 = arith.constant 0 : index
    %12 = vector.load %arg5[%c0_9, %c0_10] : memref<1x512xf32, #tpu.memory_space<vmem>>, vector<1x512xf32>
    %13 = vector.broadcast %12 : vector<1x512xf32> to vector<8x512xf32>
    %14 = arith.addf %11, %13 : vector<8x512xf32>
    %cst_11 = arith.constant 0.000000e+00 : f32
    %15 = vector.broadcast %cst_11 : f32 to vector<8x512xf32>
    %16 = arith.maximumf %14, %15 : vector<8x512xf32>
    %17 = arith.truncf %16 : vector<8x512xf32> to vector<8x512xbf16>
    %c0_12 = arith.constant 0 : index
    %c0_13 = arith.constant 0 : index
    %18 = vector.load %arg6[%c0_12, %c0_13] : memref<512x128xbf16, #tpu.memory_space<vmem>>, vector<512x128xbf16>
    %cst_14 = arith.constant dense<0.000000e+00> : vector<8x128xf32>
    %19 = tpu.matmul %17, %18, %cst_14 {dimension_numbers = #tpu.dot_dimension_numbers<[1], [0], [0], [1], [0, 0, 1, 1], [], []>} : vector<8x512xbf16>, vector<512x128xbf16>, vector<8x128xf32> -> vector<8x128xf32>
    %c0_15 = arith.constant 0 : index
    %c0_16 = arith.constant 0 : index
    %20 = vector.load %arg7[%c0_15, %c0_16] : memref<1x128xf32, #tpu.memory_space<vmem>>, vector<1x128xf32>
    %21 = vector.broadcast %20 : vector<1x128xf32> to vector<8x128xf32>
    %22 = arith.addf %19, %21 : vector<8x128xf32>
    %c0_17 = arith.constant 0 : index
    %c0_18 = arith.constant 0 : index
    %23 = vector.load %arg8[%c0_17, %c0_18] : memref<8x128xf32, #tpu.memory_space<vmem>>, vector<8x128xf32>
    tpu.vector_store %arg8[%c0_17, %c0_18], %22 {strides = array<i32>} : memref<8x128xf32, #tpu.memory_space<vmem>>, vector<8x128xf32>,
    return
  }
  func.func @transform_0(%arg0: i32) -> (i32, i32) {
    %c0_i32 = arith.constant 0 : i32
    %c0_i32_0 = arith.constant 0 : i32
    return %arg0, %c0_i32 : i32, i32
  }
  func.func @transform_1(%arg0: i32) -> (i32, i32) {
    %c0_i32 = arith.constant 0 : i32
    %c0_i32_0 = arith.constant 0 : i32
    %c0_i32_1 = arith.constant 0 : i32
    return %c0_i32, %c0_i32_0 : i32, i32
  }
  func.func @transform_2(%arg0: i32) -> (i32, i32) {
    %c0_i32 = arith.constant 0 : i32
    %c0_i32_0 = arith.constant 0 : i32
    %c0_i32_1 = arith.constant 0 : i32
    return %c0_i32, %c0_i32_0 : i32, i32
  }
  func.func @transform_3(%arg0: i32) -> (i32, i32) {
    %c0_i32 = arith.constant 0 : i32
    %c0_i32_0 = arith.constant 0 : i32
    %c0_i32_1 = arith.constant 0 : i32
    return %c0_i32, %c0_i32_0 : i32, i32
  }
  func.func @transform_4(%arg0: i32) -> (i32, i32) {
    %c0_i32 = arith.constant 0 : i32
    %c0_i32_0 = arith.constant 0 : i32
    %c0_i32_1 = arith.constant 0 : i32
    return %c0_i32, %c0_i32_0 : i32, i32
  }
  func.func @transform_5(%arg0: i32) -> (i32, i32) {
    %c0_i32 = arith.constant 0 : i32
    %c0_i32_0 = arith.constant 0 : i32
    %c0_i32_1 = arith.constant 0 : i32
    return %c0_i32, %c0_i32_0 : i32, i32
  }
  func.func @transform_6(%arg0: i32) -> (i32, i32) {
    %c0_i32 = arith.constant 0 : i32
    %c0_i32_0 = arith.constant 0 : i32
    %c0_i32_1 = arith.constant 0 : i32
    return %c0_i32, %c0_i32_0 : i32, i32
  }
  func.func @transform_7(%arg0: i32) -> (i32, i32) {
    %c0_i32 = arith.constant 0 : i32
    %c0_i32_0 = arith.constant 0 : i32
    return %arg0, %c0_i32 : i32, i32
  }
}

</mosaic_0001>

<llo_original>
// kernel: mlp_forward.1
$region0: #{mlp_forward.1}
  #allocation0 [shape = 'u32[]', space=smem, size = 0x4, offset = 0x4, fixed_abs, tag = 'smem constant byte address 0x4 - core index']
  #allocation1 [shape = 'u32[144,128]{1,0:T(1,128)}', space=vmem, size = 0x12000, scoped, tag = 'internal scratch']
  %s0 = inlined_call_operand.vmem [shape: f32[8,3072], index: 0, kind: input, shape index: {}]
  %s1 = inlined_call_operand.hbm [shape: bf16[3072,512], index: 1, kind: input, shape index: {}]
  %s2 = inlined_call_operand.hbm [shape: f32[1,512], index: 2, kind: input, shape index: {}]
  %s3 = inlined_call_operand.hbm [shape: bf16[512,512], index: 3, kind: input, shape index: {}]
  %s4 = inlined_call_operand.hbm [shape: f32[1,512], index: 4, kind: input, shape index: {}]
  %s5 = inlined_call_operand.hbm [shape: bf16[512,128], index: 5, kind: input, shape index: {}]
  %s6 = inlined_call_operand.hbm [shape: f32[1,128], index: 6, kind: input, shape index: {}]
  %s7 = inlined_call_operand.vmem [shape: f32[8,128], index: 7, kind: output, shape index: {}]
  %s8 = sld [smem:[#allocation0]]
  $region62: #{mlp_forward.1} parent=0
    _
  %s10 = ssub.s32 1, %s8
  %s11 = scalar_select 0, %s10, %s8
  $region1: #{mlp_forward.1} parent=0
    #allocation2 [shape = 'u8[3145728]{0}', space=vmem, size = 0x300000, scoped, tag = 'input window, operand 1, single buffered']
    #allocation3 [shape = 's32[1]{0}', space=sflag, size = 0x4, scoped, tag = 'scoped memory for mlp_forward.1']
    #allocation4 [shape = 'u8[2048]{0}', space=vmem, size = 0x800, scoped, tag = 'input window, operand 2, single buffered']
    #allocation5 [shape = 's32[1]{0}', space=sflag, size = 0x4, scoped, tag = 'scoped memory for mlp_forward.1']
    #allocation6 [shape = 'u8[524288]{0}', space=vmem, size = 0x80000, scoped, tag = 'input window, operand 3, single buffered']
    #allocation7 [shape = 'u8[2048]{0}', space=vmem, size = 0x800, scoped, tag = 'input window, operand 4, single buffered']
    #allocation8 [shape = 's32[1]{0}', space=sflag, size = 0x4, scoped, tag = 'scoped memory for mlp_forward.1']
    #allocation9 [shape = 'u8[131072]{0}', space=vmem, size = 0x20000, scoped, tag = 'input window, operand 5, single buffered']
    #allocation10 [shape = 'u8[512]{0}', space=vmem, size = 0x400, scoped, tag = 'input window, operand 6, single buffered']
    #allocation11 [shape = 's32[1]{0}', space=sflag, size = 0x4, scoped, tag = 'scoped memory for mlp_forward.1']
    %12 = vsyncpa [#allocation3], 0
    %13 = vsyncpa [#allocation5], 0
    %14 = vsyncpa [#allocation8], 0
    %15 = vsyncpa [#allocation11], 0
    // Predicated region
    $region2: #{mlp_forward.1} parent=1 // pred_check
      _
    $region3: #{mlp_forward.1} parent=1 // pred_check_branch
      %17 = sbr.rel (0) target = $region5
    $region4: #{mlp_forward.1} parent=1 // pred_region
      _
    $region5: #{mlp_forward.1} parent=1 // pred_fallthru
      _
    // Predicated region
    $region6: #{mlp_forward.1} parent=1 // pred_check
      _
    $region7: #{mlp_forward.1} parent=1 // pred_check_branch
      %19 = sbr.rel (0) target = $region9
    $region8: #{mlp_forward.1} parent=1 // pred_region
      %s21 = ssub.s32 98304, 98304
      %22 = vsyncadd [#allocation3], %s21
      %s23 = sshll.u32 [#allocation2], 4
      %s24 = int_to_ptr.vmem [resolvable:$true] %s23
      %29 = dma.hbm_to_vmem [thread:$0]  %s1, 98304, %s24, [#allocation3], 256, 256, 16
    $region9: #{mlp_forward.1} parent=1 // pred_fallthru
      _
    // Predicated region
    $region10: #{mlp_forward.1} parent=1 // pred_check
      _
    $region11: #{mlp_forward.1} parent=1 // pred_check_branch
      %31 = sbr.rel (0) target = $region13
    $region12: #{mlp_forward.1} parent=1 // pred_region
      %s33 = ssub.s32 64, 64
      %34 = vsyncadd [#allocation5], %s33
      %s36 = sshll.u32 [#allocation4], 4
      %s37 = int_to_ptr.vmem [resolvable:$true] %s36
      %39 = dma.hbm_to_vmem [thread:$0]  %s2, 64, %s37, [#allocation5]
    $region13: #{mlp_forward.1} parent=1 // pred_fallthru
      _
    // Predicated region
    $region14: #{mlp_forward.1} parent=1 // pred_check
      _
    $region15: #{mlp_forward.1} parent=1 // pred_check_branch
      %41 = sbr.rel (0) target = $region17
    $region16: #{mlp_forward.1} parent=1 // pred_region
      %s43 = ssub.s32 16384, 16384
      %44 = vsyncadd [#allocation5], %s43
      %s45 = sshll.u32 [#allocation6], 4
      %s46 = int_to_ptr.vmem [resolvable:$true] %s45
      %51 = dma.hbm_to_vmem [thread:$0]  %s3, 16384, %s46, [#allocation5], 256, 256, 16
    $region17: #{mlp_forward.1} parent=1 // pred_fallthru
      _
    // Predicated region
    $region18: #{mlp_forward.1} parent=1 // pred_check
      _
    $region19: #{mlp_forward.1} parent=1 // pred_check_branch
      %53 = sbr.rel (0) target = $region21
    $region20: #{mlp_forward.1} parent=1 // pred_region
      %s55 = ssub.s32 64, 64
      %56 = vsyncadd [#allocation8], %s55
      %s58 = sshll.u32 [#allocation7], 4
      %s59 = int_to_ptr.vmem [resolvable:$true] %s58
      %61 = dma.hbm_to_vmem [thread:$0]  %s4, 64, %s59, [#allocation8]
    $region21: #{mlp_forward.1} parent=1 // pred_fallthru
      _
    // Predicated region
    $region22: #{mlp_forward.1} parent=1 // pred_check
      _
    $region23: #{mlp_forward.1} parent=1 // pred_check_branch
      %63 = sbr.rel (0) target = $region25
    $region24: #{mlp_forward.1} parent=1 // pred_region
      %s65 = ssub.s32 4096, 4096
      %66 = vsyncadd [#allocation8], %s65
      %s67 = sshll.u32 [#allocation9], 4
      %s68 = int_to_ptr.vmem [resolvable:$true] %s67
      %73 = dma.hbm_to_vmem [thread:$0]  %s5, 4096, %s68, [#allocation8], 64, 64, 4
    $region25: #{mlp_forward.1} parent=1 // pred_fallthru
      _
    // Predicated region
    $region26: #{mlp_forward.1} parent=1 // pred_check
      _
    $region27: #{mlp_forward.1} parent=1 // pred_check_branch
      %75 = sbr.rel (0) target = $region29
    $region28: #{mlp_forward.1} parent=1 // pred_region
      %s77 = ssub.s32 16, 16
      %78 = vsyncadd [#allocation11], %s77
      %s80 = sshll.u32 [#allocation10], 4
      %s81 = int_to_ptr.vmem [resolvable:$true] %s80
      %83 = dma.hbm_to_vmem [thread:$0]  %s6, 16, %s81, [#allocation11]
    $region29: #{mlp_forward.1} parent=1 // pred_fallthru
      _
    // Predicated region
    $region30: #{mlp_forward.1} parent=1 // pred_check
      _
    $region31: #{mlp_forward.1} parent=1 // pred_check_branch
      %85 = sbr.rel (0) target = $region33
    $region32: #{mlp_forward.1} parent=1 // pred_region
      %86 = dma.done [#allocation3], 98304
    $region33: #{mlp_forward.1} parent=1 // pred_fallthru
      _
    // Predicated region
    $region34: #{mlp_forward.1} parent=1 // pred_check
      _
    $region35: #{mlp_forward.1} parent=1 // pred_check_branch
      %88 = sbr.rel (0) target = $region37
    $region36: #{mlp_forward.1} parent=1 // pred_region
      %89 = dma.done [#allocation5], 64
    $region37: #{mlp_forward.1} parent=1 // pred_fallthru
      _
    // Predicated region
    $region38: #{mlp_forward.1} parent=1 // pred_check
      _
    $region39: #{mlp_forward.1} parent=1 // pred_check_branch
      %91 = sbr.rel (0) target = $region41
    $region40: #{mlp_forward.1} parent=1 // pred_region
      %92 = dma.done [#allocation5], 16384
    $region41: #{mlp_forward.1} parent=1 // pred_fallthru
      _
    // Predicated region
    $region42: #{mlp_forward.1} parent=1 // pred_check
      _
    $region43: #{mlp_forward.1} parent=1 // pred_check_branch
      %94 = sbr.rel (0) target = $region45
    $region44: #{mlp_forward.1} parent=1 // pred_region
      %95 = dma.done [#allocation8], 64
    $region45: #{mlp_forward.1} parent=1 // pred_fallthru
      _
    // Predicated region
    $region46: #{mlp_forward.1} parent=1 // pred_check
      _
    $region47: #{mlp_forward.1} parent=1 // pred_check_branch
      %97 = sbr.rel (0) target = $region49
    $region48: #{mlp_forward.1} parent=1 // pred_region
      %98 = dma.done [#allocation8], 4096
    $region49: #{mlp_forward.1} parent=1 // pred_fallthru
      _
    // Predicated region
    $region50: #{mlp_forward.1} parent=1 // pred_check
      _
    $region51: #{mlp_forward.1} parent=1 // pred_check_branch
      %100 = sbr.rel (0) target = $region53
    $region52: #{mlp_forward.1} parent=1 // pred_region
      %101 = dma.done [#allocation11], 16
    $region53: #{mlp_forward.1} parent=1 // pred_fallthru
      _
    %v103 = vld [vmem:[%s0] sm:$0xff]
    %v104 = vld [vmem:[%s0 + $0x8] sm:$0xff]
    %v105 = vld [vmem:[%s0 + $0x10] sm:$0xff]
    %v106 = vld [vmem:[%s0 + $0x18] sm:$0xff]
    %v107 = vld [vmem:[%s0 + $0x20] sm:$0xff]
    %v108 = vld [vmem:[%s0 + $0x28] sm:$0xff]
    %v109 = vld [vmem:[%s0 + $0x30] sm:$0xff]
    %v110 = vld [vmem:[%s0 + $0x38] sm:$0xff]
    %v111 = vld [vmem:[%s0 + $0x40] sm:$0xff]
    %v112 = vld [vmem:[%s0 + $0x48] sm:$0xff]
    %v113 = vld [vmem:[%s0 + $0x50] sm:$0xff]
    %v114 = vld [vmem:[%s0 + $0x58] sm:$0xff]
    %v115 = vld [vmem:[%s0 + $0x60] sm:$0xff]
    %v116 = vld [vmem:[%s0 + $0x68] sm:$0xff]
    %v117 = vld [vmem:[%s0 + $0x70] sm:$0xff]
    %v118 = vld [vmem:[%s0 + $0x78] sm:$0xff]
    %v119 = vld [vmem:[%s0 + $0x80] sm:$0xff]
    %v120 = vld [vmem:[%s0 + $0x88] sm:$0xff]
    %v121 = vld [vmem:[%s0 + $0x90] sm:$0xff]
    %v122 = vld [vmem:[%s0 + $0x98] sm:$0xff]
    %v123 = vld [vmem:[%s0 + $0xa0] sm:$0xff]
    %v124 = vld [vmem:[%s0 + $0xa8] sm:$0xff]
    %v125 = vld [vmem:[%s0 + $0xb0] sm:$0xff]
    %v126 = vld [vmem:[%s0 + $0xb8] sm:$0xff]
    %v127 = vpack.c.bf16 %v103, %v103
    %v128 = vpack.c.bf16 %v104, %v104
    %v129 = vpack.c.bf16 %v105, %v105
    %v130 = vpack.c.bf16 %v106, %v106
    %v131 = vpack.c.bf16 %v107, %v107
    %v132 = vpack.c.bf16 %v108, %v108
    %v133 = vpack.c.bf16 %v109, %v109
    %v134 = vpack.c.bf16 %v110, %v110
    %v135 = vpack.c.bf16 %v111, %v111
    %v136 = vpack.c.bf16 %v112, %v112
    %v137 = vpack.c.bf16 %v113, %v113
    %v138 = vpack.c.bf16 %v114, %v114
    %v139 = vpack.c.bf16 %v115, %v115
    %v140 = vpack.c.bf16 %v116, %v116
    %v141 = vpack.c.bf16 %v117, %v117
    %v142 = vpack.c.bf16 %v118, %v118
    %v143 = vpack.c.bf16 %v119, %v119
    %v144 = vpack.c.bf16 %v120, %v120
    %v145 = vpack.c.bf16 %v121, %v121
    %v146 = vpack.c.bf16 %v122, %v122
    %v147 = vpack.c.bf16 %v123, %v123
    %v148 = vpack.c.bf16 %v124, %v124
    %v149 = vpack.c.bf16 %v125, %v125
    %v150 = vpack.c.bf16 %v126, %v126
    %v151 = vld [vmem:[#allocation2] sm:$0xff]
    %v152 = vld [vmem:[#allocation2 + $0x8] sm:$0xff]
    %v153 = vld [vmem:[#allocation2 + $0x10] sm:$0xff]
    %v154 = vld [vmem:[#allocation2 + $0x18] sm:$0xff]
    %v155 = vld [vmem:[#allocation2 + $0x20] sm:$0xff]
    %v156 = vld [vmem:[#allocation2 + $0x28] sm:$0xff]
    %v157 = vld [vmem:[#allocation2 + $0x30] sm:$0xff]
    %v158 = vld [vmem:[#allocation2 + $0x38] sm:$0xff]
    %v159 = vld [vmem:[#allocation2 + $0x40] sm:$0xff]
    %v160 = vld [vmem:[#allocation2 + $0x48] sm:$0xff]
    %v161 = vld [vmem:[#allocation2 + $0x50] sm:$0xff]
    %v162 = vld [vmem:[#allocation2 + $0x58] sm:$0xff]
    %v163 = vld [vmem:[#allocation2 + $0x60] sm:$0xff]
    %v164 = vld [vmem:[#allocation2 + $0x68] sm:$0xff]
    %v165 = vld [vmem:[#allocation2 + $0x70] sm:$0xff]
    %v166 = vld [vmem:[#allocation2 + $0x78] sm:$0xff]
    %v167 = vld [vmem:[#allocation2 + $0x80] sm:$0xff]
    %v168 = vld [vmem:[#allocation2 + $0x88] sm:$0xff]
    %v169 = vld [vmem:[#allocation2 + $0x90] sm:$0xff]
    %v170 = vld [vmem:[#allocation2 + $0x98] sm:$0xff]
    %v171 = vld [vmem:[#allocation2 + $0xa0] sm:$0xff]
    %v172 = vld [vmem:[#allocation2 + $0xa8] sm:$0xff]
    %v173 = vld [vmem:[#allocation2 + $0xb0] sm:$0xff]
    %v174 = vld [vmem:[#allocation2 + $0xb8] sm:$0xff]
    %v175 = vld [vmem:[#allocation2 + $0xc0] sm:$0xff]
    %v176 = vld [vmem:[#allocation2 + $0xc8] sm:$0xff]
    %v177 = vld [vmem:[#allocation2 + $0xd0] sm:$0xff]
    %v178 = vld [vmem:[#allocation2 + $0xd8] sm:$0xff]
    %v179 = vld [vmem:[#allocation2 + $0xe0] sm:$0xff]
    %v180 = vld [vmem:[#allocation2 + $0xe8] sm:$0xff]
    %v181 = vld [vmem:[#allocation2 + $0xf0] sm:$0xff]
    %v182 = vld [vmem:[#allocation2 + $0xf8] sm:$0xff]
    %v183 = vld [vmem:[#allocation2 + $0x100] sm:$0xff]
    %v184 = vld [vmem:[#allocation2 + $0x108] sm:$0xff]
    %v185 = vld [vmem:[#allocation2 + $0x110] sm:$0xff]
    %v186 = vld [vmem:[#allocation2 + $0x118] sm:$0xff]
    %v187 = vld [vmem:[#allocation2 + $0x120] sm:$0xff]
    %v188 = vld [vmem:[#allocation2 + $0x128] sm:$0xff]
    %v189 = vld [vmem:[#allocation2 + $0x130] sm:$0xff]
    %v190 = vld [vmem:[#allocation2 + $0x138] sm:$0xff]
    %v191 = vld [vmem:[#allocation2 + $0x140] sm:$0xff]
    %v192 = vld [vmem:[#allocation2 + $0x148] sm:$0xff]
    %v193 = vld [vmem:[#allocation2 + $0x150] sm:$0xff]
    %v194 = vld [vmem:[#allocation2 + $0x158] sm:$0xff]
    %v195 = vld [vmem:[#allocation2 + $0x160] sm:$0xff]
    %v196 = vld [vmem:[#allocation2 + $0x168] sm:$0xff]
    %v197 = vld [vmem:[#allocation2 + $0x170] sm:$0xff]
    %v198 = vld [vmem:[#allocation2 + $0x178] sm:$0xff]
    %v199 = vld [vmem:[#allocation2 + $0x180] sm:$0xff]
    %v200 = vld [vmem:[#allocation2 + $0x188] sm:$0xff]
    %v201 = vld [vmem:[#allocation2 + $0x190] sm:$0xff]
    %v202 = vld [vmem:[#allocation2 + $0x198] sm:$0xff]
    %v203 = vld [vmem:[#allocation2 + $0x1a0] sm:$0xff]
    %v204 = vld [vmem:[#allocation2 + $0x1a8] sm:$0xff]
    %v205 = vld [vmem:[#allocation2 + $0x1b0] sm:$0xff]
    %v206 = vld [vmem:[#allocation2 + $0x1b8] sm:$0xff]
    %v207 = vld [vmem:[#allocation2 + $0x1c0] sm:$0xff]
    %v208 = vld [vmem:[#allocation2 + $0x1c8] sm:$0xff]
    %v209 = vld [vmem:[#allocation2 + $0x1d0] sm:$0xff]
    %v210 = vld [vmem:[#allocation2 + $0x1d8] sm:$0xff]
    %v211 = vld [vmem:[#allocation2 + $0x1e0] sm:$0xff]
    %v212 = vld [vmem:[#allocation2 + $0x1e8] sm:$0xff]
    %v213 = vld [vmem:[#allocation2 + $0x1f0] sm:$0xff]
    %v214 = vld [vmem:[#allocation2 + $0x1f8] sm:$0xff]
    %v215 = vld [vmem:[#allocation2 + $0x200] sm:$0xff]
    %v216 = vld [vmem:[#allocation2 + $0x208] sm:$0xff]
    %v217 = vld [vmem:[#allocation2 + $0x210] sm:$0xff]
    %v218 = vld [vmem:[#allocation2 + $0x218] sm:$0xff]
    %v219 = vld [vmem:[#allocation2 + $0x220] sm:$0xff]
    %v220 = vld [vmem:[#allocation2 + $0x228] sm:$0xff]
    %v221 = vld [vmem:[#allocation2 + $0x230] sm:$0xff]
    %v222 = vld [vmem:[#allocation2 + $0x238] sm:$0xff]
    %v223 = vld [vmem:[#allocation2 + $0x240] sm:$0xff]
    %v224 = vld [vmem:[#allocation2 + $0x248] sm:$0xff]
    %v225 = vld [vmem:[#allocation2 + $0x250] sm:$0xff]
    %v226 = vld [vmem:[#allocation2 + $0x258] sm:$0xff]
    %v227 = vld [vmem:[#allocation2 + $0x260] sm:$0xff]
    %v228 = vld [vmem:[#allocation2 + $0x268] sm:$0xff]
    %v229 = vld [vmem:[#allocation2 + $0x270] sm:$0xff]
    %v230 = vld [vmem:[#allocation2 + $0x278] sm:$0xff]
    %v231 = vld [vmem:[#allocation2 + $0x280] sm:$0xff]
    %v232 = vld [vmem:[#allocation2 + $0x288] sm:$0xff]
    %v233 = vld [vmem:[#allocation2 + $0x290] sm:$0xff]
    %v234 = vld [vmem:[#allocation2 + $0x298] sm:$0xff]
    %v235 = vld [vmem:[#allocation2 + $0x2a0] sm:$0xff]
    %v236 = vld [vmem:[#allocation2 + $0x2a8] sm:$0xff]
    %v237 = vld [vmem:[#allocation2 + $0x2b0] sm:$0xff]
    %v238 = vld [vmem:[#allocation2 + $0x2b8] sm:$0xff]
    %v239 = vld [vmem:[#allocation2 + $0x2c0] sm:$0xff]
    %v240 = vld [vmem:[#allocation2 + $0x2c8] sm:$0xff]
    %v241 = vld [vmem:[#allocation2 + $0x2d0] sm:$0xff]
    %v242 = vld [vmem:[#allocation2 + $0x2d8] sm:$0xff]
    %v243 = vld [vmem:[#allocation2 + $0x2e0] sm:$0xff]
    %v244 = vld [vmem:[#allocation2 + $0x2e8] sm:$0xff]
    %v245 = vld [vmem:[#allocation2 + $0x2f0] sm:$0xff]
    %v246 = vld [vmem:[#allocation2 + $0x2f8] sm:$0xff]
    %v247 = vld [vmem:[#allocation2 + $0x300] sm:$0xff]
    %v248 = vld [vmem:[#allocation2 + $0x308] sm:$0xff]
    %v249 = vld [vmem:[#allocation2 + $0x310] sm:$0xff]
    %v250 = vld [vmem:[#allocation2 + $0x318] sm:$0xff]
    %v251 = vld [vmem:[#allocation2 + $0x320] sm:$0xff]
    %v252 = vld [vmem:[#allocation2 + $0x328] sm:$0xff]
    %v253 = vld [vmem:[#allocation2 + $0x330] sm:$0xff]
    %v254 = vld [vmem:[#allocation2 + $0x338] sm:$0xff]
    %v255 = vld [vmem:[#allocation2 + $0x340] sm:$0xff]
    %v256 = vld [vmem:[#allocation2 + $0x348] sm:$0xff]
    %v257 = vld [vmem:[#allocation2 + $0x350] sm:$0xff]
    %v258 = vld [vmem:[#allocation2 + $0x358] sm:$0xff]
    %v259 = vld [vmem:[#allocation2 + $0x360] sm:$0xff]
    %v260 = vld [vmem:[#allocation2 + $0x368] sm:$0xff]
    %v261 = vld [vmem:[#allocation2 + $0x370] sm:$0xff]
    %v262 = vld [vmem:[#allocation2 + $0x378] sm:$0xff]
    %v263 = vld [vmem:[#allocation2 + $0x380] sm:$0xff]
    %v264 = vld [vmem:[#allocation2 + $0x388] sm:$0xff]
    %v265 = vld [vmem:[#allocation2 + $0x390] sm:$0xff]
    %v266 = vld [vmem:[#allocation2 + $0x398] sm:$0xff]
    %v267 = vld [vmem:[#allocation2 + $0x3a0] sm:$0xff]
    %v268 = vld [vmem:[#allocation2 + $0x3a8] sm:$0xff]
    %v269 = vld [vmem:[#allocation2 + $0x3b0] sm:$0xff]
    %v270 = vld [vmem:[#allocation2 + $0x3b8] sm:$0xff]
    %v271 = vld [vmem:[#allocation2 + $0x3c0] sm:$0xff]
    %v272 = vld [vmem:[#allocation2 + $0x3c8] sm:$0xff]
    %v273 = vld [vmem:[#allocation2 + $0x3d0] sm:$0xff]
    %v274 = vld [vmem:[#allocation2 + $0x3d8] sm:$0xff]
    %v275 = vld [vmem:[#allocation2 + $0x3e0] sm:$0xff]
    %v276 = vld [vmem:[#allocation2 + $0x3e8] sm:$0xff]
    %v277 = vld [vmem:[#allocation2 + $0x3f0] sm:$0xff]
    %v278 = vld [vmem:[#allocation2 + $0x3f8] sm:$0xff]
    %v279 = vld [vmem:[#allocation2 + $0x400] sm:$0xff]
    %v280 = vld [vmem:[#allocation2 + $0x408] sm:$0xff]
    %v281 = vld [vmem:[#allocation2 + $0x410] sm:$0xff]
    %v282 = vld [vmem:[#allocation2 + $0x418] sm:$0xff]
    %v283 = vld [vmem:[#allocation2 + $0x420] sm:$0xff]
    %v284 = vld [vmem:[#allocation2 + $0x428] sm:$0xff]
    %v285 = vld [vmem:[#allocation2 + $0x430] sm:$0xff]
    %v286 = vld [vmem:[#allocation2 + $0x438] sm:$0xff]
    %v287 = vld [vmem:[#allocation2 + $0x440] sm:$0xff]
    %v288 = vld [vmem:[#allocation2 + $0x448] sm:$0xff]
    %v289 = vld [vmem:[#allocation2 + $0x450] sm:$0xff]
    %v290 = vld [vmem:[#allocation2 + $0x458] sm:$0xff]
    %v291 = vld [vmem:[#allocation2 + $0x460] sm:$0xff]
    %v292 = vld [vmem:[#allocation2 + $0x468] sm:$0xff]
    %v293 = vld [vmem:[#allocation2 + $0x470] sm:$0xff]
    %v294 = vld [vmem:[#allocation2 + $0x478] sm:$0xff]
    %v295 = vld [vmem:[#allocation2 + $0x480] sm:$0xff]
    %v296 = vld [vmem:[#allocation2 + $0x488] sm:$0xff]
    %v297 = vld [vmem:[#allocation2 + $0x490] sm:$0xff]
    %v298 = vld [vmem:[#allocation2 + $0x498] sm:$0xff]
    %v299 = vld [vmem:[#allocation2 + $0x4a0] sm:$0xff]
    %v300 = vld [vmem:[#allocation2 + $0x4a8] sm:$0xff]
    %v301 = vld [vmem:[#allocation2 + $0x4b0] sm:$0xff]
    %v302 = vld [vmem:[#allocation2 + $0x4b8] sm:$0xff]
    %v303 = vld [vmem:[#allocation2 + $0x4c0] sm:$0xff]
    %v304 = vld [vmem:[#allocation2 + $0x4c8] sm:$0xff]
    %v305 = vld [vmem:[#allocation2 + $0x4d0] sm:$0xff]
    %v306 = vld [vmem:[#allocation2 + $0x4d8] sm:$0xff]
    %v307 = vld [vmem:[#allocation2 + $0x4e0] sm:$0xff]
    %v308 = vld [vmem:[#allocation2 + $0x4e8] sm:$0xff]
    %v309 = vld [vmem:[#allocation2 + $0x4f0] sm:$0xff]
    %v310 = vld [vmem:[#allocation2 + $0x4f8] sm:$0xff]
    %v311 = vld [vmem:[#allocation2 + $0x500] sm:$0xff]
    %v312 = vld [vmem:[#allocation2 + $0x508] sm:$0xff]
    %v313 = vld [vmem:[#allocation2 + $0x510] sm:$0xff]
    %v314 = vld [vmem:[#allocation2 + $0x518] sm:$0xff]
    %v315 = vld [vmem:[#allocation2 + $0x520] sm:$0xff]
    %v316 = vld [vmem:[#allocation2 + $0x528] sm:$0xff]
    %v317 = vld [vmem:[#allocation2 + $0x530] sm:$0xff]
    %v318 = vld [vmem:[#allocation2 + $0x538] sm:$0xff]
    %v319 = vld [vmem:[#allocation2 + $0x540] sm:$0xff]
    %v320 = vld [vmem:[#allocation2 + $0x548] sm:$0xff]
    %v321 = vld [vmem:[#allocation2 + $0x550] sm:$0xff]
    %v322 = vld [vmem:[#allocation2 + $0x558] sm:$0xff]
    %v323 = vld [vmem:[#allocation2 + $0x560] sm:$0xff]
    %v324 = vld [vmem:[#allocation2 + $0x568] sm:$0xff]
    %v325 = vld [vmem:[#allocation2 + $0x570] sm:$0xff]
    %v326 = vld [vmem:[#allocation2 + $0x578] sm:$0xff]
    %v327 = vld [vmem:[#allocation2 + $0x580] sm:$0xff]
    %v328 = vld [vmem:[#allocation2 + $0x588] sm:$0xff]
    %v329 = vld [vmem:[#allocation2 + $0x590] sm:$0xff]
    %v330 = vld [vmem:[#allocation2 + $0x598] sm:$0xff]
    %v331 = vld [vmem:[#allocation2 + $0x5a0] sm:$0xff]
    %v332 = vld [vmem:[#allocation2 + $0x5a8] sm:$0xff]
    %v333 = vld [vmem:[#allocation2 + $0x5b0] sm:$0xff]
    %v334 = vld [vmem:[#allocation2 + $0x5b8] sm:$0xff]
    %v335 = vld [vmem:[#allocation2 + $0x5c0] sm:$0xff]
    %v336 = vld [vmem:[#allocation2 + $0x5c8] sm:$0xff]
    %v337 = vld [vmem:[#allocation2 + $0x5d0] sm:$0xff]
    %v338 = vld [vmem:[#allocation2 + $0x5d8] sm:$0xff]
    %v339 = vld [vmem:[#allocation2 + $0x5e0] sm:$0xff]
    %v340 = vld [vmem:[#allocation2 + $0x5e8] sm:$0xff]
    %v341 = vld [vmem:[#allocation2 + $0x5f0] sm:$0xff]
    %v342 = vld [vmem:[#allocation2 + $0x5f8] sm:$0xff]
    %v343 = vld [vmem:[#allocation2 + $0x600] sm:$0xff]
    %v344 = vld [vmem:[#allocation2 + $0x608] sm:$0xff]
    %v345 = vld [vmem:[#allocation2 + $0x610] sm:$0xff]
    %v346 = vld [vmem:[#allocation2 + $0x618] sm:$0xff]
    %v347 = vld [vmem:[#allocation2 + $0x620] sm:$0xff]
    %v348 = vld [vmem:[#allocation2 + $0x628] sm:$0xff]
    %v349 = vld [vmem:[#allocation2 + $0x630] sm:$0xff]
    %v350 = vld [vmem:[#allocation2 + $0x638] sm:$0xff]
    %v351 = vld [vmem:[#allocation2 + $0x640] sm:$0xff]
    %v352 = vld [vmem:[#allocation2 + $0x648] sm:$0xff]
    %v353 = vld [vmem:[#allocation2 + $0x650] sm:$0xff]
    %v354 = vld [vmem:[#allocation2 + $0x658] sm:$0xff]
    %v355 = vld [vmem:[#allocation2 + $0x660] sm:$0xff]
    %v356 = vld [vmem:[#allocation2 + $0x668] sm:$0xff]
    %v357 = vld [vmem:[#allocation2 + $0x670] sm:$0xff]
    %v358 = vld [vmem:[#allocation2 + $0x678] sm:$0xff]
    %v359 = vld [vmem:[#allocation2 + $0x680] sm:$0xff]
    %v360 = vld [vmem:[#allocation2 + $0x688] sm:$0xff]
    %v361 = vld [vmem:[#allocation2 + $0x690] sm:$0xff]
    %v362 = vld [vmem:[#allocation2 + $0x698] sm:$0xff]
    %v363 = vld [vmem:[#allocation2 + $0x6a0] sm:$0xff]
    %v364 = vld [vmem:[#allocation2 + $0x6a8] sm:$0xff]
    %v365 = vld [vmem:[#allocation2 + $0x6b0] sm:$0xff]
    %v366 = vld [vmem:[#allocation2 + $0x6b8] sm:$0xff]
    %v367 = vld [vmem:[#allocation2 + $0x6c0] sm:$0xff]
    %v368 = vld [vmem:[#allocation2 + $0x6c8] sm:$0xff]
    %v369 = vld [vmem:[#allocation2 + $0x6d0] sm:$0xff]
    %v370 = vld [vmem:[#allocation2 + $0x6d8] sm:$0xff]
    %v371 = vld [vmem:[#allocation2 + $0x6e0] sm:$0xff]
    %v372 = vld [vmem:[#allocation2 + $0x6e8] sm:$0xff]
    %v373 = vld [vmem:[#allocation2 + $0x6f0] sm:$0xff]
    %v374 = vld [vmem:[#allocation2 + $0x6f8] sm:$0xff]
    %v375 = vld [vmem:[#allocation2 + $0x700] sm:$0xff]
    %v376 = vld [vmem:[#allocation2 + $0x708] sm:$0xff]
    %v377 = vld [vmem:[#allocation2 + $0x710] sm:$0xff]
    %v378 = vld [vmem:[#allocation2 + $0x718] sm:$0xff]
    %v379 = vld [vmem:[#allocation2 + $0x720] sm:$0xff]
    %v380 = vld [vmem:[#allocation2 + $0x728] sm:$0xff]
    %v381 = vld [vmem:[#allocation2 + $0x730] sm:$0xff]
    %v382 = vld [vmem:[#allocation2 + $0x738] sm:$0xff]
    %v383 = vld [vmem:[#allocation2 + $0x740] sm:$0xff]
    %v384 = vld [vmem:[#allocation2 + $0x748] sm:$0xff]
    %v385 = vld [vmem:[#allocation2 + $0x750] sm:$0xff]
    %v386 = vld [vmem:[#allocation2 + $0x758] sm:$0xff]
    %v387 = vld [vmem:[#allocation2 + $0x760] sm:$0xff]
    %v388 = vld [vmem:[#allocation2 + $0x768] sm:$0xff]
    %v389 = vld [vmem:[#allocation2 + $0x770] sm:$0xff]
    %v390 = vld [vmem:[#allocation2 + $0x778] sm:$0xff]
    %v391 = vld [vmem:[#allocation2 + $0x780] sm:$0xff]
    %v392 = vld [vmem:[#allocation2 + $0x788] sm:$0xff]
    %v393 = vld [vmem:[#allocation2 + $0x790] sm:$0xff]
    %v394 = vld [vmem:[#allocation2 + $0x798] sm:$0xff]
    %v395 = vld [vmem:[#allocation2 + $0x7a0] sm:$0xff]
    %v396 = vld [vmem:[#allocation2 + $0x7a8] sm:$0xff]
    %v397 = vld [vmem:[#allocation2 + $0x7b0] sm:$0xff]
    %v398 = vld [vmem:[#allocation2 + $0x7b8] sm:$0xff]
    %v399 = vld [vmem:[#allocation2 + $0x7c0] sm:$0xff]
    %v400 = vld [vmem:[#allocation2 + $0x7c8] sm:$0xff]
    %v401 = vld [vmem:[#allocation2 + $0x7d0] sm:$0xff]
    %v402 = vld [vmem:[#allocation2 + $0x7d8] sm:$0xff]
    %v403 = vld [vmem:[#allocation2 + $0x7e0] sm:$0xff]
    %v404 = vld [vmem:[#allocation2 + $0x7e8] sm:$0xff]
    %v405 = vld [vmem:[#allocation2 + $0x7f0] sm:$0xff]
    %v406 = vld [vmem:[#allocation2 + $0x7f8] sm:$0xff]
    %v407 = vld [vmem:[#allocation2 + $0x800] sm:$0xff]
    %v408 = vld [vmem:[#allocation2 + $0x808] sm:$0xff]
    %v409 = vld [vmem:[#allocation2 + $0x810] sm:$0xff]
    %v410 = vld [vmem:[#allocation2 + $0x818] sm:$0xff]
    %v411 = vld [vmem:[#allocation2 + $0x820] sm:$0xff]
    %v412 = vld [vmem:[#allocation2 + $0x828] sm:$0xff]
    %v413 = vld [vmem:[#allocation2 + $0x830] sm:$0xff]
    %v414 = vld [vmem:[#allocation2 + $0x838] sm:$0xff]
    %v415 = vld [vmem:[#allocation2 + $0x840] sm:$0xff]
    %v416 = vld [vmem:[#allocation2 + $0x848] sm:$0xff]
    %v417 = vld [vmem:[#allocation2 + $0x850] sm:$0xff]
    %v418 = vld [vmem:[#allocation2 + $0x858] sm:$0xff]
    %v419 = vld [vmem:[#allocation2 + $0x860] sm:$0xff]
    %v420 = vld [vmem:[#allocation2 + $0x868] sm:$0xff]
    %v421 = vld [vmem:[#allocation2 + $0x870] sm:$0xff]
    %v422 = vld [vmem:[#allocation2 + $0x878] sm:$0xff]
    %v423 = vld [vmem:[#allocation2 + $0x880] sm:$0xff]
    %v424 = vld [vmem:[#allocation2 + $0x888] sm:$0xff]
    %v425 = vld [vmem:[#allocation2 + $0x890] sm:$0xff]
    %v426 = vld [vmem:[#allocation2 + $0x898] sm:$0xff]
    %v427 = vld [vmem:[#allocation2 + $0x8a0] sm:$0xff]
    %v428 = vld [vmem:[#allocation2 + $0x8a8] sm:$0xff]
    %v429 = vld [vmem:[#allocation2 + $0x8b0] sm:$0xff]
    %v430 = vld [vmem:[#allocation2 + $0x8b8] sm:$0xff]
    %v431 = vld [vmem:[#allocation2 + $0x8c0] sm:$0xff]
    %v432 = vld [vmem:[#allocation2 + $0x8c8] sm:$0xff]
    %v433 = vld [vmem:[#allocation2 + $0x8d0] sm:$0xff]
    %v434 = vld [vmem:[#allocation2 + $0x8d8] sm:$0xff]
    %v435 = vld [vmem:[#allocation2 + $0x8e0] sm:$0xff]
    %v436 = vld [vmem:[#allocation2 + $0x8e8] sm:$0xff]
    %v437 = vld [vmem:[#allocation2 + $0x8f0] sm:$0xff]
    %v438 = vld [vmem:[#allocation2 + $0x8f8] sm:$0xff]
    %v439 = vld [vmem:[#allocation2 + $0x900] sm:$0xff]
    %v440 = vld [vmem:[#allocation2 + $0x908] sm:$0xff]
    %v441 = vld [vmem:[#allocation2 + $0x910] sm:$0xff]
    %v442 = vld [vmem:[#allocation2 + $0x918] sm:$0xff]
    %v443 = vld [vmem:[#allocation2 + $0x920] sm:$0xff]
    %v444 = vld [vmem:[#allocation2 + $0x928] sm:$0xff]
    %v445 = vld [vmem:[#allocation2 + $0x930] sm:$0xff]
    %v446 = vld [vmem:[#allocation2 + $0x938] sm:$0xff]
    %v447 = vld [vmem:[#allocation2 + $0x940] sm:$0xff]
    %v448 = vld [vmem:[#allocation2 + $0x948] sm:$0xff]
    %v449 = vld [vmem:[#allocation2 + $0x950] sm:$0xff]
    %v450 = vld [vmem:[#allocation2 + $0x958] sm:$0xff]
    %v451 = vld [vmem:[#allocation2 + $0x960] sm:$0xff]
    %v452 = vld [vmem:[#allocation2 + $0x968] sm:$0xff]
    %v453 = vld [vmem:[#allocation2 + $0x970] sm:$0xff]
    %v454 = vld [vmem:[#allocation2 + $0x978] sm:$0xff]
    %v455 = vld [vmem:[#allocation2 + $0x980] sm:$0xff]
    %v456 = vld [vmem:[#allocation2 + $0x988] sm:$0xff]
    %v457 = vld [vmem:[#allocation2 + $0x990] sm:$0xff]
    %v458 = vld [vmem:[#allocation2 + $0x998] sm:$0xff]
    %v459 = vld [vmem:[#allocation2 + $0x9a0] sm:$0xff]
    %v460 = vld [vmem:[#allocation2 + $0x9a8] sm:$0xff]
    %v461 = vld [vmem:[#allocation2 + $0x9b0] sm:$0xff]
    %v462 = vld [vmem:[#allocation2 + $0x9b8] sm:$0xff]
    %v463 = vld [vmem:[#allocation2 + $0x9c0] sm:$0xff]
    %v464 = vld [vmem:[#allocation2 + $0x9c8] sm:$0xff]
    %v465 = vld [vmem:[#allocation2 + $0x9d0] sm:$0xff]
    %v466 = vld [vmem:[#allocation2 + $0x9d8] sm:$0xff]
    %v467 = vld [vmem:[#allocation2 + $0x9e0] sm:$0xff]
    %v468 = vld [vmem:[#allocation2 + $0x9e8] sm:$0xff]
    %v469 = vld [vmem:[#allocation2 + $0x9f0] sm:$0xff]
    %v470 = vld [vmem:[#allocation2 + $0x9f8] sm:$0xff]
    %v471 = vld [vmem:[#allocation2 + $0xa00] sm:$0xff]
    %v472 = vld [vmem:[#allocation2 + $0xa08] sm:$0xff]
    %v473 = vld [vmem:[#allocation2 + $0xa10] sm:$0xff]
    %v474 = vld [vmem:[#allocation2 + $0xa18] sm:$0xff]
    %v475 = vld [vmem:[#allocation2 + $0xa20] sm:$0xff]
    %v476 = vld [vmem:[#allocation2 + $0xa28] sm:$0xff]
    %v477 = vld [vmem:[#allocation2 + $0xa30] sm:$0xff]
    %v478 = vld [vmem:[#allocation2 + $0xa38] sm:$0xff]
    %v479 = vld [vmem:[#allocation2 + $0xa40] sm:$0xff]
    %v480 = vld [vmem:[#allocation2 + $0xa48] sm:$0xff]
    %v481 = vld [vmem:[#allocation2 + $0xa50] sm:$0xff]
    %v482 = vld [vmem:[#allocation2 + $0xa58] sm:$0xff]
    %v483 = vld [vmem:[#allocation2 + $0xa60] sm:$0xff]
    %v484 = vld [vmem:[#allocation2 + $0xa68] sm:$0xff]
    %v485 = vld [vmem:[#allocation2 + $0xa70] sm:$0xff]
    %v486 = vld [vmem:[#allocation2 + $0xa78] sm:$0xff]
    %v487 = vld [vmem:[#allocation2 + $0xa80] sm:$0xff]
    %v488 = vld [vmem:[#allocation2 + $0xa88] sm:$0xff]
    %v489 = vld [vmem:[#allocation2 + $0xa90] sm:$0xff]
    %v490 = vld [vmem:[#allocation2 + $0xa98] sm:$0xff]
    %v491 = vld [vmem:[#allocation2 + $0xaa0] sm:$0xff]
    %v492 = vld [vmem:[#allocation2 + $0xaa8] sm:$0xff]
    %v493 = vld [vmem:[#allocation2 + $0xab0] sm:$0xff]
    %v494 = vld [vmem:[#allocation2 + $0xab8] sm:$0xff]
    %v495 = vld [vmem:[#allocation2 + $0xac0] sm:$0xff]
    %v496 = vld [vmem:[#allocation2 + $0xac8] sm:$0xff]
    %v497 = vld [vmem:[#allocation2 + $0xad0] sm:$0xff]
    %v498 = vld [vmem:[#allocation2 + $0xad8] sm:$0xff]
    %v499 = vld [vmem:[#allocation2 + $0xae0] sm:$0xff]
    %v500 = vld [vmem:[#allocation2 + $0xae8] sm:$0xff]
    %v501 = vld [vmem:[#allocation2 + $0xaf0] sm:$0xff]
    %v502 = vld [vmem:[#allocation2 + $0xaf8] sm:$0xff]
    %v503 = vld [vmem:[#allocation2 + $0xb00] sm:$0xff]
    %v504 = vld [vmem:[#allocation2 + $0xb08] sm:$0xff]
    %v505 = vld [vmem:[#allocation2 + $0xb10] sm:$0xff]
    %v506 = vld [vmem:[#allocation2 + $0xb18] sm:$0xff]
    %v507 = vld [vmem:[#allocation2 + $0xb20] sm:$0xff]
    %v508 = vld [vmem:[#allocation2 + $0xb28] sm:$0xff]
    %v509 = vld [vmem:[#allocation2 + $0xb30] sm:$0xff]
    %v510 = vld [vmem:[#allocation2 + $0xb38] sm:$0xff]
    %v511 = vld [vmem:[#allocation2 + $0xb40] sm:$0xff]
    %v512 = vld [vmem:[#allocation2 + $0xb48] sm:$0xff]
    %v513 = vld [vmem:[#allocation2 + $0xb50] sm:$0xff]
    %v514 = vld [vmem:[#allocation2 + $0xb58] sm:$0xff]
    %v515 = vld [vmem:[#allocation2 + $0xb60] sm:$0xff]
    %v516 = vld [vmem:[#allocation2 + $0xb68] sm:$0xff]
    %v517 = vld [vmem:[#allocation2 + $0xb70] sm:$0xff]
    %v518 = vld [vmem:[#allocation2 + $0xb78] sm:$0xff]
    %v519 = vld [vmem:[#allocation2 + $0xb80] sm:$0xff]
    %v520 = vld [vmem:[#allocation2 + $0xb88] sm:$0xff]
    %v521 = vld [vmem:[#allocation2 + $0xb90] sm:$0xff]
    %v522 = vld [vmem:[#allocation2 + $0xb98] sm:$0xff]
    %v523 = vld [vmem:[#allocation2 + $0xba0] sm:$0xff]
    %v524 = vld [vmem:[#allocation2 + $0xba8] sm:$0xff]
    %v525 = vld [vmem:[#allocation2 + $0xbb0] sm:$0xff]
    %v526 = vld [vmem:[#allocation2 + $0xbb8] sm:$0xff]
    %v527 = vld [vmem:[#allocation2 + $0xbc0] sm:$0xff]
    %v528 = vld [vmem:[#allocation2 + $0xbc8] sm:$0xff]
    %v529 = vld [vmem:[#allocation2 + $0xbd0] sm:$0xff]
    %v530 = vld [vmem:[#allocation2 + $0xbd8] sm:$0xff]
    %v531 = vld [vmem:[#allocation2 + $0xbe0] sm:$0xff]
    %v532 = vld [vmem:[#allocation2 + $0xbe8] sm:$0xff]
    %v533 = vld [vmem:[#allocation2 + $0xbf0] sm:$0xff]
    %v534 = vld [vmem:[#allocation2 + $0xbf8] sm:$0xff]
    %v535 = vld [vmem:[#allocation2 + $0xc00] sm:$0xff]
    %v536 = vld [vmem:[#allocation2 + $0xc08] sm:$0xff]
    %v537 = vld [vmem:[#allocation2 + $0xc10] sm:$0xff]
    %v538 = vld [vmem:[#allocation2 + $0xc18] sm:$0xff]
    %v539 = vld [vmem:[#allocation2 + $0xc20] sm:$0xff]
    %v540 = vld [vmem:[#allocation2 + $0xc28] sm:$0xff]
    %v541 = vld [vmem:[#allocation2 + $0xc30] sm:$0xff]
    %v542 = vld [vmem:[#allocation2 + $0xc38] sm:$0xff]
    %v543 = vld [vmem:[#allocation2 + $0xc40] sm:$0xff]
    %v544 = vld [vmem:[#allocation2 + $0xc48] sm:$0xff]
    %v545 = vld [vmem:[#allocation2 + $0xc50] sm:$0xff]
    %v546 = vld [vmem:[#allocation2 + $0xc58] sm:$0xff]
    %v547 = vld [vmem:[#allocation2 + $0xc60] sm:$0xff]
    %v548 = vld [vmem:[#allocation2 + $0xc68] sm:$0xff]
    %v549 = vld [vmem:[#allocation2 + $0xc70] sm:$0xff]
    %v550 = vld [vmem:[#allocation2 + $0xc78] sm:$0xff]
    %v551 = vld [vmem:[#allocation2 + $0xc80] sm:$0xff]
    %v552 = vld [vmem:[#allocation2 + $0xc88] sm:$0xff]
    %v553 = vld [vmem:[#allocation2 + $0xc90] sm:$0xff]
    %v554 = vld [vmem:[#allocation2 + $0xc98] sm:$0xff]
    %v555 = vld [vmem:[#allocation2 + $0xca0] sm:$0xff]
    %v556 = vld [vmem:[#allocation2 + $0xca8] sm:$0xff]
    %v557 = vld [vmem:[#allocation2 + $0xcb0] sm:$0xff]
    %v558 = vld [vmem:[#allocation2 + $0xcb8] sm:$0xff]
    %v559 = vld [vmem:[#allocation2 + $0xcc0] sm:$0xff]
    %v560 = vld [vmem:[#allocation2 + $0xcc8] sm:$0xff]
    %v561 = vld [vmem:[#allocation2 + $0xcd0] sm:$0xff]
    %v562 = vld [vmem:[#allocation2 + $0xcd8] sm:$0xff]
    %v563 = vld [vmem:[#allocation2 + $0xce0] sm:$0xff]
    %v564 = vld [vmem:[#allocation2 + $0xce8] sm:$0xff]
    %v565 = vld [vmem:[#allocation2 + $0xcf0] sm:$0xff]
    %v566 = vld [vmem:[#allocation2 + $0xcf8] sm:$0xff]
    %v567 = vld [vmem:[#allocation2 + $0xd00] sm:$0xff]
    %v568 = vld [vmem:[#allocation2 + $0xd08] sm:$0xff]
    %v569 = vld [vmem:[#allocation2 + $0xd10] sm:$0xff]
    %v570 = vld [vmem:[#allocation2 + $0xd18] sm:$0xff]
    %v571 = vld [vmem:[#allocation2 + $0xd20] sm:$0xff]
    %v572 = vld [vmem:[#allocation2 + $0xd28] sm:$0xff]
    %v573 = vld [vmem:[#allocation2 + $0xd30] sm:$0xff]
    %v574 = vld [vmem:[#allocation2 + $0xd38] sm:$0xff]
    %v575 = vld [vmem:[#allocation2 + $0xd40] sm:$0xff]
    %v576 = vld [vmem:[#allocation2 + $0xd48] sm:$0xff]
    %v577 = vld [vmem:[#allocation2 + $0xd50] sm:$0xff]
    %v578 = vld [vmem:[#allocation2 + $0xd58] sm:$0xff]
    %v579 = vld [vmem:[#allocation2 + $0xd60] sm:$0xff]
    %v580 = vld [vmem:[#allocation2 + $0xd68] sm:$0xff]
    %v581 = vld [vmem:[#allocation2 + $0xd70] sm:$0xff]
    %v582 = vld [vmem:[#allocation2 + $0xd78] sm:$0xff]
    %v583 = vld [vmem:[#allocation2 + $0xd80] sm:$0xff]
    %v584 = vld [vmem:[#allocation2 + $0xd88] sm:$0xff]
    %v585 = vld [vmem:[#allocation2 + $0xd90] sm:$0xff]
    %v586 = vld [vmem:[#allocation2 + $0xd98] sm:$0xff]
    %v587 = vld [vmem:[#allocation2 + $0xda0] sm:$0xff]
    %v588 = vld [vmem:[#allocation2 + $0xda8] sm:$0xff]
    %v589 = vld [vmem:[#allocation2 + $0xdb0] sm:$0xff]
    %v590 = vld [vmem:[#allocation2 + $0xdb8] sm:$0xff]
    %v591 = vld [vmem:[#allocation2 + $0xdc0] sm:$0xff]
    %v592 = vld [vmem:[#allocation2 + $0xdc8] sm:$0xff]
    %v593 = vld [vmem:[#allocation2 + $0xdd0] sm:$0xff]
    %v594 = vld [vmem:[#allocation2 + $0xdd8] sm:$0xff]
    %v595 = vld [vmem:[#allocation2 + $0xde0] sm:$0xff]
    %v596 = vld [vmem:[#allocation2 + $0xde8] sm:$0xff]
    %v597 = vld [vmem:[#allocation2 + $0xdf0] sm:$0xff]
    %v598 = vld [vmem:[#allocation2 + $0xdf8] sm:$0xff]
    %v599 = vld [vmem:[#allocation2 + $0xe00] sm:$0xff]
    %v600 = vld [vmem:[#allocation2 + $0xe08] sm:$0xff]
    %v601 = vld [vmem:[#allocation2 + $0xe10] sm:$0xff]
    %v602 = vld [vmem:[#allocation2 + $0xe18] sm:$0xff]
    %v603 = vld [vmem:[#allocation2 + $0xe20] sm:$0xff]
    %v604 = vld [vmem:[#allocation2 + $0xe28] sm:$0xff]
    %v605 = vld [vmem:[#allocation2 + $0xe30] sm:$0xff]
    %v606 = vld [vmem:[#allocation2 + $0xe38] sm:$0xff]
    %v607 = vld [vmem:[#allocation2 + $0xe40] sm:$0xff]
    %v608 = vld [vmem:[#allocation2 + $0xe48] sm:$0xff]
    %v609 = vld [vmem:[#allocation2 + $0xe50] sm:$0xff]
    %v610 = vld [vmem:[#allocation2 + $0xe58] sm:$0xff]
    %v611 = vld [vmem:[#allocation2 + $0xe60] sm:$0xff]
    %v612 = vld [vmem:[#allocation2 + $0xe68] sm:$0xff]
    %v613 = vld [vmem:[#allocation2 + $0xe70] sm:$0xff]
    %v614 = vld [vmem:[#allocation2 + $0xe78] sm:$0xff]
    %v615 = vld [vmem:[#allocation2 + $0xe80] sm:$0xff]
    %v616 = vld [vmem:[#allocation2 + $0xe88] sm:$0xff]
    %v617 = vld [vmem:[#allocation2 + $0xe90] sm:$0xff]
    %v618 = vld [vmem:[#allocation2 + $0xe98] sm:$0xff]
    %v619 = vld [vmem:[#allocation2 + $0xea0] sm:$0xff]
    %v620 = vld [vmem:[#allocation2 + $0xea8] sm:$0xff]
    %v621 = vld [vmem:[#allocation2 + $0xeb0] sm:$0xff]
    %v622 = vld [vmem:[#allocation2 + $0xeb8] sm:$0xff]
    %v623 = vld [vmem:[#allocation2 + $0xec0] sm:$0xff]
    %v624 = vld [vmem:[#allocation2 + $0xec8] sm:$0xff]
    %v625 = vld [vmem:[#allocation2 + $0xed0] sm:$0xff]
    %v626 = vld [vmem:[#allocation2 + $0xed8] sm:$0xff]
    %v627 = vld [vmem:[#allocation2 + $0xee0] sm:$0xff]
    %v628 = vld [vmem:[#allocation2 + $0xee8] sm:$0xff]
    %v629 = vld [vmem:[#allocation2 + $0xef0] sm:$0xff]
    %v630 = vld [vmem:[#allocation2 + $0xef8] sm:$0xff]
    %v631 = vld [vmem:[#allocation2 + $0xf00] sm:$0xff]
    %v632 = vld [vmem:[#allocation2 + $0xf08] sm:$0xff]
    %v633 = vld [vmem:[#allocation2 + $0xf10] sm:$0xff]
    %v634 = vld [vmem:[#allocation2 + $0xf18] sm:$0xff]
    %v635 = vld [vmem:[#allocation2 + $0xf20] sm:$0xff]
    %v636 = vld [vmem:[#allocation2 + $0xf28] sm:$0xff]
    %v637 = vld [vmem:[#allocation2 + $0xf30] sm:$0xff]
    %v638 = vld [vmem:[#allocation2 + $0xf38] sm:$0xff]
    %v639 = vld [vmem:[#allocation2 + $0xf40] sm:$0xff]
    %v640 = vld [vmem:[#allocation2 + $0xf48] sm:$0xff]
    %v641 = vld [vmem:[#allocation2 + $0xf50] sm:$0xff]
    %v642 = vld [vmem:[#allocation2 + $0xf58] sm:$0xff]
    %v643 = vld [vmem:[#allocation2 + $0xf60] sm:$0xff]
    %v644 = vld [vmem:[#allocation2 + $0xf68] sm:$0xff]
    %v645 = vld [vmem:[#allocation2 + $0xf70] sm:$0xff]
    %v646 = vld [vmem:[#allocation2 + $0xf78] sm:$0xff]
    %v647 = vld [vmem:[#allocation2 + $0xf80] sm:$0xff]
    %v648 = vld [vmem:[#allocation2 + $0xf88] sm:$0xff]
    %v649 = vld [vmem:[#allocation2 + $0xf90] sm:$0xff]
    %v650 = vld [vmem:[#allocation2 + $0xf98] sm:$0xff]
    %v651 = vld [vmem:[#allocation2 + $0xfa0] sm:$0xff]
    %v652 = vld [vmem:[#allocation2 + $0xfa8] sm:$0xff]
    %v653 = vld [vmem:[#allocation2 + $0xfb0] sm:$0xff]
    %v654 = vld [vmem:[#allocation2 + $0xfb8] sm:$0xff]
    %v655 = vld [vmem:[#allocation2 + $0xfc0] sm:$0xff]
    %v656 = vld [vmem:[#allocation2 + $0xfc8] sm:$0xff]
    %v657 = vld [vmem:[#allocation2 + $0xfd0] sm:$0xff]
    %v658 = vld [vmem:[#allocation2 + $0xfd8] sm:$0xff]
    %v659 = vld [vmem:[#allocation2 + $0xfe0] sm:$0xff]
    %v660 = vld [vmem:[#allocation2 + $0xfe8] sm:$0xff]
    %v661 = vld [vmem:[#allocation2 + $0xff0] sm:$0xff]
    %v662 = vld [vmem:[#allocation2 + $0xff8] sm:$0xff]
    %v663 = vld [vmem:[#allocation2 + $0x1000] sm:$0xff]
    %v664 = vld [vmem:[#allocation2 + $0x1008] sm:$0xff]
    %v665 = vld [vmem:[#allocation2 + $0x1010] sm:$0xff]
    %v666 = vld [vmem:[#allocation2 + $0x1018] sm:$0xff]
    %v667 = vld [vmem:[#allocation2 + $0x1020] sm:$0xff]
    %v668 = vld [vmem:[#allocation2 + $0x1028] sm:$0xff]
    %v669 = vld [vmem:[#allocation2 + $0x1030] sm:$0xff]
    %v670 = vld [vmem:[#allocation2 + $0x1038] sm:$0xff]
    %v671 = vld [vmem:[#allocation2 + $0x1040] sm:$0xff]
    %v672 = vld [vmem:[#allocation2 + $0x1048] sm:$0xff]
    %v673 = vld [vmem:[#allocation2 + $0x1050] sm:$0xff]
    %v674 = vld [vmem:[#allocation2 + $0x1058] sm:$0xff]
    %v675 = vld [vmem:[#allocation2 + $0x1060] sm:$0xff]
    %v676 = vld [vmem:[#allocation2 + $0x1068] sm:$0xff]
    %v677 = vld [vmem:[#allocation2 + $0x1070] sm:$0xff]
    %v678 = vld [vmem:[#allocation2 + $0x1078] sm:$0xff]
    %v679 = vld [vmem:[#allocation2 + $0x1080] sm:$0xff]
    %v680 = vld [vmem:[#allocation2 + $0x1088] sm:$0xff]
    %v681 = vld [vmem:[#allocation2 + $0x1090] sm:$0xff]
    %v682 = vld [vmem:[#allocation2 + $0x1098] sm:$0xff]
    %v683 = vld [vmem:[#allocation2 + $0x10a0] sm:$0xff]
    %v684 = vld [vmem:[#allocation2 + $0x10a8] sm:$0xff]
    %v685 = vld [vmem:[#allocation2 + $0x10b0] sm:$0xff]
    %v686 = vld [vmem:[#allocation2 + $0x10b8] sm:$0xff]
    %v687 = vld [vmem:[#allocation2 + $0x10c0] sm:$0xff]
    %v688 = vld [vmem:[#allocation2 + $0x10c8] sm:$0xff]
    %v689 = vld [vmem:[#allocation2 + $0x10d0] sm:$0xff]
    %v690 = vld [vmem:[#allocation2 + $0x10d8] sm:$0xff]
    %v691 = vld [vmem:[#allocation2 + $0x10e0] sm:$0xff]
    %v692 = vld [vmem:[#allocation2 + $0x10e8] sm:$0xff]
    %v693 = vld [vmem:[#allocation2 + $0x10f0] sm:$0xff]
    %v694 = vld [vmem:[#allocation2 + $0x10f8] sm:$0xff]
    %v695 = vld [vmem:[#allocation2 + $0x1100] sm:$0xff]
    %v696 = vld [vmem:[#allocation2 + $0x1108] sm:$0xff]
    %v697 = vld [vmem:[#allocation2 + $0x1110] sm:$0xff]
    %v698 = vld [vmem:[#allocation2 + $0x1118] sm:$0xff]
    %v699 = vld [vmem:[#allocation2 + $0x1120] sm:$0xff]
    %v700 = vld [vmem:[#allocation2 + $0x1128] sm:$0xff]
    %v701 = vld [vmem:[#allocation2 + $0x1130] sm:$0xff]
    %v702 = vld [vmem:[#allocation2 + $0x1138] sm:$0xff]
    %v703 = vld [vmem:[#allocation2 + $0x1140] sm:$0xff]
    %v704 = vld [vmem:[#allocation2 + $0x1148] sm:$0xff]
    %v705 = vld [vmem:[#allocation2 + $0x1150] sm:$0xff]
    %v706 = vld [vmem:[#allocation2 + $0x1158] sm:$0xff]
    %v707 = vld [vmem:[#allocation2 + $0x1160] sm:$0xff]
    %v708 = vld [vmem:[#allocation2 + $0x1168] sm:$0xff]
    %v709 = vld [vmem:[#allocation2 + $0x1170] sm:$0xff]
    %v710 = vld [vmem:[#allocation2 + $0x1178] sm:$0xff]
    %v711 = vld [vmem:[#allocation2 + $0x1180] sm:$0xff]
    %v712 = vld [vmem:[#allocation2 + $0x1188] sm:$0xff]
    %v713 = vld [vmem:[#allocation2 + $0x1190] sm:$0xff]
    %v714 = vld [vmem:[#allocation2 + $0x1198] sm:$0xff]
    %v715 = vld [vmem:[#allocation2 + $0x11a0] sm:$0xff]
    %v716 = vld [vmem:[#allocation2 + $0x11a8] sm:$0xff]
    %v717 = vld [vmem:[#allocation2 + $0x11b0] sm:$0xff]
    %v718 = vld [vmem:[#allocation2 + $0x11b8] sm:$0xff]
    %v719 = vld [vmem:[#allocation2 + $0x11c0] sm:$0xff]
    %v720 = vld [vmem:[#allocation2 + $0x11c8] sm:$0xff]
    %v721 = vld [vmem:[#allocation2 + $0x11d0] sm:$0xff]
    %v722 = vld [vmem:[#allocation2 + $0x11d8] sm:$0xff]
    %v723 = vld [vmem:[#allocation2 + $0x11e0] sm:$0xff]
    %v724 = vld [vmem:[#allocation2 + $0x11e8] sm:$0xff]
    %v725 = vld [vmem:[#allocation2 + $0x11f0] sm:$0xff]
    %v726 = vld [vmem:[#allocation2 + $0x11f8] sm:$0xff]
    %v727 = vld [vmem:[#allocation2 + $0x1200] sm:$0xff]
    %v728 = vld [vmem:[#allocation2 + $0x1208] sm:$0xff]
    %v729 = vld [vmem:[#allocation2 + $0x1210] sm:$0xff]
    %v730 = vld [vmem:[#allocation2 + $0x1218] sm:$0xff]
    %v731 = vld [vmem:[#allocation2 + $0x1220] sm:$0xff]
    %v732 = vld [vmem:[#allocation2 + $0x1228] sm:$0xff]
    %v733 = vld [vmem:[#allocation2 + $0x1230] sm:$0xff]
    %v734 = vld [vmem:[#allocation2 + $0x1238] sm:$0xff]
    %v735 = vld [vmem:[#allocation2 + $0x1240] sm:$0xff]
    %v736 = vld [vmem:[#allocation2 + $0x1248] sm:$0xff]
    %v737 = vld [vmem:[#allocation2 + $0x1250] sm:$0xff]
    %v738 = vld [vmem:[#allocation2 + $0x1258] sm:$0xff]
    %v739 = vld [vmem:[#allocation2 + $0x1260] sm:$0xff]
    %v740 = vld [vmem:[#allocation2 + $0x1268] sm:$0xff]
    %v741 = vld [vmem:[#allocation2 + $0x1270] sm:$0xff]
    %v742 = vld [vmem:[#allocation2 + $0x1278] sm:$0xff]
    %v743 = vld [vmem:[#allocation2 + $0x1280] sm:$0xff]
    %v744 = vld [vmem:[#allocation2 + $0x1288] sm:$0xff]
    %v745 = vld [vmem:[#allocation2 + $0x1290] sm:$0xff]
    %v746 = vld [vmem:[#allocation2 + $0x1298] sm:$0xff]
    %v747 = vld [vmem:[#allocation2 + $0x12a0] sm:$0xff]
    %v748 = vld [vmem:[#allocation2 + $0x12a8] sm:$0xff]
    %v749 = vld [vmem:[#allocation2 + $0x12b0] sm:$0xff]
    %v750 = vld [vmem:[#allocation2 + $0x12b8] sm:$0xff]
    %v751 = vld [vmem:[#allocation2 + $0x12c0] sm:$0xff]
    %v752 = vld [vmem:[#allocation2 + $0x12c8] sm:$0xff]
    %v753 = vld [vmem:[#allocation2 + $0x12d0] sm:$0xff]
    %v754 = vld [vmem:[#allocation2 + $0x12d8] sm:$0xff]
    %v755 = vld [vmem:[#allocation2 + $0x12e0] sm:$0xff]
    %v756 = vld [vmem:[#allocation2 + $0x12e8] sm:$0xff]
    %v757 = vld [vmem:[#allocation2 + $0x12f0] sm:$0xff]
    %v758 = vld [vmem:[#allocation2 + $0x12f8] sm:$0xff]
    %v759 = vld [vmem:[#allocation2 + $0x1300] sm:$0xff]
    %v760 = vld [vmem:[#allocation2 + $0x1308] sm:$0xff]
    %v761 = vld [vmem:[#allocation2 + $0x1310] sm:$0xff]
    %v762 = vld [vmem:[#allocation2 + $0x1318] sm:$0xff]
    %v763 = vld [vmem:[#allocation2 + $0x1320] sm:$0xff]
    %v764 = vld [vmem:[#allocation2 + $0x1328] sm:$0xff]
    %v765 = vld [vmem:[#allocation2 + $0x1330] sm:$0xff]
    %v766 = vld [vmem:[#allocation2 + $0x1338] sm:$0xff]
    %v767 = vld [vmem:[#allocation2 + $0x1340] sm:$0xff]
    %v768 = vld [vmem:[#allocation2 + $0x1348] sm:$0xff]
    %v769 = vld [vmem:[#allocation2 + $0x1350] sm:$0xff]
    %v770 = vld [vmem:[#allocation2 + $0x1358] sm:$0xff]
    %v771 = vld [vmem:[#allocation2 + $0x1360] sm:$0xff]
    %v772 = vld [vmem:[#allocation2 + $0x1368] sm:$0xff]
    %v773 = vld [vmem:[#allocation2 + $0x1370] sm:$0xff]
    %v774 = vld [vmem:[#allocation2 + $0x1378] sm:$0xff]
    %v775 = vld [vmem:[#allocation2 + $0x1380] sm:$0xff]
    %v776 = vld [vmem:[#allocation2 + $0x1388] sm:$0xff]
    %v777 = vld [vmem:[#allocation2 + $0x1390] sm:$0xff]
    %v778 = vld [vmem:[#allocation2 + $0x1398] sm:$0xff]
    %v779 = vld [vmem:[#allocation2 + $0x13a0] sm:$0xff]
    %v780 = vld [vmem:[#allocation2 + $0x13a8] sm:$0xff]
    %v781 = vld [vmem:[#allocation2 + $0x13b0] sm:$0xff]
    %v782 = vld [vmem:[#allocation2 + $0x13b8] sm:$0xff]
    %v783 = vld [vmem:[#allocation2 + $0x13c0] sm:$0xff]
    %v784 = vld [vmem:[#allocation2 + $0x13c8] sm:$0xff]
    %v785 = vld [vmem:[#allocation2 + $0x13d0] sm:$0xff]
    %v786 = vld [vmem:[#allocation2 + $0x13d8] sm:$0xff]
    %v787 = vld [vmem:[#allocation2 + $0x13e0] sm:$0xff]
    %v788 = vld [vmem:[#allocation2 + $0x13e8] sm:$0xff]
    %v789 = vld [vmem:[#allocation2 + $0x13f0] sm:$0xff]
    %v790 = vld [vmem:[#allocation2 + $0x13f8] sm:$0xff]
    %v791 = vld [vmem:[#allocation2 + $0x1400] sm:$0xff]
    %v792 = vld [vmem:[#allocation2 + $0x1408] sm:$0xff]
    %v793 = vld [vmem:[#allocation2 + $0x1410] sm:$0xff]
    %v794 = vld [vmem:[#allocation2 + $0x1418] sm:$0xff]
    %v795 = vld [vmem:[#allocation2 + $0x1420] sm:$0xff]
    %v796 = vld [vmem:[#allocation2 + $0x1428] sm:$0xff]
    %v797 = vld [vmem:[#allocation2 + $0x1430] sm:$0xff]
    %v798 = vld [vmem:[#allocation2 + $0x1438] sm:$0xff]
    %v799 = vld [vmem:[#allocation2 + $0x1440] sm:$0xff]
    %v800 = vld [vmem:[#allocation2 + $0x1448] sm:$0xff]
    %v801 = vld [vmem:[#allocation2 + $0x1450] sm:$0xff]
    %v802 = vld [vmem:[#allocation2 + $0x1458] sm:$0xff]
    %v803 = vld [vmem:[#allocation2 + $0x1460] sm:$0xff]
    %v804 = vld [vmem:[#allocation2 + $0x1468] sm:$0xff]
    %v805 = vld [vmem:[#allocation2 + $0x1470] sm:$0xff]
    %v806 = vld [vmem:[#allocation2 + $0x1478] sm:$0xff]
    %v807 = vld [vmem:[#allocation2 + $0x1480] sm:$0xff]
    %v808 = vld [vmem:[#allocation2 + $0x1488] sm:$0xff]
    %v809 = vld [vmem:[#allocation2 + $0x1490] sm:$0xff]
    %v810 = vld [vmem:[#allocation2 + $0x1498] sm:$0xff]
    %v811 = vld [vmem:[#allocation2 + $0x14a0] sm:$0xff]
    %v812 = vld [vmem:[#allocation2 + $0x14a8] sm:$0xff]
    %v813 = vld [vmem:[#allocation2 + $0x14b0] sm:$0xff]
    %v814 = vld [vmem:[#allocation2 + $0x14b8] sm:$0xff]
    %v815 = vld [vmem:[#allocation2 + $0x14c0] sm:$0xff]
    %v816 = vld [vmem:[#allocation2 + $0x14c8] sm:$0xff]
    %v817 = vld [vmem:[#allocation2 + $0x14d0] sm:$0xff]
    %v818 = vld [vmem:[#allocation2 + $0x14d8] sm:$0xff]
    %v819 = vld [vmem:[#allocation2 + $0x14e0] sm:$0xff]
    %v820 = vld [vmem:[#allocation2 + $0x14e8] sm:$0xff]
    %v821 = vld [vmem:[#allocation2 + $0x14f0] sm:$0xff]
    %v822 = vld [vmem:[#allocation2 + $0x14f8] sm:$0xff]
    %v823 = vld [vmem:[#allocation2 + $0x1500] sm:$0xff]
    %v824 = vld [vmem:[#allocation2 + $0x1508] sm:$0xff]
    %v825 = vld [vmem:[#allocation2 + $0x1510] sm:$0xff]
    %v826 = vld [vmem:[#allocation2 + $0x1518] sm:$0xff]
    %v827 = vld [vmem:[#allocation2 + $0x1520] sm:$0xff]
    %v828 = vld [vmem:[#allocation2 + $0x1528] sm:$0xff]
    %v829 = vld [vmem:[#allocation2 + $0x1530] sm:$0xff]
    %v830 = vld [vmem:[#allocation2 + $0x1538] sm:$0xff]
    %v831 = vld [vmem:[#allocation2 + $0x1540] sm:$0xff]
    %v832 = vld [vmem:[#allocation2 + $0x1548] sm:$0xff]
    %v833 = vld [vmem:[#allocation2 + $0x1550] sm:$0xff]
    %v834 = vld [vmem:[#allocation2 + $0x1558] sm:$0xff]
    %v835 = vld [vmem:[#allocation2 + $0x1560] sm:$0xff]
    %v836 = vld [vmem:[#allocation2 + $0x1568] sm:$0xff]
    %v837 = vld [vmem:[#allocation2 + $0x1570] sm:$0xff]
    %v838 = vld [vmem:[#allocation2 + $0x1578] sm:$0xff]
    %v839 = vld [vmem:[#allocation2 + $0x1580] sm:$0xff]
    %v840 = vld [vmem:[#allocation2 + $0x1588] sm:$0xff]
    %v841 = vld [vmem:[#allocation2 + $0x1590] sm:$0xff]
    %v842 = vld [vmem:[#allocation2 + $0x1598] sm:$0xff]
    %v843 = vld [vmem:[#allocation2 + $0x15a0] sm:$0xff]
    %v844 = vld [vmem:[#allocation2 + $0x15a8] sm:$0xff]
    %v845 = vld [vmem:[#allocation2 + $0x15b0] sm:$0xff]
    %v846 = vld [vmem:[#allocation2 + $0x15b8] sm:$0xff]
    %v847 = vld [vmem:[#allocation2 + $0x15c0] sm:$0xff]
    %v848 = vld [vmem:[#allocation2 + $0x15c8] sm:$0xff]
    %v849 = vld [vmem:[#allocation2 + $0x15d0] sm:$0xff]
    %v850 = vld [vmem:[#allocation2 + $0x15d8] sm:$0xff]
    %v851 = vld [vmem:[#allocation2 + $0x15e0] sm:$0xff]
    %v852 = vld [vmem:[#allocation2 + $0x15e8] sm:$0xff]
    %v853 = vld [vmem:[#allocation2 + $0x15f0] sm:$0xff]
    %v854 = vld [vmem:[#allocation2 + $0x15f8] sm:$0xff]
    %v855 = vld [vmem:[#allocation2 + $0x1600] sm:$0xff]
    %v856 = vld [vmem:[#allocation2 + $0x1608] sm:$0xff]
    %v857 = vld [vmem:[#allocation2 + $0x1610] sm:$0xff]
    %v858 = vld [vmem:[#allocation2 + $0x1618] sm:$0xff]
    %v859 = vld [vmem:[#allocation2 + $0x1620] sm:$0xff]
    %v860 = vld [vmem:[#allocation2 + $0x1628] sm:$0xff]
    %v861 = vld [vmem:[#allocation2 + $0x1630] sm:$0xff]
    %v862 = vld [vmem:[#allocation2 + $0x1638] sm:$0xff]
    %v863 = vld [vmem:[#allocation2 + $0x1640] sm:$0xff]
    %v864 = vld [vmem:[#allocation2 + $0x1648] sm:$0xff]
    %v865 = vld [vmem:[#allocation2 + $0x1650] sm:$0xff]
    %v866 = vld [vmem:[#allocation2 + $0x1658] sm:$0xff]
    %v867 = vld [vmem:[#allocation2 + $0x1660] sm:$0xff]
    %v868 = vld [vmem:[#allocation2 + $0x1668] sm:$0xff]
    %v869 = vld [vmem:[#allocation2 + $0x1670] sm:$0xff]
    %v870 = vld [vmem:[#allocation2 + $0x1678] sm:$0xff]
    %v871 = vld [vmem:[#allocation2 + $0x1680] sm:$0xff]
    %v872 = vld [vmem:[#allocation2 + $0x1688] sm:$0xff]
    %v873 = vld [vmem:[#allocation2 + $0x1690] sm:$0xff]
    %v874 = vld [vmem:[#allocation2 + $0x1698] sm:$0xff]
    %v875 = vld [vmem:[#allocation2 + $0x16a0] sm:$0xff]
    %v876 = vld [vmem:[#allocation2 + $0x16a8] sm:$0xff]
    %v877 = vld [vmem:[#allocation2 + $0x16b0] sm:$0xff]
    %v878 = vld [vmem:[#allocation2 + $0x16b8] sm:$0xff]
    %v879 = vld [vmem:[#allocation2 + $0x16c0] sm:$0xff]
    %v880 = vld [vmem:[#allocation2 + $0x16c8] sm:$0xff]
    %v881 = vld [vmem:[#allocation2 + $0x16d0] sm:$0xff]
    %v882 = vld [vmem:[#allocation2 + $0x16d8] sm:$0xff]
    %v883 = vld [vmem:[#allocation2 + $0x16e0] sm:$0xff]
    %v884 = vld [vmem:[#allocation2 + $0x16e8] sm:$0xff]
    %v885 = vld [vmem:[#allocation2 + $0x16f0] sm:$0xff]
    %v886 = vld [vmem:[#allocation2 + $0x16f8] sm:$0xff]
    %v887 = vld [vmem:[#allocation2 + $0x1700] sm:$0xff]
    %v888 = vld [vmem:[#allocation2 + $0x1708] sm:$0xff]
    %v889 = vld [vmem:[#allocation2 + $0x1710] sm:$0xff]
    %v890 = vld [vmem:[#allocation2 + $0x1718] sm:$0xff]
    %v891 = vld [vmem:[#allocation2 + $0x1720] sm:$0xff]
    %v892 = vld [vmem:[#allocation2 + $0x1728] sm:$0xff]
    %v893 = vld [vmem:[#allocation2 + $0x1730] sm:$0xff]
    %v894 = vld [vmem:[#allocation2 + $0x1738] sm:$0xff]
    %v895 = vld [vmem:[#allocation2 + $0x1740] sm:$0xff]
    %v896 = vld [vmem:[#allocation2 + $0x1748] sm:$0xff]
    %v897 = vld [vmem:[#allocation2 + $0x1750] sm:$0xff]
    %v898 = vld [vmem:[#allocation2 + $0x1758] sm:$0xff]
    %v899 = vld [vmem:[#allocation2 + $0x1760] sm:$0xff]
    %v900 = vld [vmem:[#allocation2 + $0x1768] sm:$0xff]
    %v901 = vld [vmem:[#allocation2 + $0x1770] sm:$0xff]
    %v902 = vld [vmem:[#allocation2 + $0x1778] sm:$0xff]
    %v903 = vld [vmem:[#allocation2 + $0x1780] sm:$0xff]
    %v904 = vld [vmem:[#allocation2 + $0x1788] sm:$0xff]
    %v905 = vld [vmem:[#allocation2 + $0x1790] sm:$0xff]
    %v906 = vld [vmem:[#allocation2 + $0x1798] sm:$0xff]
    %v907 = vld [vmem:[#allocation2 + $0x17a0] sm:$0xff]
    %v908 = vld [vmem:[#allocation2 + $0x17a8] sm:$0xff]
    %v909 = vld [vmem:[#allocation2 + $0x17b0] sm:$0xff]
    %v910 = vld [vmem:[#allocation2 + $0x17b8] sm:$0xff]
    %v911 = vld [vmem:[#allocation2 + $0x17c0] sm:$0xff]
    %v912 = vld [vmem:[#allocation2 + $0x17c8] sm:$0xff]
    %v913 = vld [vmem:[#allocation2 + $0x17d0] sm:$0xff]
    %v914 = vld [vmem:[#allocation2 + $0x17d8] sm:$0xff]
    %v915 = vld [vmem:[#allocation2 + $0x17e0] sm:$0xff]
    %v916 = vld [vmem:[#allocation2 + $0x17e8] sm:$0xff]
    %v917 = vld [vmem:[#allocation2 + $0x17f0] sm:$0xff]
    %v918 = vld [vmem:[#allocation2 + $0x17f8] sm:$0xff]
    %v919 = vld [vmem:[#allocation4] sm:$0xf]
    %v921 = vlaneseq
    %v922 = vshrl.u32 %v921, 7
    %v923 = vsub.s32 0, %v922
    %v924 = vrot.slane %v919, %v923
    %v925 = vlaneseq
    %v926 = vshrl.u32 %v925, 7
    %v927 = vsub.s32 1, %v926
    %v928 = vrot.slane %v919, %v927
    %v929 = vlaneseq
    %v930 = vshrl.u32 %v929, 7
    %v931 = vsub.s32 2, %v930
    %v932 = vrot.slane %v919, %v931
    %v933 = vlaneseq
    %v934 = vshrl.u32 %v933, 7
    %v935 = vsub.s32 3, %v934
    %v936 = vrot.slane %v919, %v935
    %v1709 = vunpack.c.l.b16 %v151
    %v1710 = vunpack.c.h.b16 %v151
    %v1711 = vunpack.c.l.b16 %v152
    %v1712 = vunpack.c.h.b16 %v152
    %v1713 = vunpack.c.l.b16 %v153
    %v1714 = vunpack.c.h.b16 %v153
    %v1715 = vunpack.c.l.b16 %v154
    %v1716 = vunpack.c.h.b16 %v154
    %v1717 = vunpack.c.l.b16 %v155
    %v1718 = vunpack.c.h.b16 %v155
    %v1719 = vunpack.c.l.b16 %v156
    %v1720 = vunpack.c.h.b16 %v156
    %v1721 = vunpack.c.l.b16 %v157
    %v1722 = vunpack.c.h.b16 %v157
    %v1723 = vunpack.c.l.b16 %v158
    %v1724 = vunpack.c.h.b16 %v158
    %v1725 = vunpack.c.l.b16 %v159
    %v1726 = vunpack.c.h.b16 %v159
    %v1727 = vunpack.c.l.b16 %v160
    %v1728 = vunpack.c.h.b16 %v160
    %v1729 = vunpack.c.l.b16 %v161
    %v1730 = vunpack.c.h.b16 %v161
    %v1731 = vunpack.c.l.b16 %v162
    %v1732 = vunpack.c.h.b16 %v162
    %v1733 = vunpack.c.l.b16 %v163
    %v1734 = vunpack.c.h.b16 %v163
    %v1735 = vunpack.c.l.b16 %v164
    %v1736 = vunpack.c.h.b16 %v164
    %v1737 = vunpack.c.l.b16 %v165
    %v1738 = vunpack.c.h.b16 %v165
    %v1739 = vunpack.c.l.b16 %v166
    %v1740 = vunpack.c.h.b16 %v166
    %v1741 = vunpack.c.l.b16 %v167
    %v1742 = vunpack.c.h.b16 %v167
    %v1743 = vunpack.c.l.b16 %v168
    %v1744 = vunpack.c.h.b16 %v168
    %v1745 = vunpack.c.l.b16 %v169
    %v1746 = vunpack.c.h.b16 %v169
    %v1747 = vunpack.c.l.b16 %v170
    %v1748 = vunpack.c.h.b16 %v170
    %v1749 = vunpack.c.l.b16 %v171
    %v1750 = vunpack.c.h.b16 %v171
    %v1751 = vunpack.c.l.b16 %v172
    %v1752 = vunpack.c.h.b16 %v172
    %v1753 = vunpack.c.l.b16 %v173
    %v1754 = vunpack.c.h.b16 %v173
    %v1755 = vunpack.c.l.b16 %v174
    %v1756 = vunpack.c.h.b16 %v174
    %v1757 = vunpack.c.l.b16 %v175
    %v1758 = vunpack.c.h.b16 %v175
    %v1759 = vunpack.c.l.b16 %v176
    %v1760 = vunpack.c.h.b16 %v176
    %v1761 = vunpack.c.l.b16 %v177
    %v1762 = vunpack.c.h.b16 %v177
    %v1763 = vunpack.c.l.b16 %v178
    %v1764 = vunpack.c.h.b16 %v178
    %v1765 = vunpack.c.l.b16 %v179
    %v1766 = vunpack.c.h.b16 %v179
    %v1767 = vunpack.c.l.b16 %v180
    %v1768 = vunpack.c.h.b16 %v180
    %v1769 = vunpack.c.l.b16 %v181
    %v1770 = vunpack.c.h.b16 %v181
    %v1771 = vunpack.c.l.b16 %v182
    %v1772 = vunpack.c.h.b16 %v182
    %v1773 = vunpack.c.l.b16 %v183
    %v1774 = vunpack.c.h.b16 %v183
    %v1775 = vunpack.c.l.b16 %v184
    %v1776 = vunpack.c.h.b16 %v184
    %v1777 = vunpack.c.l.b16 %v185
    %v1778 = vunpack.c.h.b16 %v185
    %v1779 = vunpack.c.l.b16 %v186
    %v1780 = vunpack.c.h.b16 %v186
    %v1781 = vunpack.c.l.b16 %v187
    %v1782 = vunpack.c.h.b16 %v187
    %v1783 = vunpack.c.l.b16 %v188
    %v1784 = vunpack.c.h.b16 %v188
    %v1785 = vunpack.c.l.b16 %v189
    %v1786 = vunpack.c.h.b16 %v189
    %v1787 = vunpack.c.l.b16 %v190
    %v1788 = vunpack.c.h.b16 %v190
    %v1789 = vunpack.c.l.b16 %v191
    %v1790 = vunpack.c.h.b16 %v191
    %v1791 = vunpack.c.l.b16 %v192
    %v1792 = vunpack.c.h.b16 %v192
    %v1793 = vunpack.c.l.b16 %v193
    %v1794 = vunpack.c.h.b16 %v193
    %v1795 = vunpack.c.l.b16 %v194
    %v1796 = vunpack.c.h.b16 %v194
    %v1797 = vunpack.c.l.b16 %v195
    %v1798 = vunpack.c.h.b16 %v195
    %v1799 = vunpack.c.l.b16 %v196
    %v1800 = vunpack.c.h.b16 %v196
    %v1801 = vunpack.c.l.b16 %v197
    %v1802 = vunpack.c.h.b16 %v197
    %v1803 = vunpack.c.l.b16 %v198
    %v1804 = vunpack.c.h.b16 %v198
    %v1805 = vunpack.c.l.b16 %v199
    %v1806 = vunpack.c.h.b16 %v199
    %v1807 = vunpack.c.l.b16 %v200
    %v1808 = vunpack.c.h.b16 %v200
    %v1809 = vunpack.c.l.b16 %v201
    %v1810 = vunpack.c.h.b16 %v201
    %v1811 = vunpack.c.l.b16 %v202
    %v1812 = vunpack.c.h.b16 %v202
    %v1813 = vunpack.c.l.b16 %v203
    %v1814 = vunpack.c.h.b16 %v203
    %v1815 = vunpack.c.l.b16 %v204
    %v1816 = vunpack.c.h.b16 %v204
    %v1817 = vunpack.c.l.b16 %v205
    %v1818 = vunpack.c.h.b16 %v205
    %v1819 = vunpack.c.l.b16 %v206
    %v1820 = vunpack.c.h.b16 %v206
    %v1821 = vunpack.c.l.b16 %v207
    %v1822 = vunpack.c.h.b16 %v207
    %v1823 = vunpack.c.l.b16 %v208
    %v1824 = vunpack.c.h.b16 %v208
    %v1825 = vunpack.c.l.b16 %v209
    %v1826 = vunpack.c.h.b16 %v209
    %v1827 = vunpack.c.l.b16 %v210
    %v1828 = vunpack.c.h.b16 %v210
    %v1829 = vunpack.c.l.b16 %v211
    %v1830 = vunpack.c.h.b16 %v211
    %v1831 = vunpack.c.l.b16 %v212
    %v1832 = vunpack.c.h.b16 %v212
    %v1833 = vunpack.c.l.b16 %v213
    %v1834 = vunpack.c.h.b16 %v213
    %v1835 = vunpack.c.l.b16 %v214
    %v1836 = vunpack.c.h.b16 %v214
    %v1837 = vunpack.c.l.b16 %v215
    %v1838 = vunpack.c.h.b16 %v215
    %v1839 = vunpack.c.l.b16 %v216
    %v1840 = vunpack.c.h.b16 %v216
    %v1841 = vunpack.c.l.b16 %v217
    %v1842 = vunpack.c.h.b16 %v217
    %v1843 = vunpack.c.l.b16 %v218
    %v1844 = vunpack.c.h.b16 %v218
    %v1845 = vunpack.c.l.b16 %v219
    %v1846 = vunpack.c.h.b16 %v219
    %v1847 = vunpack.c.l.b16 %v220
    %v1848 = vunpack.c.h.b16 %v220
    %v1849 = vunpack.c.l.b16 %v221
    %v1850 = vunpack.c.h.b16 %v221
    %v1851 = vunpack.c.l.b16 %v222
    %v1852 = vunpack.c.h.b16 %v222
    %v1853 = vunpack.c.l.b16 %v223
    %v1854 = vunpack.c.h.b16 %v223
    %v1855 = vunpack.c.l.b16 %v224
    %v1856 = vunpack.c.h.b16 %v224
    %v1857 = vunpack.c.l.b16 %v225
    %v1858 = vunpack.c.h.b16 %v225
    %v1859 = vunpack.c.l.b16 %v226
    %v1860 = vunpack.c.h.b16 %v226
    %v1861 = vunpack.c.l.b16 %v227
    %v1862 = vunpack.c.h.b16 %v227
    %v1863 = vunpack.c.l.b16 %v228
    %v1864 = vunpack.c.h.b16 %v228
    %v1865 = vunpack.c.l.b16 %v229
    %v1866 = vunpack.c.h.b16 %v229
    %v1867 = vunpack.c.l.b16 %v230
    %v1868 = vunpack.c.h.b16 %v230
    %v1869 = vunpack.c.l.b16 %v231
    %v1870 = vunpack.c.h.b16 %v231
    %v1871 = vunpack.c.l.b16 %v232
    %v1872 = vunpack.c.h.b16 %v232
    %v1873 = vunpack.c.l.b16 %v233
    %v1874 = vunpack.c.h.b16 %v233
    %v1875 = vunpack.c.l.b16 %v234
    %v1876 = vunpack.c.h.b16 %v234
    %v1877 = vunpack.c.l.b16 %v235
    %v1878 = vunpack.c.h.b16 %v235
    %v1879 = vunpack.c.l.b16 %v236
    %v1880 = vunpack.c.h.b16 %v236
    %v1881 = vunpack.c.l.b16 %v237
    %v1882 = vunpack.c.h.b16 %v237
    %v1883 = vunpack.c.l.b16 %v238
    %v1884 = vunpack.c.h.b16 %v238
    %v1885 = vunpack.c.l.b16 %v239
    %v1886 = vunpack.c.h.b16 %v239
    %v1887 = vunpack.c.l.b16 %v240
    %v1888 = vunpack.c.h.b16 %v240
    %v1889 = vunpack.c.l.b16 %v241
    %v1890 = vunpack.c.h.b16 %v241
    %v1891 = vunpack.c.l.b16 %v242
    %v1892 = vunpack.c.h.b16 %v242
    %v1893 = vunpack.c.l.b16 %v243
    %v1894 = vunpack.c.h.b16 %v243
    %v1895 = vunpack.c.l.b16 %v244
    %v1896 = vunpack.c.h.b16 %v244
    %v1897 = vunpack.c.l.b16 %v245
    %v1898 = vunpack.c.h.b16 %v245
    %v1899 = vunpack.c.l.b16 %v246
    %v1900 = vunpack.c.h.b16 %v246
    %v1901 = vunpack.c.l.b16 %v247
    %v1902 = vunpack.c.h.b16 %v247
    %v1903 = vunpack.c.l.b16 %v248
    %v1904 = vunpack.c.h.b16 %v248
    %v1905 = vunpack.c.l.b16 %v249
    %v1906 = vunpack.c.h.b16 %v249
    %v1907 = vunpack.c.l.b16 %v250
    %v1908 = vunpack.c.h.b16 %v250
    %v1909 = vunpack.c.l.b16 %v251
    %v1910 = vunpack.c.h.b16 %v251
    %v1911 = vunpack.c.l.b16 %v252
    %v1912 = vunpack.c.h.b16 %v252
    %v1913 = vunpack.c.l.b16 %v253
    %v1914 = vunpack.c.h.b16 %v253
    %v1915 = vunpack.c.l.b16 %v254
    %v1916 = vunpack.c.h.b16 %v254
    %v1917 = vunpack.c.l.b16 %v255
    %v1918 = vunpack.c.h.b16 %v255
    %v1919 = vunpack.c.l.b16 %v256
    %v1920 = vunpack.c.h.b16 %v256
    %v1921 = vunpack.c.l.b16 %v257
    %v1922 = vunpack.c.h.b16 %v257
    %v1923 = vunpack.c.l.b16 %v258
    %v1924 = vunpack.c.h.b16 %v258
    %v1925 = vunpack.c.l.b16 %v259
    %v1926 = vunpack.c.h.b16 %v259
    %v1927 = vunpack.c.l.b16 %v260
    %v1928 = vunpack.c.h.b16 %v260
    %v1929 = vunpack.c.l.b16 %v261
    %v1930 = vunpack.c.h.b16 %v261
    %v1931 = vunpack.c.l.b16 %v262
    %v1932 = vunpack.c.h.b16 %v262
    %v1933 = vunpack.c.l.b16 %v263
    %v1934 = vunpack.c.h.b16 %v263
    %v1935 = vunpack.c.l.b16 %v264
    %v1936 = vunpack.c.h.b16 %v264
    %v1937 = vunpack.c.l.b16 %v265
    %v1938 = vunpack.c.h.b16 %v265
    %v1939 = vunpack.c.l.b16 %v266
    %v1940 = vunpack.c.h.b16 %v266
    %v1941 = vunpack.c.l.b16 %v267
    %v1942 = vunpack.c.h.b16 %v267
    %v1943 = vunpack.c.l.b16 %v268
    %v1944 = vunpack.c.h.b16 %v268
    %v1945 = vunpack.c.l.b16 %v269
    %v1946 = vunpack.c.h.b16 %v269
    %v1947 = vunpack.c.l.b16 %v270
    %v1948 = vunpack.c.h.b16 %v270
    %v1949 = vunpack.c.l.b16 %v271
    %v1950 = vunpack.c.h.b16 %v271
    %v1951 = vunpack.c.l.b16 %v272
    %v1952 = vunpack.c.h.b16 %v272
    %v1953 = vunpack.c.l.b16 %v273
    %v1954 = vunpack.c.h.b16 %v273
    %v1955 = vunpack.c.l.b16 %v274
    %v1956 = vunpack.c.h.b16 %v274
    %v1957 = vunpack.c.l.b16 %v275
    %v1958 = vunpack.c.h.b16 %v275
    %v1959 = vunpack.c.l.b16 %v276
    %v1960 = vunpack.c.h.b16 %v276
    %v1961 = vunpack.c.l.b16 %v277
    %v1962 = vunpack.c.h.b16 %v277
    %v1963 = vunpack.c.l.b16 %v278
    %v1964 = vunpack.c.h.b16 %v278
    %v1965 = vunpack.c.l.b16 %v279
    %v1966 = vunpack.c.h.b16 %v279
    %v1967 = vunpack.c.l.b16 %v280
    %v1968 = vunpack.c.h.b16 %v280
    %v1969 = vunpack.c.l.b16 %v281
    %v1970 = vunpack.c.h.b16 %v281
    %v1971 = vunpack.c.l.b16 %v282
    %v1972 = vunpack.c.h.b16 %v282
    %v1973 = vunpack.c.l.b16 %v283
    %v1974 = vunpack.c.h.b16 %v283
    %v1975 = vunpack.c.l.b16 %v284
    %v1976 = vunpack.c.h.b16 %v284
    %v1977 = vunpack.c.l.b16 %v285
    %v1978 = vunpack.c.h.b16 %v285
    %v1979 = vunpack.c.l.b16 %v286
    %v1980 = vunpack.c.h.b16 %v286
    %v1981 = vunpack.c.l.b16 %v287
    %v1982 = vunpack.c.h.b16 %v287
    %v1983 = vunpack.c.l.b16 %v288
    %v1984 = vunpack.c.h.b16 %v288
    %v1985 = vunpack.c.l.b16 %v289
    %v1986 = vunpack.c.h.b16 %v289
    %v1987 = vunpack.c.l.b16 %v290
    %v1988 = vunpack.c.h.b16 %v290
    %v1989 = vunpack.c.l.b16 %v291
    %v1990 = vunpack.c.h.b16 %v291
    %v1991 = vunpack.c.l.b16 %v292
    %v1992 = vunpack.c.h.b16 %v292
    %v1993 = vunpack.c.l.b16 %v293
    %v1994 = vunpack.c.h.b16 %v293
    %v1995 = vunpack.c.l.b16 %v294
    %v1996 = vunpack.c.h.b16 %v294
    %v1997 = vunpack.c.l.b16 %v295
    %v1998 = vunpack.c.h.b16 %v295
    %v1999 = vunpack.c.l.b16 %v296
    %v2000 = vunpack.c.h.b16 %v296
    %v2001 = vunpack.c.l.b16 %v297
    %v2002 = vunpack.c.h.b16 %v297
    %v2003 = vunpack.c.l.b16 %v298
    %v2004 = vunpack.c.h.b16 %v298
    %v2005 = vunpack.c.l.b16 %v299
    %v2006 = vunpack.c.h.b16 %v299
    %v2007 = vunpack.c.l.b16 %v300
    %v2008 = vunpack.c.h.b16 %v300
    %v2009 = vunpack.c.l.b16 %v301
    %v2010 = vunpack.c.h.b16 %v301
    %v2011 = vunpack.c.l.b16 %v302
    %v2012 = vunpack.c.h.b16 %v302
    %v2013 = vunpack.c.l.b16 %v303
    %v2014 = vunpack.c.h.b16 %v303
    %v2015 = vunpack.c.l.b16 %v304
    %v2016 = vunpack.c.h.b16 %v304
    %v2017 = vunpack.c.l.b16 %v305
    %v2018 = vunpack.c.h.b16 %v305
    %v2019 = vunpack.c.l.b16 %v306
    %v2020 = vunpack.c.h.b16 %v306
    %v2021 = vunpack.c.l.b16 %v307
    %v2022 = vunpack.c.h.b16 %v307
    %v2023 = vunpack.c.l.b16 %v308
    %v2024 = vunpack.c.h.b16 %v308
    %v2025 = vunpack.c.l.b16 %v309
    %v2026 = vunpack.c.h.b16 %v309
    %v2027 = vunpack.c.l.b16 %v310
    %v2028 = vunpack.c.h.b16 %v310
    %v2029 = vunpack.c.l.b16 %v311
    %v2030 = vunpack.c.h.b16 %v311
    %v2031 = vunpack.c.l.b16 %v312
    %v2032 = vunpack.c.h.b16 %v312
    %v2033 = vunpack.c.l.b16 %v313
    %v2034 = vunpack.c.h.b16 %v313
    %v2035 = vunpack.c.l.b16 %v314
    %v2036 = vunpack.c.h.b16 %v314
    %v2037 = vunpack.c.l.b16 %v315
    %v2038 = vunpack.c.h.b16 %v315
    %v2039 = vunpack.c.l.b16 %v316
    %v2040 = vunpack.c.h.b16 %v316
    %v2041 = vunpack.c.l.b16 %v317
    %v2042 = vunpack.c.h.b16 %v317
    %v2043 = vunpack.c.l.b16 %v318
    %v2044 = vunpack.c.h.b16 %v318
    %v2045 = vunpack.c.l.b16 %v319
    %v2046 = vunpack.c.h.b16 %v319
    %v2047 = vunpack.c.l.b16 %v320
    %v2048 = vunpack.c.h.b16 %v320
    %v2049 = vunpack.c.l.b16 %v321
    %v2050 = vunpack.c.h.b16 %v321
    %v2051 = vunpack.c.l.b16 %v322
    %v2052 = vunpack.c.h.b16 %v322
    %v2053 = vunpack.c.l.b16 %v323
    %v2054 = vunpack.c.h.b16 %v323
    %v2055 = vunpack.c.l.b16 %v324
    %v2056 = vunpack.c.h.b16 %v324
    %v2057 = vunpack.c.l.b16 %v325
    %v2058 = vunpack.c.h.b16 %v325
    %v2059 = vunpack.c.l.b16 %v326
    %v2060 = vunpack.c.h.b16 %v326
    %v2061 = vunpack.c.l.b16 %v327
    %v2062 = vunpack.c.h.b16 %v327
    %v2063 = vunpack.c.l.b16 %v328
    %v2064 = vunpack.c.h.b16 %v328
    %v2065 = vunpack.c.l.b16 %v329
    %v2066 = vunpack.c.h.b16 %v329
    %v2067 = vunpack.c.l.b16 %v330
    %v2068 = vunpack.c.h.b16 %v330
    %v2069 = vunpack.c.l.b16 %v331
    %v2070 = vunpack.c.h.b16 %v331
    %v2071 = vunpack.c.l.b16 %v332
    %v2072 = vunpack.c.h.b16 %v332
    %v2073 = vunpack.c.l.b16 %v333
    %v2074 = vunpack.c.h.b16 %v333
    %v2075 = vunpack.c.l.b16 %v334
    %v2076 = vunpack.c.h.b16 %v334
    %v2077 = vunpack.c.l.b16 %v335
    %v2078 = vunpack.c.h.b16 %v335
    %v2079 = vunpack.c.l.b16 %v336
    %v2080 = vunpack.c.h.b16 %v336
    %v2081 = vunpack.c.l.b16 %v337
    %v2082 = vunpack.c.h.b16 %v337
    %v2083 = vunpack.c.l.b16 %v338
    %v2084 = vunpack.c.h.b16 %v338
    %v2085 = vunpack.c.l.b16 %v339
    %v2086 = vunpack.c.h.b16 %v339
    %v2087 = vunpack.c.l.b16 %v340
    %v2088 = vunpack.c.h.b16 %v340
    %v2089 = vunpack.c.l.b16 %v341
    %v2090 = vunpack.c.h.b16 %v341
    %v2091 = vunpack.c.l.b16 %v342
    %v2092 = vunpack.c.h.b16 %v342
    %v2093 = vunpack.c.l.b16 %v343
    %v2094 = vunpack.c.h.b16 %v343
    %v2095 = vunpack.c.l.b16 %v344
    %v2096 = vunpack.c.h.b16 %v344
    %v2097 = vunpack.c.l.b16 %v345
    %v2098 = vunpack.c.h.b16 %v345
    %v2099 = vunpack.c.l.b16 %v346
    %v2100 = vunpack.c.h.b16 %v346
    %v2101 = vunpack.c.l.b16 %v347
    %v2102 = vunpack.c.h.b16 %v347
    %v2103 = vunpack.c.l.b16 %v348
    %v2104 = vunpack.c.h.b16 %v348
    %v2105 = vunpack.c.l.b16 %v349
    %v2106 = vunpack.c.h.b16 %v349
    %v2107 = vunpack.c.l.b16 %v350
    %v2108 = vunpack.c.h.b16 %v350
    %v2109 = vunpack.c.l.b16 %v351
    %v2110 = vunpack.c.h.b16 %v351
    %v2111 = vunpack.c.l.b16 %v352
    %v2112 = vunpack.c.h.b16 %v352
    %v2113 = vunpack.c.l.b16 %v353
    %v2114 = vunpack.c.h.b16 %v353
    %v2115 = vunpack.c.l.b16 %v354
    %v2116 = vunpack.c.h.b16 %v354
    %v2117 = vunpack.c.l.b16 %v355
    %v2118 = vunpack.c.h.b16 %v355
    %v2119 = vunpack.c.l.b16 %v356
    %v2120 = vunpack.c.h.b16 %v356
    %v2121 = vunpack.c.l.b16 %v357
    %v2122 = vunpack.c.h.b16 %v357
    %v2123 = vunpack.c.l.b16 %v358
    %v2124 = vunpack.c.h.b16 %v358
    %v2125 = vunpack.c.l.b16 %v359
    %v2126 = vunpack.c.h.b16 %v359
    %v2127 = vunpack.c.l.b16 %v360
    %v2128 = vunpack.c.h.b16 %v360
    %v2129 = vunpack.c.l.b16 %v361
    %v2130 = vunpack.c.h.b16 %v361
    %v2131 = vunpack.c.l.b16 %v362
    %v2132 = vunpack.c.h.b16 %v362
    %v2133 = vunpack.c.l.b16 %v363
    %v2134 = vunpack.c.h.b16 %v363
    %v2135 = vunpack.c.l.b16 %v364
    %v2136 = vunpack.c.h.b16 %v364
    %v2137 = vunpack.c.l.b16 %v365
    %v2138 = vunpack.c.h.b16 %v365
    %v2139 = vunpack.c.l.b16 %v366
    %v2140 = vunpack.c.h.b16 %v366
    %v2141 = vunpack.c.l.b16 %v367
    %v2142 = vunpack.c.h.b16 %v367
    %v2143 = vunpack.c.l.b16 %v368
    %v2144 = vunpack.c.h.b16 %v368
    %v2145 = vunpack.c.l.b16 %v369
    %v2146 = vunpack.c.h.b16 %v369
    %v2147 = vunpack.c.l.b16 %v370
    %v2148 = vunpack.c.h.b16 %v370
    %v2149 = vunpack.c.l.b16 %v371
    %v2150 = vunpack.c.h.b16 %v371
    %v2151 = vunpack.c.l.b16 %v372
    %v2152 = vunpack.c.h.b16 %v372
    %v2153 = vunpack.c.l.b16 %v373
    %v2154 = vunpack.c.h.b16 %v373
    %v2155 = vunpack.c.l.b16 %v374
    %v2156 = vunpack.c.h.b16 %v374
    %v2157 = vunpack.c.l.b16 %v375
    %v2158 = vunpack.c.h.b16 %v375
    %v2159 = vunpack.c.l.b16 %v376
    %v2160 = vunpack.c.h.b16 %v376
    %v2161 = vunpack.c.l.b16 %v377
    %v2162 = vunpack.c.h.b16 %v377
    %v2163 = vunpack.c.l.b16 %v378
    %v2164 = vunpack.c.h.b16 %v378
    %v2165 = vunpack.c.l.b16 %v379
    %v2166 = vunpack.c.h.b16 %v379
    %v2167 = vunpack.c.l.b16 %v380
    %v2168 = vunpack.c.h.b16 %v380
    %v2169 = vunpack.c.l.b16 %v381
    %v2170 = vunpack.c.h.b16 %v381
    %v2171 = vunpack.c.l.b16 %v382
    %v2172 = vunpack.c.h.b16 %v382
    %v2173 = vunpack.c.l.b16 %v383
    %v2174 = vunpack.c.h.b16 %v383
    %v2175 = vunpack.c.l.b16 %v384
    %v2176 = vunpack.c.h.b16 %v384
    %v2177 = vunpack.c.l.b16 %v385
    %v2178 = vunpack.c.h.b16 %v385
    %v2179 = vunpack.c.l.b16 %v386
    %v2180 = vunpack.c.h.b16 %v386
    %v2181 = vunpack.c.l.b16 %v387
    %v2182 = vunpack.c.h.b16 %v387
    %v2183 = vunpack.c.l.b16 %v388
    %v2184 = vunpack.c.h.b16 %v388
    %v2185 = vunpack.c.l.b16 %v389
    %v2186 = vunpack.c.h.b16 %v389
    %v2187 = vunpack.c.l.b16 %v390
    %v2188 = vunpack.c.h.b16 %v390
    %v2189 = vunpack.c.l.b16 %v391
    %v2190 = vunpack.c.h.b16 %v391
    %v2191 = vunpack.c.l.b16 %v392
    %v2192 = vunpack.c.h.b16 %v392
    %v2193 = vunpack.c.l.b16 %v393
    %v2194 = vunpack.c.h.b16 %v393
    %v2195 = vunpack.c.l.b16 %v394
    %v2196 = vunpack.c.h.b16 %v394
    %v2197 = vunpack.c.l.b16 %v395
    %v2198 = vunpack.c.h.b16 %v395
    %v2199 = vunpack.c.l.b16 %v396
    %v2200 = vunpack.c.h.b16 %v396
    %v2201 = vunpack.c.l.b16 %v397
    %v2202 = vunpack.c.h.b16 %v397
    %v2203 = vunpack.c.l.b16 %v398
    %v2204 = vunpack.c.h.b16 %v398
    %v2205 = vunpack.c.l.b16 %v399
    %v2206 = vunpack.c.h.b16 %v399
    %v2207 = vunpack.c.l.b16 %v400
    %v2208 = vunpack.c.h.b16 %v400
    %v2209 = vunpack.c.l.b16 %v401
    %v2210 = vunpack.c.h.b16 %v401
    %v2211 = vunpack.c.l.b16 %v402
    %v2212 = vunpack.c.h.b16 %v402
    %v2213 = vunpack.c.l.b16 %v403
    %v2214 = vunpack.c.h.b16 %v403
    %v2215 = vunpack.c.l.b16 %v404
    %v2216 = vunpack.c.h.b16 %v404
    %v2217 = vunpack.c.l.b16 %v405
    %v2218 = vunpack.c.h.b16 %v405
    %v2219 = vunpack.c.l.b16 %v406
    %v2220 = vunpack.c.h.b16 %v406
    %v2221 = vunpack.c.l.b16 %v407
    %v2222 = vunpack.c.h.b16 %v407
    %v2223 = vunpack.c.l.b16 %v408
    %v2224 = vunpack.c.h.b16 %v408
    %v2225 = vunpack.c.l.b16 %v409
    %v2226 = vunpack.c.h.b16 %v409
    %v2227 = vunpack.c.l.b16 %v410
    %v2228 = vunpack.c.h.b16 %v410
    %v2229 = vunpack.c.l.b16 %v411
    %v2230 = vunpack.c.h.b16 %v411
    %v2231 = vunpack.c.l.b16 %v412
    %v2232 = vunpack.c.h.b16 %v412
    %v2233 = vunpack.c.l.b16 %v413
    %v2234 = vunpack.c.h.b16 %v413
    %v2235 = vunpack.c.l.b16 %v414
    %v2236 = vunpack.c.h.b16 %v414
    %v2237 = vunpack.c.l.b16 %v415
    %v2238 = vunpack.c.h.b16 %v415
    %v2239 = vunpack.c.l.b16 %v416
    %v2240 = vunpack.c.h.b16 %v416
    %v2241 = vunpack.c.l.b16 %v417
    %v2242 = vunpack.c.h.b16 %v417
    %v2243 = vunpack.c.l.b16 %v418
    %v2244 = vunpack.c.h.b16 %v418
    %v2245 = vunpack.c.l.b16 %v419
    %v2246 = vunpack.c.h.b16 %v419
    %v2247 = vunpack.c.l.b16 %v420
    %v2248 = vunpack.c.h.b16 %v420
    %v2249 = vunpack.c.l.b16 %v421
    %v2250 = vunpack.c.h.b16 %v421
    %v2251 = vunpack.c.l.b16 %v422
    %v2252 = vunpack.c.h.b16 %v422
    %v2253 = vunpack.c.l.b16 %v423
    %v2254 = vunpack.c.h.b16 %v423
    %v2255 = vunpack.c.l.b16 %v424
    %v2256 = vunpack.c.h.b16 %v424
    %v2257 = vunpack.c.l.b16 %v425
    %v2258 = vunpack.c.h.b16 %v425
    %v2259 = vunpack.c.l.b16 %v426
    %v2260 = vunpack.c.h.b16 %v426
    %v2261 = vunpack.c.l.b16 %v427
    %v2262 = vunpack.c.h.b16 %v427
    %v2263 = vunpack.c.l.b16 %v428
    %v2264 = vunpack.c.h.b16 %v428
    %v2265 = vunpack.c.l.b16 %v429
    %v2266 = vunpack.c.h.b16 %v429
    %v2267 = vunpack.c.l.b16 %v430
    %v2268 = vunpack.c.h.b16 %v430
    %v2269 = vunpack.c.l.b16 %v431
    %v2270 = vunpack.c.h.b16 %v431
    %v2271 = vunpack.c.l.b16 %v432
    %v2272 = vunpack.c.h.b16 %v432
    %v2273 = vunpack.c.l.b16 %v433
    %v2274 = vunpack.c.h.b16 %v433
    %v2275 = vunpack.c.l.b16 %v434
    %v2276 = vunpack.c.h.b16 %v434
    %v2277 = vunpack.c.l.b16 %v435
    %v2278 = vunpack.c.h.b16 %v435
    %v2279 = vunpack.c.l.b16 %v436
    %v2280 = vunpack.c.h.b16 %v436
    %v2281 = vunpack.c.l.b16 %v437
    %v2282 = vunpack.c.h.b16 %v437
    %v2283 = vunpack.c.l.b16 %v438
    %v2284 = vunpack.c.h.b16 %v438
    %v2285 = vunpack.c.l.b16 %v439
    %v2286 = vunpack.c.h.b16 %v439
    %v2287 = vunpack.c.l.b16 %v440
    %v2288 = vunpack.c.h.b16 %v440
    %v2289 = vunpack.c.l.b16 %v441
    %v2290 = vunpack.c.h.b16 %v441
    %v2291 = vunpack.c.l.b16 %v442
    %v2292 = vunpack.c.h.b16 %v442
    %v2293 = vunpack.c.l.b16 %v443
    %v2294 = vunpack.c.h.b16 %v443
    %v2295 = vunpack.c.l.b16 %v444
    %v2296 = vunpack.c.h.b16 %v444
    %v2297 = vunpack.c.l.b16 %v445
    %v2298 = vunpack.c.h.b16 %v445
    %v2299 = vunpack.c.l.b16 %v446
    %v2300 = vunpack.c.h.b16 %v446
    %v2301 = vunpack.c.l.b16 %v447
    %v2302 = vunpack.c.h.b16 %v447
    %v2303 = vunpack.c.l.b16 %v448
    %v2304 = vunpack.c.h.b16 %v448
    %v2305 = vunpack.c.l.b16 %v449
    %v2306 = vunpack.c.h.b16 %v449
    %v2307 = vunpack.c.l.b16 %v450
    %v2308 = vunpack.c.h.b16 %v450
    %v2309 = vunpack.c.l.b16 %v451
    %v2310 = vunpack.c.h.b16 %v451
    %v2311 = vunpack.c.l.b16 %v452
    %v2312 = vunpack.c.h.b16 %v452
    %v2313 = vunpack.c.l.b16 %v453
    %v2314 = vunpack.c.h.b16 %v453
    %v2315 = vunpack.c.l.b16 %v454
    %v2316 = vunpack.c.h.b16 %v454
    %v2317 = vunpack.c.l.b16 %v455
    %v2318 = vunpack.c.h.b16 %v455
    %v2319 = vunpack.c.l.b16 %v456
    %v2320 = vunpack.c.h.b16 %v456
    %v2321 = vunpack.c.l.b16 %v457
    %v2322 = vunpack.c.h.b16 %v457
    %v2323 = vunpack.c.l.b16 %v458
    %v2324 = vunpack.c.h.b16 %v458
    %v2325 = vunpack.c.l.b16 %v459
    %v2326 = vunpack.c.h.b16 %v459
    %v2327 = vunpack.c.l.b16 %v460
    %v2328 = vunpack.c.h.b16 %v460
    %v2329 = vunpack.c.l.b16 %v461
    %v2330 = vunpack.c.h.b16 %v461
    %v2331 = vunpack.c.l.b16 %v462
    %v2332 = vunpack.c.h.b16 %v462
    %v2333 = vunpack.c.l.b16 %v463
    %v2334 = vunpack.c.h.b16 %v463
    %v2335 = vunpack.c.l.b16 %v464
    %v2336 = vunpack.c.h.b16 %v464
    %v2337 = vunpack.c.l.b16 %v465
    %v2338 = vunpack.c.h.b16 %v465
    %v2339 = vunpack.c.l.b16 %v466
    %v2340 = vunpack.c.h.b16 %v466
    %v2341 = vunpack.c.l.b16 %v467
    %v2342 = vunpack.c.h.b16 %v467
    %v2343 = vunpack.c.l.b16 %v468
    %v2344 = vunpack.c.h.b16 %v468
    %v2345 = vunpack.c.l.b16 %v469
    %v2346 = vunpack.c.h.b16 %v469
    %v2347 = vunpack.c.l.b16 %v470
    %v2348 = vunpack.c.h.b16 %v470
    %v2349 = vunpack.c.l.b16 %v471
    %v2350 = vunpack.c.h.b16 %v471
    %v2351 = vunpack.c.l.b16 %v472
    %v2352 = vunpack.c.h.b16 %v472
    %v2353 = vunpack.c.l.b16 %v473
    %v2354 = vunpack.c.h.b16 %v473
    %v2355 = vunpack.c.l.b16 %v474
    %v2356 = vunpack.c.h.b16 %v474
    %v2357 = vunpack.c.l.b16 %v475
    %v2358 = vunpack.c.h.b16 %v475
    %v2359 = vunpack.c.l.b16 %v476
    %v2360 = vunpack.c.h.b16 %v476
    %v2361 = vunpack.c.l.b16 %v477
    %v2362 = vunpack.c.h.b16 %v477
    %v2363 = vunpack.c.l.b16 %v478
    %v2364 = vunpack.c.h.b16 %v478
    %v2365 = vunpack.c.l.b16 %v479
    %v2366 = vunpack.c.h.b16 %v479
    %v2367 = vunpack.c.l.b16 %v480
    %v2368 = vunpack.c.h.b16 %v480
    %v2369 = vunpack.c.l.b16 %v481
    %v2370 = vunpack.c.h.b16 %v481
    %v2371 = vunpack.c.l.b16 %v482
    %v2372 = vunpack.c.h.b16 %v482
    %v2373 = vunpack.c.l.b16 %v483
    %v2374 = vunpack.c.h.b16 %v483
    %v2375 = vunpack.c.l.b16 %v484
    %v2376 = vunpack.c.h.b16 %v484
    %v2377 = vunpack.c.l.b16 %v485
    %v2378 = vunpack.c.h.b16 %v485
    %v2379 = vunpack.c.l.b16 %v486
    %v2380 = vunpack.c.h.b16 %v486
    %v2381 = vunpack.c.l.b16 %v487
    %v2382 = vunpack.c.h.b16 %v487
    %v2383 = vunpack.c.l.b16 %v488
    %v2384 = vunpack.c.h.b16 %v488
    %v2385 = vunpack.c.l.b16 %v489
    %v2386 = vunpack.c.h.b16 %v489
    %v2387 = vunpack.c.l.b16 %v490
    %v2388 = vunpack.c.h.b16 %v490
    %v2389 = vunpack.c.l.b16 %v491
    %v2390 = vunpack.c.h.b16 %v491
    %v2391 = vunpack.c.l.b16 %v492
    %v2392 = vunpack.c.h.b16 %v492
    %v2393 = vunpack.c.l.b16 %v493
    %v2394 = vunpack.c.h.b16 %v493
    %v2395 = vunpack.c.l.b16 %v494
    %v2396 = vunpack.c.h.b16 %v494
    %v2397 = vunpack.c.l.b16 %v495
    %v2398 = vunpack.c.h.b16 %v495
    %v2399 = vunpack.c.l.b16 %v496
    %v2400 = vunpack.c.h.b16 %v496
    %v2401 = vunpack.c.l.b16 %v497
    %v2402 = vunpack.c.h.b16 %v497
    %v2403 = vunpack.c.l.b16 %v498
    %v2404 = vunpack.c.h.b16 %v498
    %v2405 = vunpack.c.l.b16 %v499
    %v2406 = vunpack.c.h.b16 %v499
    %v2407 = vunpack.c.l.b16 %v500
    %v2408 = vunpack.c.h.b16 %v500
    %v2409 = vunpack.c.l.b16 %v501
    %v2410 = vunpack.c.h.b16 %v501
    %v2411 = vunpack.c.l.b16 %v502
    %v2412 = vunpack.c.h.b16 %v502
    %v2413 = vunpack.c.l.b16 %v503
    %v2414 = vunpack.c.h.b16 %v503
    %v2415 = vunpack.c.l.b16 %v504
    %v2416 = vunpack.c.h.b16 %v504
    %v2417 = vunpack.c.l.b16 %v505
    %v2418 = vunpack.c.h.b16 %v505
    %v2419 = vunpack.c.l.b16 %v506
    %v2420 = vunpack.c.h.b16 %v506
    %v2421 = vunpack.c.l.b16 %v507
    %v2422 = vunpack.c.h.b16 %v507
    %v2423 = vunpack.c.l.b16 %v508
    %v2424 = vunpack.c.h.b16 %v508
    %v2425 = vunpack.c.l.b16 %v509
    %v2426 = vunpack.c.h.b16 %v509
    %v2427 = vunpack.c.l.b16 %v510
    %v2428 = vunpack.c.h.b16 %v510
    %v2429 = vunpack.c.l.b16 %v511
    %v2430 = vunpack.c.h.b16 %v511
    %v2431 = vunpack.c.l.b16 %v512
    %v2432 = vunpack.c.h.b16 %v512
    %v2433 = vunpack.c.l.b16 %v513
    %v2434 = vunpack.c.h.b16 %v513
    %v2435 = vunpack.c.l.b16 %v514
    %v2436 = vunpack.c.h.b16 %v514
    %v2437 = vunpack.c.l.b16 %v515
    %v2438 = vunpack.c.h.b16 %v515
    %v2439 = vunpack.c.l.b16 %v516
    %v2440 = vunpack.c.h.b16 %v516
    %v2441 = vunpack.c.l.b16 %v517
    %v2442 = vunpack.c.h.b16 %v517
    %v2443 = vunpack.c.l.b16 %v518
    %v2444 = vunpack.c.h.b16 %v518
    %v2445 = vunpack.c.l.b16 %v519
    %v2446 = vunpack.c.h.b16 %v519
    %v2447 = vunpack.c.l.b16 %v520
    %v2448 = vunpack.c.h.b16 %v520
    %v2449 = vunpack.c.l.b16 %v521
    %v2450 = vunpack.c.h.b16 %v521
    %v2451 = vunpack.c.l.b16 %v522
    %v2452 = vunpack.c.h.b16 %v522
    %v2453 = vunpack.c.l.b16 %v523
    %v2454 = vunpack.c.h.b16 %v523
    %v2455 = vunpack.c.l.b16 %v524
    %v2456 = vunpack.c.h.b16 %v524
    %v2457 = vunpack.c.l.b16 %v525
    %v2458 = vunpack.c.h.b16 %v525
    %v2459 = vunpack.c.l.b16 %v526
    %v2460 = vunpack.c.h.b16 %v526
    %v2461 = vunpack.c.l.b16 %v527
    %v2462 = vunpack.c.h.b16 %v527
    %v2463 = vunpack.c.l.b16 %v528
    %v2464 = vunpack.c.h.b16 %v528
    %v2465 = vunpack.c.l.b16 %v529
    %v2466 = vunpack.c.h.b16 %v529
    %v2467 = vunpack.c.l.b16 %v530
    %v2468 = vunpack.c.h.b16 %v530
    %v2469 = vunpack.c.l.b16 %v531
    %v2470 = vunpack.c.h.b16 %v531
    %v2471 = vunpack.c.l.b16 %v532
    %v2472 = vunpack.c.h.b16 %v532
    %v2473 = vunpack.c.l.b16 %v533
    %v2474 = vunpack.c.h.b16 %v533
    %v2475 = vunpack.c.l.b16 %v534
    %v2476 = vunpack.c.h.b16 %v534
    %v2477 = vunpack.c.l.b16 %v535
    %v2478 = vunpack.c.h.b16 %v535
    %v2479 = vunpack.c.l.b16 %v536
    %v2480 = vunpack.c.h.b16 %v536
    %v2481 = vunpack.c.l.b16 %v537
    %v2482 = vunpack.c.h.b16 %v537
    %v2483 = vunpack.c.l.b16 %v538
    %v2484 = vunpack.c.h.b16 %v538
    %v2485 = vunpack.c.l.b16 %v539
    %v2486 = vunpack.c.h.b16 %v539
    %v2487 = vunpack.c.l.b16 %v540
    %v2488 = vunpack.c.h.b16 %v540
    %v2489 = vunpack.c.l.b16 %v541
    %v2490 = vunpack.c.h.b16 %v541
    %v2491 = vunpack.c.l.b16 %v542
    %v2492 = vunpack.c.h.b16 %v542
    %v2493 = vunpack.c.l.b16 %v543
    %v2494 = vunpack.c.h.b16 %v543
    %v2495 = vunpack.c.l.b16 %v544
    %v2496 = vunpack.c.h.b16 %v544
    %v2497 = vunpack.c.l.b16 %v545
    %v2498 = vunpack.c.h.b16 %v545
    %v2499 = vunpack.c.l.b16 %v546
    %v2500 = vunpack.c.h.b16 %v546
    %v2501 = vunpack.c.l.b16 %v547
    %v2502 = vunpack.c.h.b16 %v547
    %v2503 = vunpack.c.l.b16 %v548
    %v2504 = vunpack.c.h.b16 %v548
    %v2505 = vunpack.c.l.b16 %v549
    %v2506 = vunpack.c.h.b16 %v549
    %v2507 = vunpack.c.l.b16 %v550
    %v2508 = vunpack.c.h.b16 %v550
    %v2509 = vunpack.c.l.b16 %v551
    %v2510 = vunpack.c.h.b16 %v551
    %v2511 = vunpack.c.l.b16 %v552
    %v2512 = vunpack.c.h.b16 %v552
    %v2513 = vunpack.c.l.b16 %v553
    %v2514 = vunpack.c.h.b16 %v553
    %v2515 = vunpack.c.l.b16 %v554
    %v2516 = vunpack.c.h.b16 %v554
    %v2517 = vunpack.c.l.b16 %v555
    %v2518 = vunpack.c.h.b16 %v555
    %v2519 = vunpack.c.l.b16 %v556
    %v2520 = vunpack.c.h.b16 %v556
    %v2521 = vunpack.c.l.b16 %v557
    %v2522 = vunpack.c.h.b16 %v557
    %v2523 = vunpack.c.l.b16 %v558
    %v2524 = vunpack.c.h.b16 %v558
    %v2525 = vunpack.c.l.b16 %v559
    %v2526 = vunpack.c.h.b16 %v559
    %v2527 = vunpack.c.l.b16 %v560
    %v2528 = vunpack.c.h.b16 %v560
    %v2529 = vunpack.c.l.b16 %v561
    %v2530 = vunpack.c.h.b16 %v561
    %v2531 = vunpack.c.l.b16 %v562
    %v2532 = vunpack.c.h.b16 %v562
    %v2533 = vunpack.c.l.b16 %v563
    %v2534 = vunpack.c.h.b16 %v563
    %v2535 = vunpack.c.l.b16 %v564
    %v2536 = vunpack.c.h.b16 %v564
    %v2537 = vunpack.c.l.b16 %v565
    %v2538 = vunpack.c.h.b16 %v565
    %v2539 = vunpack.c.l.b16 %v566
    %v2540 = vunpack.c.h.b16 %v566
    %v2541 = vunpack.c.l.b16 %v567
    %v2542 = vunpack.c.h.b16 %v567
    %v2543 = vunpack.c.l.b16 %v568
    %v2544 = vunpack.c.h.b16 %v568
    %v2545 = vunpack.c.l.b16 %v569
    %v2546 = vunpack.c.h.b16 %v569
    %v2547 = vunpack.c.l.b16 %v570
    %v2548 = vunpack.c.h.b16 %v570
    %v2549 = vunpack.c.l.b16 %v571
    %v2550 = vunpack.c.h.b16 %v571
    %v2551 = vunpack.c.l.b16 %v572
    %v2552 = vunpack.c.h.b16 %v572
    %v2553 = vunpack.c.l.b16 %v573
    %v2554 = vunpack.c.h.b16 %v573
    %v2555 = vunpack.c.l.b16 %v574
    %v2556 = vunpack.c.h.b16 %v574
    %v2557 = vunpack.c.l.b16 %v575
    %v2558 = vunpack.c.h.b16 %v575
    %v2559 = vunpack.c.l.b16 %v576
    %v2560 = vunpack.c.h.b16 %v576
    %v2561 = vunpack.c.l.b16 %v577
    %v2562 = vunpack.c.h.b16 %v577
    %v2563 = vunpack.c.l.b16 %v578
    %v2564 = vunpack.c.h.b16 %v578
    %v2565 = vunpack.c.l.b16 %v579
    %v2566 = vunpack.c.h.b16 %v579
    %v2567 = vunpack.c.l.b16 %v580
    %v2568 = vunpack.c.h.b16 %v580
    %v2569 = vunpack.c.l.b16 %v581
    %v2570 = vunpack.c.h.b16 %v581
    %v2571 = vunpack.c.l.b16 %v582
    %v2572 = vunpack.c.h.b16 %v582
    %v2573 = vunpack.c.l.b16 %v583
    %v2574 = vunpack.c.h.b16 %v583
    %v2575 = vunpack.c.l.b16 %v584
    %v2576 = vunpack.c.h.b16 %v584
    %v2577 = vunpack.c.l.b16 %v585
    %v2578 = vunpack.c.h.b16 %v585
    %v2579 = vunpack.c.l.b16 %v586
    %v2580 = vunpack.c.h.b16 %v586
    %v2581 = vunpack.c.l.b16 %v587
    %v2582 = vunpack.c.h.b16 %v587
    %v2583 = vunpack.c.l.b16 %v588
    %v2584 = vunpack.c.h.b16 %v588
    %v2585 = vunpack.c.l.b16 %v589
    %v2586 = vunpack.c.h.b16 %v589
    %v2587 = vunpack.c.l.b16 %v590
    %v2588 = vunpack.c.h.b16 %v590
    %v2589 = vunpack.c.l.b16 %v591
    %v2590 = vunpack.c.h.b16 %v591
    %v2591 = vunpack.c.l.b16 %v592
    %v2592 = vunpack.c.h.b16 %v592
    %v2593 = vunpack.c.l.b16 %v593
    %v2594 = vunpack.c.h.b16 %v593
    %v2595 = vunpack.c.l.b16 %v594
    %v2596 = vunpack.c.h.b16 %v594
    %v2597 = vunpack.c.l.b16 %v595
    %v2598 = vunpack.c.h.b16 %v595
    %v2599 = vunpack.c.l.b16 %v596
    %v2600 = vunpack.c.h.b16 %v596
    %v2601 = vunpack.c.l.b16 %v597
    %v2602 = vunpack.c.h.b16 %v597
    %v2603 = vunpack.c.l.b16 %v598
    %v2604 = vunpack.c.h.b16 %v598
    %v2605 = vunpack.c.l.b16 %v599
    %v2606 = vunpack.c.h.b16 %v599
    %v2607 = vunpack.c.l.b16 %v600
    %v2608 = vunpack.c.h.b16 %v600
    %v2609 = vunpack.c.l.b16 %v601
    %v2610 = vunpack.c.h.b16 %v601
    %v2611 = vunpack.c.l.b16 %v602
    %v2612 = vunpack.c.h.b16 %v602
    %v2613 = vunpack.c.l.b16 %v603
    %v2614 = vunpack.c.h.b16 %v603
    %v2615 = vunpack.c.l.b16 %v604
    %v2616 = vunpack.c.h.b16 %v604
    %v2617 = vunpack.c.l.b16 %v605
    %v2618 = vunpack.c.h.b16 %v605
    %v2619 = vunpack.c.l.b16 %v606
    %v2620 = vunpack.c.h.b16 %v606
    %v2621 = vunpack.c.l.b16 %v607
    %v2622 = vunpack.c.h.b16 %v607
    %v2623 = vunpack.c.l.b16 %v608
    %v2624 = vunpack.c.h.b16 %v608
    %v2625 = vunpack.c.l.b16 %v609
    %v2626 = vunpack.c.h.b16 %v609
    %v2627 = vunpack.c.l.b16 %v610
    %v2628 = vunpack.c.h.b16 %v610
    %v2629 = vunpack.c.l.b16 %v611
    %v2630 = vunpack.c.h.b16 %v611
    %v2631 = vunpack.c.l.b16 %v612
    %v2632 = vunpack.c.h.b16 %v612
    %v2633 = vunpack.c.l.b16 %v613
    %v2634 = vunpack.c.h.b16 %v613
    %v2635 = vunpack.c.l.b16 %v614
    %v2636 = vunpack.c.h.b16 %v614
    %v2637 = vunpack.c.l.b16 %v615
    %v2638 = vunpack.c.h.b16 %v615
    %v2639 = vunpack.c.l.b16 %v616
    %v2640 = vunpack.c.h.b16 %v616
    %v2641 = vunpack.c.l.b16 %v617
    %v2642 = vunpack.c.h.b16 %v617
    %v2643 = vunpack.c.l.b16 %v618
    %v2644 = vunpack.c.h.b16 %v618
    %v2645 = vunpack.c.l.b16 %v619
    %v2646 = vunpack.c.h.b16 %v619
    %v2647 = vunpack.c.l.b16 %v620
    %v2648 = vunpack.c.h.b16 %v620
    %v2649 = vunpack.c.l.b16 %v621
    %v2650 = vunpack.c.h.b16 %v621
    %v2651 = vunpack.c.l.b16 %v622
    %v2652 = vunpack.c.h.b16 %v622
    %v2653 = vunpack.c.l.b16 %v623
    %v2654 = vunpack.c.h.b16 %v623
    %v2655 = vunpack.c.l.b16 %v624
    %v2656 = vunpack.c.h.b16 %v624
    %v2657 = vunpack.c.l.b16 %v625
    %v2658 = vunpack.c.h.b16 %v625
    %v2659 = vunpack.c.l.b16 %v626
    %v2660 = vunpack.c.h.b16 %v626
    %v2661 = vunpack.c.l.b16 %v627
    %v2662 = vunpack.c.h.b16 %v627
    %v2663 = vunpack.c.l.b16 %v628
    %v2664 = vunpack.c.h.b16 %v628
    %v2665 = vunpack.c.l.b16 %v629
    %v2666 = vunpack.c.h.b16 %v629
    %v2667 = vunpack.c.l.b16 %v630
    %v2668 = vunpack.c.h.b16 %v630
    %v2669 = vunpack.c.l.b16 %v631
    %v2670 = vunpack.c.h.b16 %v631
    %v2671 = vunpack.c.l.b16 %v632
    %v2672 = vunpack.c.h.b16 %v632
    %v2673 = vunpack.c.l.b16 %v633
    %v2674 = vunpack.c.h.b16 %v633
    %v2675 = vunpack.c.l.b16 %v634
    %v2676 = vunpack.c.h.b16 %v634
    %v2677 = vunpack.c.l.b16 %v635
    %v2678 = vunpack.c.h.b16 %v635
    %v2679 = vunpack.c.l.b16 %v636
    %v2680 = vunpack.c.h.b16 %v636
    %v2681 = vunpack.c.l.b16 %v637
    %v2682 = vunpack.c.h.b16 %v637
    %v2683 = vunpack.c.l.b16 %v638
    %v2684 = vunpack.c.h.b16 %v638
    %v2685 = vunpack.c.l.b16 %v639
    %v2686 = vunpack.c.h.b16 %v639
    %v2687 = vunpack.c.l.b16 %v640
    %v2688 = vunpack.c.h.b16 %v640
    %v2689 = vunpack.c.l.b16 %v641
    %v2690 = vunpack.c.h.b16 %v641
    %v2691 = vunpack.c.l.b16 %v642
    %v2692 = vunpack.c.h.b16 %v642
    %v2693 = vunpack.c.l.b16 %v643
    %v2694 = vunpack.c.h.b16 %v643
    %v2695 = vunpack.c.l.b16 %v644
    %v2696 = vunpack.c.h.b16 %v644
    %v2697 = vunpack.c.l.b16 %v645
    %v2698 = vunpack.c.h.b16 %v645
    %v2699 = vunpack.c.l.b16 %v646
    %v2700 = vunpack.c.h.b16 %v646
    %v2701 = vunpack.c.l.b16 %v647
    %v2702 = vunpack.c.h.b16 %v647
    %v2703 = vunpack.c.l.b16 %v648
    %v2704 = vunpack.c.h.b16 %v648
    %v2705 = vunpack.c.l.b16 %v649
    %v2706 = vunpack.c.h.b16 %v649
    %v2707 = vunpack.c.l.b16 %v650
    %v2708 = vunpack.c.h.b16 %v650
    %v2709 = vunpack.c.l.b16 %v651
    %v2710 = vunpack.c.h.b16 %v651
    %v2711 = vunpack.c.l.b16 %v652
    %v2712 = vunpack.c.h.b16 %v652
    %v2713 = vunpack.c.l.b16 %v653
    %v2714 = vunpack.c.h.b16 %v653
    %v2715 = vunpack.c.l.b16 %v654
    %v2716 = vunpack.c.h.b16 %v654
    %v2717 = vunpack.c.l.b16 %v655
    %v2718 = vunpack.c.h.b16 %v655
    %v2719 = vunpack.c.l.b16 %v656
    %v2720 = vunpack.c.h.b16 %v656
    %v2721 = vunpack.c.l.b16 %v657
    %v2722 = vunpack.c.h.b16 %v657
    %v2723 = vunpack.c.l.b16 %v658
    %v2724 = vunpack.c.h.b16 %v658
    %v2725 = vunpack.c.l.b16 %v659
    %v2726 = vunpack.c.h.b16 %v659
    %v2727 = vunpack.c.l.b16 %v660
    %v2728 = vunpack.c.h.b16 %v660
    %v2729 = vunpack.c.l.b16 %v661
    %v2730 = vunpack.c.h.b16 %v661
    %v2731 = vunpack.c.l.b16 %v662
    %v2732 = vunpack.c.h.b16 %v662
    %v2733 = vunpack.c.l.b16 %v663
    %v2734 = vunpack.c.h.b16 %v663
    %v2735 = vunpack.c.l.b16 %v664
    %v2736 = vunpack.c.h.b16 %v664
    %v2737 = vunpack.c.l.b16 %v665
    %v2738 = vunpack.c.h.b16 %v665
    %v2739 = vunpack.c.l.b16 %v666
    %v2740 = vunpack.c.h.b16 %v666
    %v2741 = vunpack.c.l.b16 %v667
    %v2742 = vunpack.c.h.b16 %v667
    %v2743 = vunpack.c.l.b16 %v668
    %v2744 = vunpack.c.h.b16 %v668
    %v2745 = vunpack.c.l.b16 %v669
    %v2746 = vunpack.c.h.b16 %v669
    %v2747 = vunpack.c.l.b16 %v670
    %v2748 = vunpack.c.h.b16 %v670
    %v2749 = vunpack.c.l.b16 %v671
    %v2750 = vunpack.c.h.b16 %v671
    %v2751 = vunpack.c.l.b16 %v672
    %v2752 = vunpack.c.h.b16 %v672
    %v2753 = vunpack.c.l.b16 %v673
    %v2754 = vunpack.c.h.b16 %v673
    %v2755 = vunpack.c.l.b16 %v674
    %v2756 = vunpack.c.h.b16 %v674
    %v2757 = vunpack.c.l.b16 %v675
    %v2758 = vunpack.c.h.b16 %v675
    %v2759 = vunpack.c.l.b16 %v676
    %v2760 = vunpack.c.h.b16 %v676
    %v2761 = vunpack.c.l.b16 %v677
    %v2762 = vunpack.c.h.b16 %v677
    %v2763 = vunpack.c.l.b16 %v678
    %v2764 = vunpack.c.h.b16 %v678
    %v2765 = vunpack.c.l.b16 %v679
    %v2766 = vunpack.c.h.b16 %v679
    %v2767 = vunpack.c.l.b16 %v680
    %v2768 = vunpack.c.h.b16 %v680
    %v2769 = vunpack.c.l.b16 %v681
    %v2770 = vunpack.c.h.b16 %v681
    %v2771 = vunpack.c.l.b16 %v682
    %v2772 = vunpack.c.h.b16 %v682
    %v2773 = vunpack.c.l.b16 %v683
    %v2774 = vunpack.c.h.b16 %v683
    %v2775 = vunpack.c.l.b16 %v684
    %v2776 = vunpack.c.h.b16 %v684
    %v2777 = vunpack.c.l.b16 %v685
    %v2778 = vunpack.c.h.b16 %v685
    %v2779 = vunpack.c.l.b16 %v686
    %v2780 = vunpack.c.h.b16 %v686
    %v2781 = vunpack.c.l.b16 %v687
    %v2782 = vunpack.c.h.b16 %v687
    %v2783 = vunpack.c.l.b16 %v688
    %v2784 = vunpack.c.h.b16 %v688
    %v2785 = vunpack.c.l.b16 %v689
    %v2786 = vunpack.c.h.b16 %v689
    %v2787 = vunpack.c.l.b16 %v690
    %v2788 = vunpack.c.h.b16 %v690
    %v2789 = vunpack.c.l.b16 %v691
    %v2790 = vunpack.c.h.b16 %v691
    %v2791 = vunpack.c.l.b16 %v692
    %v2792 = vunpack.c.h.b16 %v692
    %v2793 = vunpack.c.l.b16 %v693
    %v2794 = vunpack.c.h.b16 %v693
    %v2795 = vunpack.c.l.b16 %v694
    %v2796 = vunpack.c.h.b16 %v694
    %v2797 = vunpack.c.l.b16 %v695
    %v2798 = vunpack.c.h.b16 %v695
    %v2799 = vunpack.c.l.b16 %v696
    %v2800 = vunpack.c.h.b16 %v696
    %v2801 = vunpack.c.l.b16 %v697
    %v2802 = vunpack.c.h.b16 %v697
    %v2803 = vunpack.c.l.b16 %v698
    %v2804 = vunpack.c.h.b16 %v698
    %v2805 = vunpack.c.l.b16 %v699
    %v2806 = vunpack.c.h.b16 %v699
    %v2807 = vunpack.c.l.b16 %v700
    %v2808 = vunpack.c.h.b16 %v700
    %v2809 = vunpack.c.l.b16 %v701
    %v2810 = vunpack.c.h.b16 %v701
    %v2811 = vunpack.c.l.b16 %v702
    %v2812 = vunpack.c.h.b16 %v702
    %v2813 = vunpack.c.l.b16 %v703
    %v2814 = vunpack.c.h.b16 %v703
    %v2815 = vunpack.c.l.b16 %v704
    %v2816 = vunpack.c.h.b16 %v704
    %v2817 = vunpack.c.l.b16 %v705
    %v2818 = vunpack.c.h.b16 %v705
    %v2819 = vunpack.c.l.b16 %v706
    %v2820 = vunpack.c.h.b16 %v706
    %v2821 = vunpack.c.l.b16 %v707
    %v2822 = vunpack.c.h.b16 %v707
    %v2823 = vunpack.c.l.b16 %v708
    %v2824 = vunpack.c.h.b16 %v708
    %v2825 = vunpack.c.l.b16 %v709
    %v2826 = vunpack.c.h.b16 %v709
    %v2827 = vunpack.c.l.b16 %v710
    %v2828 = vunpack.c.h.b16 %v710
    %v2829 = vunpack.c.l.b16 %v711
    %v2830 = vunpack.c.h.b16 %v711
    %v2831 = vunpack.c.l.b16 %v712
    %v2832 = vunpack.c.h.b16 %v712
    %v2833 = vunpack.c.l.b16 %v713
    %v2834 = vunpack.c.h.b16 %v713
    %v2835 = vunpack.c.l.b16 %v714
    %v2836 = vunpack.c.h.b16 %v714
    %v2837 = vunpack.c.l.b16 %v715
    %v2838 = vunpack.c.h.b16 %v715
    %v2839 = vunpack.c.l.b16 %v716
    %v2840 = vunpack.c.h.b16 %v716
    %v2841 = vunpack.c.l.b16 %v717
    %v2842 = vunpack.c.h.b16 %v717
    %v2843 = vunpack.c.l.b16 %v718
    %v2844 = vunpack.c.h.b16 %v718
    %v2845 = vunpack.c.l.b16 %v719
    %v2846 = vunpack.c.h.b16 %v719
    %v2847 = vunpack.c.l.b16 %v720
    %v2848 = vunpack.c.h.b16 %v720
    %v2849 = vunpack.c.l.b16 %v721
    %v2850 = vunpack.c.h.b16 %v721
    %v2851 = vunpack.c.l.b16 %v722
    %v2852 = vunpack.c.h.b16 %v722
    %v2853 = vunpack.c.l.b16 %v723
    %v2854 = vunpack.c.h.b16 %v723
    %v2855 = vunpack.c.l.b16 %v724
    %v2856 = vunpack.c.h.b16 %v724
    %v2857 = vunpack.c.l.b16 %v725
    %v2858 = vunpack.c.h.b16 %v725
    %v2859 = vunpack.c.l.b16 %v726
    %v2860 = vunpack.c.h.b16 %v726
    %v2861 = vunpack.c.l.b16 %v727
    %v2862 = vunpack.c.h.b16 %v727
    %v2863 = vunpack.c.l.b16 %v728
    %v2864 = vunpack.c.h.b16 %v728
    %v2865 = vunpack.c.l.b16 %v729
    %v2866 = vunpack.c.h.b16 %v729
    %v2867 = vunpack.c.l.b16 %v730
    %v2868 = vunpack.c.h.b16 %v730
    %v2869 = vunpack.c.l.b16 %v731
    %v2870 = vunpack.c.h.b16 %v731
    %v2871 = vunpack.c.l.b16 %v732
    %v2872 = vunpack.c.h.b16 %v732
    %v2873 = vunpack.c.l.b16 %v733
    %v2874 = vunpack.c.h.b16 %v733
    %v2875 = vunpack.c.l.b16 %v734
    %v2876 = vunpack.c.h.b16 %v734
    %v2877 = vunpack.c.l.b16 %v735
    %v2878 = vunpack.c.h.b16 %v735
    %v2879 = vunpack.c.l.b16 %v736
    %v2880 = vunpack.c.h.b16 %v736
    %v2881 = vunpack.c.l.b16 %v737
    %v2882 = vunpack.c.h.b16 %v737
    %v2883 = vunpack.c.l.b16 %v738
    %v2884 = vunpack.c.h.b16 %v738
    %v2885 = vunpack.c.l.b16 %v739
    %v2886 = vunpack.c.h.b16 %v739
    %v2887 = vunpack.c.l.b16 %v740
    %v2888 = vunpack.c.h.b16 %v740
    %v2889 = vunpack.c.l.b16 %v741
    %v2890 = vunpack.c.h.b16 %v741
    %v2891 = vunpack.c.l.b16 %v742
    %v2892 = vunpack.c.h.b16 %v742
    %v2893 = vunpack.c.l.b16 %v743
    %v2894 = vunpack.c.h.b16 %v743
    %v2895 = vunpack.c.l.b16 %v744
    %v2896 = vunpack.c.h.b16 %v744
    %v2897 = vunpack.c.l.b16 %v745
    %v2898 = vunpack.c.h.b16 %v745
    %v2899 = vunpack.c.l.b16 %v746
    %v2900 = vunpack.c.h.b16 %v746
    %v2901 = vunpack.c.l.b16 %v747
    %v2902 = vunpack.c.h.b16 %v747
    %v2903 = vunpack.c.l.b16 %v748
    %v2904 = vunpack.c.h.b16 %v748
    %v2905 = vunpack.c.l.b16 %v749
    %v2906 = vunpack.c.h.b16 %v749
    %v2907 = vunpack.c.l.b16 %v750
    %v2908 = vunpack.c.h.b16 %v750
    %v2909 = vunpack.c.l.b16 %v751
    %v2910 = vunpack.c.h.b16 %v751
    %v2911 = vunpack.c.l.b16 %v752
    %v2912 = vunpack.c.h.b16 %v752
    %v2913 = vunpack.c.l.b16 %v753
    %v2914 = vunpack.c.h.b16 %v753
    %v2915 = vunpack.c.l.b16 %v754
    %v2916 = vunpack.c.h.b16 %v754
    %v2917 = vunpack.c.l.b16 %v755
    %v2918 = vunpack.c.h.b16 %v755
    %v2919 = vunpack.c.l.b16 %v756
    %v2920 = vunpack.c.h.b16 %v756
    %v2921 = vunpack.c.l.b16 %v757
    %v2922 = vunpack.c.h.b16 %v757
    %v2923 = vunpack.c.l.b16 %v758
    %v2924 = vunpack.c.h.b16 %v758
    %v2925 = vunpack.c.l.b16 %v759
    %v2926 = vunpack.c.h.b16 %v759
    %v2927 = vunpack.c.l.b16 %v760
    %v2928 = vunpack.c.h.b16 %v760
    %v2929 = vunpack.c.l.b16 %v761
    %v2930 = vunpack.c.h.b16 %v761
    %v2931 = vunpack.c.l.b16 %v762
    %v2932 = vunpack.c.h.b16 %v762
    %v2933 = vunpack.c.l.b16 %v763
    %v2934 = vunpack.c.h.b16 %v763
    %v2935 = vunpack.c.l.b16 %v764
    %v2936 = vunpack.c.h.b16 %v764
    %v2937 = vunpack.c.l.b16 %v765
    %v2938 = vunpack.c.h.b16 %v765
    %v2939 = vunpack.c.l.b16 %v766
    %v2940 = vunpack.c.h.b16 %v766
    %v2941 = vunpack.c.l.b16 %v767
    %v2942 = vunpack.c.h.b16 %v767
    %v2943 = vunpack.c.l.b16 %v768
    %v2944 = vunpack.c.h.b16 %v768
    %v2945 = vunpack.c.l.b16 %v769
    %v2946 = vunpack.c.h.b16 %v769
    %v2947 = vunpack.c.l.b16 %v770
    %v2948 = vunpack.c.h.b16 %v770
    %v2949 = vunpack.c.l.b16 %v771
    %v2950 = vunpack.c.h.b16 %v771
    %v2951 = vunpack.c.l.b16 %v772
    %v2952 = vunpack.c.h.b16 %v772
    %v2953 = vunpack.c.l.b16 %v773
    %v2954 = vunpack.c.h.b16 %v773
    %v2955 = vunpack.c.l.b16 %v774
    %v2956 = vunpack.c.h.b16 %v774
    %v2957 = vunpack.c.l.b16 %v775
    %v2958 = vunpack.c.h.b16 %v775
    %v2959 = vunpack.c.l.b16 %v776
    %v2960 = vunpack.c.h.b16 %v776
    %v2961 = vunpack.c.l.b16 %v777
    %v2962 = vunpack.c.h.b16 %v777
    %v2963 = vunpack.c.l.b16 %v778
    %v2964 = vunpack.c.h.b16 %v778
    %v2965 = vunpack.c.l.b16 %v779
    %v2966 = vunpack.c.h.b16 %v779
    %v2967 = vunpack.c.l.b16 %v780
    %v2968 = vunpack.c.h.b16 %v780
    %v2969 = vunpack.c.l.b16 %v781
    %v2970 = vunpack.c.h.b16 %v781
    %v2971 = vunpack.c.l.b16 %v782
    %v2972 = vunpack.c.h.b16 %v782
    %v2973 = vunpack.c.l.b16 %v783
    %v2974 = vunpack.c.h.b16 %v783
    %v2975 = vunpack.c.l.b16 %v784
    %v2976 = vunpack.c.h.b16 %v784
    %v2977 = vunpack.c.l.b16 %v785
    %v2978 = vunpack.c.h.b16 %v785
    %v2979 = vunpack.c.l.b16 %v786
    %v2980 = vunpack.c.h.b16 %v786
    %v2981 = vunpack.c.l.b16 %v787
    %v2982 = vunpack.c.h.b16 %v787
    %v2983 = vunpack.c.l.b16 %v788
    %v2984 = vunpack.c.h.b16 %v788
    %v2985 = vunpack.c.l.b16 %v789
    %v2986 = vunpack.c.h.b16 %v789
    %v2987 = vunpack.c.l.b16 %v790
    %v2988 = vunpack.c.h.b16 %v790
    %v2989 = vunpack.c.l.b16 %v791
    %v2990 = vunpack.c.h.b16 %v791
    %v2991 = vunpack.c.l.b16 %v792
    %v2992 = vunpack.c.h.b16 %v792
    %v2993 = vunpack.c.l.b16 %v793
    %v2994 = vunpack.c.h.b16 %v793
    %v2995 = vunpack.c.l.b16 %v794
    %v2996 = vunpack.c.h.b16 %v794
    %v2997 = vunpack.c.l.b16 %v795
    %v2998 = vunpack.c.h.b16 %v795
    %v2999 = vunpack.c.l.b16 %v796
    %v3000 = vunpack.c.h.b16 %v796
    %v3001 = vunpack.c.l.b16 %v797
    %v3002 = vunpack.c.h.b16 %v797
    %v3003 = vunpack.c.l.b16 %v798
    %v3004 = vunpack.c.h.b16 %v798
    %v3005 = vunpack.c.l.b16 %v799
    %v3006 = vunpack.c.h.b16 %v799
    %v3007 = vunpack.c.l.b16 %v800
    %v3008 = vunpack.c.h.b16 %v800
    %v3009 = vunpack.c.l.b16 %v801
    %v3010 = vunpack.c.h.b16 %v801
    %v3011 = vunpack.c.l.b16 %v802
    %v3012 = vunpack.c.h.b16 %v802
    %v3013 = vunpack.c.l.b16 %v803
    %v3014 = vunpack.c.h.b16 %v803
    %v3015 = vunpack.c.l.b16 %v804
    %v3016 = vunpack.c.h.b16 %v804
    %v3017 = vunpack.c.l.b16 %v805
    %v3018 = vunpack.c.h.b16 %v805
    %v3019 = vunpack.c.l.b16 %v806
    %v3020 = vunpack.c.h.b16 %v806
    %v3021 = vunpack.c.l.b16 %v807
    %v3022 = vunpack.c.h.b16 %v807
    %v3023 = vunpack.c.l.b16 %v808
    %v3024 = vunpack.c.h.b16 %v808
    %v3025 = vunpack.c.l.b16 %v809
    %v3026 = vunpack.c.h.b16 %v809
    %v3027 = vunpack.c.l.b16 %v810
    %v3028 = vunpack.c.h.b16 %v810
    %v3029 = vunpack.c.l.b16 %v811
    %v3030 = vunpack.c.h.b16 %v811
    %v3031 = vunpack.c.l.b16 %v812
    %v3032 = vunpack.c.h.b16 %v812
    %v3033 = vunpack.c.l.b16 %v813
    %v3034 = vunpack.c.h.b16 %v813
    %v3035 = vunpack.c.l.b16 %v814
    %v3036 = vunpack.c.h.b16 %v814
    %v3037 = vunpack.c.l.b16 %v815
    %v3038 = vunpack.c.h.b16 %v815
    %v3039 = vunpack.c.l.b16 %v816
    %v3040 = vunpack.c.h.b16 %v816
    %v3041 = vunpack.c.l.b16 %v817
    %v3042 = vunpack.c.h.b16 %v817
    %v3043 = vunpack.c.l.b16 %v818
    %v3044 = vunpack.c.h.b16 %v818
    %v3045 = vunpack.c.l.b16 %v819
    %v3046 = vunpack.c.h.b16 %v819
    %v3047 = vunpack.c.l.b16 %v820
    %v3048 = vunpack.c.h.b16 %v820
    %v3049 = vunpack.c.l.b16 %v821
    %v3050 = vunpack.c.h.b16 %v821
    %v3051 = vunpack.c.l.b16 %v822
    %v3052 = vunpack.c.h.b16 %v822
    %v3053 = vunpack.c.l.b16 %v823
    %v3054 = vunpack.c.h.b16 %v823
    %v3055 = vunpack.c.l.b16 %v824
    %v3056 = vunpack.c.h.b16 %v824
    %v3057 = vunpack.c.l.b16 %v825
    %v3058 = vunpack.c.h.b16 %v825
    %v3059 = vunpack.c.l.b16 %v826
    %v3060 = vunpack.c.h.b16 %v826
    %v3061 = vunpack.c.l.b16 %v827
    %v3062 = vunpack.c.h.b16 %v827
    %v3063 = vunpack.c.l.b16 %v828
    %v3064 = vunpack.c.h.b16 %v828
    %v3065 = vunpack.c.l.b16 %v829
    %v3066 = vunpack.c.h.b16 %v829
    %v3067 = vunpack.c.l.b16 %v830
    %v3068 = vunpack.c.h.b16 %v830
    %v3069 = vunpack.c.l.b16 %v831
    %v3070 = vunpack.c.h.b16 %v831
    %v3071 = vunpack.c.l.b16 %v832
    %v3072 = vunpack.c.h.b16 %v832
    %v3073 = vunpack.c.l.b16 %v833
    %v3074 = vunpack.c.h.b16 %v833
    %v3075 = vunpack.c.l.b16 %v834
    %v3076 = vunpack.c.h.b16 %v834
    %v3077 = vunpack.c.l.b16 %v835
    %v3078 = vunpack.c.h.b16 %v835
    %v3079 = vunpack.c.l.b16 %v836
    %v3080 = vunpack.c.h.b16 %v836
    %v3081 = vunpack.c.l.b16 %v837
    %v3082 = vunpack.c.h.b16 %v837
    %v3083 = vunpack.c.l.b16 %v838
    %v3084 = vunpack.c.h.b16 %v838
    %v3085 = vunpack.c.l.b16 %v839
    %v3086 = vunpack.c.h.b16 %v839
    %v3087 = vunpack.c.l.b16 %v840
    %v3088 = vunpack.c.h.b16 %v840
    %v3089 = vunpack.c.l.b16 %v841
    %v3090 = vunpack.c.h.b16 %v841
    %v3091 = vunpack.c.l.b16 %v842
    %v3092 = vunpack.c.h.b16 %v842
    %v3093 = vunpack.c.l.b16 %v843
    %v3094 = vunpack.c.h.b16 %v843
    %v3095 = vunpack.c.l.b16 %v844
    %v3096 = vunpack.c.h.b16 %v844
    %v3097 = vunpack.c.l.b16 %v845
    %v3098 = vunpack.c.h.b16 %v845
    %v3099 = vunpack.c.l.b16 %v846
    %v3100 = vunpack.c.h.b16 %v846
    %v3101 = vunpack.c.l.b16 %v847
    %v3102 = vunpack.c.h.b16 %v847
    %v3103 = vunpack.c.l.b16 %v848
    %v3104 = vunpack.c.h.b16 %v848
    %v3105 = vunpack.c.l.b16 %v849
    %v3106 = vunpack.c.h.b16 %v849
    %v3107 = vunpack.c.l.b16 %v850
    %v3108 = vunpack.c.h.b16 %v850
    %v3109 = vunpack.c.l.b16 %v851
    %v3110 = vunpack.c.h.b16 %v851
    %v3111 = vunpack.c.l.b16 %v852
    %v3112 = vunpack.c.h.b16 %v852
    %v3113 = vunpack.c.l.b16 %v853
    %v3114 = vunpack.c.h.b16 %v853
    %v3115 = vunpack.c.l.b16 %v854
    %v3116 = vunpack.c.h.b16 %v854
    %v3117 = vunpack.c.l.b16 %v855
    %v3118 = vunpack.c.h.b16 %v855
    %v3119 = vunpack.c.l.b16 %v856
    %v3120 = vunpack.c.h.b16 %v856
    %v3121 = vunpack.c.l.b16 %v857
    %v3122 = vunpack.c.h.b16 %v857
    %v3123 = vunpack.c.l.b16 %v858
    %v3124 = vunpack.c.h.b16 %v858
    %v3125 = vunpack.c.l.b16 %v859
    %v3126 = vunpack.c.h.b16 %v859
    %v3127 = vunpack.c.l.b16 %v860
    %v3128 = vunpack.c.h.b16 %v860
    %v3129 = vunpack.c.l.b16 %v861
    %v3130 = vunpack.c.h.b16 %v861
    %v3131 = vunpack.c.l.b16 %v862
    %v3132 = vunpack.c.h.b16 %v862
    %v3133 = vunpack.c.l.b16 %v863
    %v3134 = vunpack.c.h.b16 %v863
    %v3135 = vunpack.c.l.b16 %v864
    %v3136 = vunpack.c.h.b16 %v864
    %v3137 = vunpack.c.l.b16 %v865
    %v3138 = vunpack.c.h.b16 %v865
    %v3139 = vunpack.c.l.b16 %v866
    %v3140 = vunpack.c.h.b16 %v866
    %v3141 = vunpack.c.l.b16 %v867
    %v3142 = vunpack.c.h.b16 %v867
    %v3143 = vunpack.c.l.b16 %v868
    %v3144 = vunpack.c.h.b16 %v868
    %v3145 = vunpack.c.l.b16 %v869
    %v3146 = vunpack.c.h.b16 %v869
    %v3147 = vunpack.c.l.b16 %v870
    %v3148 = vunpack.c.h.b16 %v870
    %v3149 = vunpack.c.l.b16 %v871
    %v3150 = vunpack.c.h.b16 %v871
    %v3151 = vunpack.c.l.b16 %v872
    %v3152 = vunpack.c.h.b16 %v872
    %v3153 = vunpack.c.l.b16 %v873
    %v3154 = vunpack.c.h.b16 %v873
    %v3155 = vunpack.c.l.b16 %v874
    %v3156 = vunpack.c.h.b16 %v874
    %v3157 = vunpack.c.l.b16 %v875
    %v3158 = vunpack.c.h.b16 %v875
    %v3159 = vunpack.c.l.b16 %v876
    %v3160 = vunpack.c.h.b16 %v876
    %v3161 = vunpack.c.l.b16 %v877
    %v3162 = vunpack.c.h.b16 %v877
    %v3163 = vunpack.c.l.b16 %v878
    %v3164 = vunpack.c.h.b16 %v878
    %v3165 = vunpack.c.l.b16 %v879
    %v3166 = vunpack.c.h.b16 %v879
    %v3167 = vunpack.c.l.b16 %v880
    %v3168 = vunpack.c.h.b16 %v880
    %v3169 = vunpack.c.l.b16 %v881
    %v3170 = vunpack.c.h.b16 %v881
    %v3171 = vunpack.c.l.b16 %v882
    %v3172 = vunpack.c.h.b16 %v882
    %v3173 = vunpack.c.l.b16 %v883
    %v3174 = vunpack.c.h.b16 %v883
    %v3175 = vunpack.c.l.b16 %v884
    %v3176 = vunpack.c.h.b16 %v884
    %v3177 = vunpack.c.l.b16 %v885
    %v3178 = vunpack.c.h.b16 %v885
    %v3179 = vunpack.c.l.b16 %v886
    %v3180 = vunpack.c.h.b16 %v886
    %v3181 = vunpack.c.l.b16 %v887
    %v3182 = vunpack.c.h.b16 %v887
    %v3183 = vunpack.c.l.b16 %v888
    %v3184 = vunpack.c.h.b16 %v888
    %v3185 = vunpack.c.l.b16 %v889
    %v3186 = vunpack.c.h.b16 %v889
    %v3187 = vunpack.c.l.b16 %v890
    %v3188 = vunpack.c.h.b16 %v890
    %v3189 = vunpack.c.l.b16 %v891
    %v3190 = vunpack.c.h.b16 %v891
    %v3191 = vunpack.c.l.b16 %v892
    %v3192 = vunpack.c.h.b16 %v892
    %v3193 = vunpack.c.l.b16 %v893
    %v3194 = vunpack.c.h.b16 %v893
    %v3195 = vunpack.c.l.b16 %v894
    %v3196 = vunpack.c.h.b16 %v894
    %v3197 = vunpack.c.l.b16 %v895
    %v3198 = vunpack.c.h.b16 %v895
    %v3199 = vunpack.c.l.b16 %v896
    %v3200 = vunpack.c.h.b16 %v896
    %v3201 = vunpack.c.l.b16 %v897
    %v3202 = vunpack.c.h.b16 %v897
    %v3203 = vunpack.c.l.b16 %v898
    %v3204 = vunpack.c.h.b16 %v898
    %v3205 = vunpack.c.l.b16 %v899
    %v3206 = vunpack.c.h.b16 %v899
    %v3207 = vunpack.c.l.b16 %v900
    %v3208 = vunpack.c.h.b16 %v900
    %v3209 = vunpack.c.l.b16 %v901
    %v3210 = vunpack.c.h.b16 %v901
    %v3211 = vunpack.c.l.b16 %v902
    %v3212 = vunpack.c.h.b16 %v902
    %v3213 = vunpack.c.l.b16 %v903
    %v3214 = vunpack.c.h.b16 %v903
    %v3215 = vunpack.c.l.b16 %v904
    %v3216 = vunpack.c.h.b16 %v904
    %v3217 = vunpack.c.l.b16 %v905
    %v3218 = vunpack.c.h.b16 %v905
    %v3219 = vunpack.c.l.b16 %v906
    %v3220 = vunpack.c.h.b16 %v906
    %v3221 = vunpack.c.l.b16 %v907
    %v3222 = vunpack.c.h.b16 %v907
    %v3223 = vunpack.c.l.b16 %v908
    %v3224 = vunpack.c.h.b16 %v908
    %v3225 = vunpack.c.l.b16 %v909
    %v3226 = vunpack.c.h.b16 %v909
    %v3227 = vunpack.c.l.b16 %v910
    %v3228 = vunpack.c.h.b16 %v910
    %v3229 = vunpack.c.l.b16 %v911
    %v3230 = vunpack.c.h.b16 %v911
    %v3231 = vunpack.c.l.b16 %v912
    %v3232 = vunpack.c.h.b16 %v912
    %v3233 = vunpack.c.l.b16 %v913
    %v3234 = vunpack.c.h.b16 %v913
    %v3235 = vunpack.c.l.b16 %v914
    %v3236 = vunpack.c.h.b16 %v914
    %v3237 = vunpack.c.l.b16 %v915
    %v3238 = vunpack.c.h.b16 %v915
    %v3239 = vunpack.c.l.b16 %v916
    %v3240 = vunpack.c.h.b16 %v916
    %v3241 = vunpack.c.l.b16 %v917
    %v3242 = vunpack.c.h.b16 %v917
    %v3243 = vunpack.c.l.b16 %v918
    %v3244 = vunpack.c.h.b16 %v918
    %v3245 = vpack.c.b16 %v1713, %v1709
    %v3246 = vpack.c.b16 %v1714, %v1710
    %v3247 = vpack.c.b16 %v1715, %v1711
    %v3248 = vpack.c.b16 %v1716, %v1712
    %v3249 = vpack.c.b16 %v1721, %v1717
    %v3250 = vpack.c.b16 %v1722, %v1718
    %v3251 = vpack.c.b16 %v1723, %v1719
    %v3252 = vpack.c.b16 %v1724, %v1720
    %v3253 = vpack.c.b16 %v1729, %v1725
    %v3254 = vpack.c.b16 %v1730, %v1726
    %v3255 = vpack.c.b16 %v1731, %v1727
    %v3256 = vpack.c.b16 %v1732, %v1728
    %v3257 = vpack.c.b16 %v1737, %v1733
    %v3258 = vpack.c.b16 %v1738, %v1734
    %v3259 = vpack.c.b16 %v1739, %v1735
    %v3260 = vpack.c.b16 %v1740, %v1736
    %v3261 = vpack.c.b16 %v1745, %v1741
    %v3262 = vpack.c.b16 %v1746, %v1742
    %v3263 = vpack.c.b16 %v1747, %v1743
    %v3264 = vpack.c.b16 %v1748, %v1744
    %v3265 = vpack.c.b16 %v1753, %v1749
    %v3266 = vpack.c.b16 %v1754, %v1750
    %v3267 = vpack.c.b16 %v1755, %v1751
    %v3268 = vpack.c.b16 %v1756, %v1752
    %v3269 = vpack.c.b16 %v1761, %v1757
    %v3270 = vpack.c.b16 %v1762, %v1758
    %v3271 = vpack.c.b16 %v1763, %v1759
    %v3272 = vpack.c.b16 %v1764, %v1760
    %v3273 = vpack.c.b16 %v1769, %v1765
    %v3274 = vpack.c.b16 %v1770, %v1766
    %v3275 = vpack.c.b16 %v1771, %v1767
    %v3276 = vpack.c.b16 %v1772, %v1768
    %v3277 = vpack.c.b16 %v1777, %v1773
    %v3278 = vpack.c.b16 %v1778, %v1774
    %v3279 = vpack.c.b16 %v1779, %v1775
    %v3280 = vpack.c.b16 %v1780, %v1776
    %v3281 = vpack.c.b16 %v1785, %v1781
    %v3282 = vpack.c.b16 %v1786, %v1782
    %v3283 = vpack.c.b16 %v1787, %v1783
    %v3284 = vpack.c.b16 %v1788, %v1784
    %v3285 = vpack.c.b16 %v1793, %v1789
    %v3286 = vpack.c.b16 %v1794, %v1790
    %v3287 = vpack.c.b16 %v1795, %v1791
    %v3288 = vpack.c.b16 %v1796, %v1792
    %v3289 = vpack.c.b16 %v1801, %v1797
    %v3290 = vpack.c.b16 %v1802, %v1798
    %v3291 = vpack.c.b16 %v1803, %v1799
    %v3292 = vpack.c.b16 %v1804, %v1800
    %v3293 = vpack.c.b16 %v1809, %v1805
    %v3294 = vpack.c.b16 %v1810, %v1806
    %v3295 = vpack.c.b16 %v1811, %v1807
    %v3296 = vpack.c.b16 %v1812, %v1808
    %v3297 = vpack.c.b16 %v1817, %v1813
    %v3298 = vpack.c.b16 %v1818, %v1814
    %v3299 = vpack.c.b16 %v1819, %v1815
    %v3300 = vpack.c.b16 %v1820, %v1816
    %v3301 = vpack.c.b16 %v1825, %v1821
    %v3302 = vpack.c.b16 %v1826, %v1822
    %v3303 = vpack.c.b16 %v1827, %v1823
    %v3304 = vpack.c.b16 %v1828, %v1824
    %v3305 = vpack.c.b16 %v1833, %v1829
    %v3306 = vpack.c.b16 %v1834, %v1830
    %v3307 = vpack.c.b16 %v1835, %v1831
    %v3308 = vpack.c.b16 %v1836, %v1832
    %v3309 = vpack.c.b16 %v1841, %v1837
    %v3310 = vpack.c.b16 %v1842, %v1838
    %v3311 = vpack.c.b16 %v1843, %v1839
    %v3312 = vpack.c.b16 %v1844, %v1840
    %v3313 = vpack.c.b16 %v1849, %v1845
    %v3314 = vpack.c.b16 %v1850, %v1846
    %v3315 = vpack.c.b16 %v1851, %v1847
    %v3316 = vpack.c.b16 %v1852, %v1848
    %v3317 = vpack.c.b16 %v1857, %v1853
    %v3318 = vpack.c.b16 %v1858, %v1854
    %v3319 = vpack.c.b16 %v1859, %v1855
    %v3320 = vpack.c.b16 %v1860, %v1856
    %v3321 = vpack.c.b16 %v1865, %v1861
    %v3322 = vpack.c.b16 %v1866, %v1862
    %v3323 = vpack.c.b16 %v1867, %v1863
    %v3324 = vpack.c.b16 %v1868, %v1864
    %v3325 = vpack.c.b16 %v1873, %v1869
    %v3326 = vpack.c.b16 %v1874, %v1870
    %v3327 = vpack.c.b16 %v1875, %v1871
    %v3328 = vpack.c.b16 %v1876, %v1872
    %v3329 = vpack.c.b16 %v1881, %v1877
    %v3330 = vpack.c.b16 %v1882, %v1878
    %v3331 = vpack.c.b16 %v1883, %v1879
    %v3332 = vpack.c.b16 %v1884, %v1880
    %v3333 = vpack.c.b16 %v1889, %v1885
    %v3334 = vpack.c.b16 %v1890, %v1886
    %v3335 = vpack.c.b16 %v1891, %v1887
    %v3336 = vpack.c.b16 %v1892, %v1888
    %v3337 = vpack.c.b16 %v1897, %v1893
    %v3338 = vpack.c.b16 %v1898, %v1894
    %v3339 = vpack.c.b16 %v1899, %v1895
    %v3340 = vpack.c.b16 %v1900, %v1896
    %v3341 = vpack.c.b16 %v1905, %v1901
    %v3342 = vpack.c.b16 %v1906, %v1902
    %v3343 = vpack.c.b16 %v1907, %v1903
    %v3344 = vpack.c.b16 %v1908, %v1904
    %v3345 = vpack.c.b16 %v1913, %v1909
    %v3346 = vpack.c.b16 %v1914, %v1910
    %v3347 = vpack.c.b16 %v1915, %v1911
    %v3348 = vpack.c.b16 %v1916, %v1912
    %v3349 = vpack.c.b16 %v1921, %v1917
    %v3350 = vpack.c.b16 %v1922, %v1918
    %v3351 = vpack.c.b16 %v1923, %v1919
    %v3352 = vpack.c.b16 %v1924, %v1920
    %v3353 = vpack.c.b16 %v1929, %v1925
    %v3354 = vpack.c.b16 %v1930, %v1926
    %v3355 = vpack.c.b16 %v1931, %v1927
    %v3356 = vpack.c.b16 %v1932, %v1928
    %v3357 = vpack.c.b16 %v1937, %v1933
    %v3358 = vpack.c.b16 %v1938, %v1934
    %v3359 = vpack.c.b16 %v1939, %v1935
    %v3360 = vpack.c.b16 %v1940, %v1936
    %v3361 = vpack.c.b16 %v1945, %v1941
    %v3362 = vpack.c.b16 %v1946, %v1942
    %v3363 = vpack.c.b16 %v1947, %v1943
    %v3364 = vpack.c.b16 %v1948, %v1944
    %v3365 = vpack.c.b16 %v1953, %v1949
    %v3366 = vpack.c.b16 %v1954, %v1950
    %v3367 = vpack.c.b16 %v1955, %v1951
    %v3368 = vpack.c.b16 %v1956, %v1952
    %v3369 = vpack.c.b16 %v1961, %v1957
    %v3370 = vpack.c.b16 %v1962, %v1958
    %v3371 = vpack.c.b16 %v1963, %v1959
    %v3372 = vpack.c.b16 %v1964, %v1960
    %v3373 = vpack.c.b16 %v1969, %v1965
    %v3374 = vpack.c.b16 %v1970, %v1966
    %v3375 = vpack.c.b16 %v1971, %v1967
    %v3376 = vpack.c.b16 %v1972, %v1968
    %v3377 = vpack.c.b16 %v1977, %v1973
    %v3378 = vpack.c.b16 %v1978, %v1974
    %v3379 = vpack.c.b16 %v1979, %v1975
    %v3380 = vpack.c.b16 %v1980, %v1976
    %v3381 = vpack.c.b16 %v1985, %v1981
    %v3382 = vpack.c.b16 %v1986, %v1982
    %v3383 = vpack.c.b16 %v1987, %v1983
    %v3384 = vpack.c.b16 %v1988, %v1984
    %v3385 = vpack.c.b16 %v1993, %v1989
    %v3386 = vpack.c.b16 %v1994, %v1990
    %v3387 = vpack.c.b16 %v1995, %v1991
    %v3388 = vpack.c.b16 %v1996, %v1992
    %v3389 = vpack.c.b16 %v2001, %v1997
    %v3390 = vpack.c.b16 %v2002, %v1998
    %v3391 = vpack.c.b16 %v2003, %v1999
    %v3392 = vpack.c.b16 %v2004, %v2000
    %v3393 = vpack.c.b16 %v2009, %v2005
    %v3394 = vpack.c.b16 %v2010, %v2006
    %v3395 = vpack.c.b16 %v2011, %v2007
    %v3396 = vpack.c.b16 %v2012, %v2008
    %v3397 = vpack.c.b16 %v2017, %v2013
    %v3398 = vpack.c.b16 %v2018, %v2014
    %v3399 = vpack.c.b16 %v2019, %v2015
    %v3400 = vpack.c.b16 %v2020, %v2016
    %v3401 = vpack.c.b16 %v2025, %v2021
    %v3402 = vpack.c.b16 %v2026, %v2022
    %v3403 = vpack.c.b16 %v2027, %v2023
    %v3404 = vpack.c.b16 %v2028, %v2024
    %v3405 = vpack.c.b16 %v2033, %v2029
    %v3406 = vpack.c.b16 %v2034, %v2030
    %v3407 = vpack.c.b16 %v2035, %v2031
    %v3408 = vpack.c.b16 %v2036, %v2032
    %v3409 = vpack.c.b16 %v2041, %v2037
    %v3410 = vpack.c.b16 %v2042, %v2038
    %v3411 = vpack.c.b16 %v2043, %v2039
    %v3412 = vpack.c.b16 %v2044, %v2040
    %v3413 = vpack.c.b16 %v2049, %v2045
    %v3414 = vpack.c.b16 %v2050, %v2046
    %v3415 = vpack.c.b16 %v2051, %v2047
    %v3416 = vpack.c.b16 %v2052, %v2048
    %v3417 = vpack.c.b16 %v2057, %v2053
    %v3418 = vpack.c.b16 %v2058, %v2054
    %v3419 = vpack.c.b16 %v2059, %v2055
    %v3420 = vpack.c.b16 %v2060, %v2056
    %v3421 = vpack.c.b16 %v2065, %v2061
    %v3422 = vpack.c.b16 %v2066, %v2062
    %v3423 = vpack.c.b16 %v2067, %v2063
    %v3424 = vpack.c.b16 %v2068, %v2064
    %v3425 = vpack.c.b16 %v2073, %v2069
    %v3426 = vpack.c.b16 %v2074, %v2070
    %v3427 = vpack.c.b16 %v2075, %v2071
    %v3428 = vpack.c.b16 %v2076, %v2072
    %v3429 = vpack.c.b16 %v2081, %v2077
    %v3430 = vpack.c.b16 %v2082, %v2078
    %v3431 = vpack.c.b16 %v2083, %v2079
    %v3432 = vpack.c.b16 %v2084, %v2080
    %v3433 = vpack.c.b16 %v2089, %v2085
    %v3434 = vpack.c.b16 %v2090, %v2086
    %v3435 = vpack.c.b16 %v2091, %v2087
    %v3436 = vpack.c.b16 %v2092, %v2088
    %v3437 = vpack.c.b16 %v2097, %v2093
    %v3438 = vpack.c.b16 %v2098, %v2094
    %v3439 = vpack.c.b16 %v2099, %v2095
    %v3440 = vpack.c.b16 %v2100, %v2096
    %v3441 = vpack.c.b16 %v2105, %v2101
    %v3442 = vpack.c.b16 %v2106, %v2102
    %v3443 = vpack.c.b16 %v2107, %v2103
    %v3444 = vpack.c.b16 %v2108, %v2104
    %v3445 = vpack.c.b16 %v2113, %v2109
    %v3446 = vpack.c.b16 %v2114, %v2110
    %v3447 = vpack.c.b16 %v2115, %v2111
    %v3448 = vpack.c.b16 %v2116, %v2112
    %v3449 = vpack.c.b16 %v2121, %v2117
    %v3450 = vpack.c.b16 %v2122, %v2118
    %v3451 = vpack.c.b16 %v2123, %v2119
    %v3452 = vpack.c.b16 %v2124, %v2120
    %v3453 = vpack.c.b16 %v2129, %v2125
    %v3454 = vpack.c.b16 %v2130, %v2126
    %v3455 = vpack.c.b16 %v2131, %v2127
    %v3456 = vpack.c.b16 %v2132, %v2128
    %v3457 = vpack.c.b16 %v2137, %v2133
    %v3458 = vpack.c.b16 %v2138, %v2134
    %v3459 = vpack.c.b16 %v2139, %v2135
    %v3460 = vpack.c.b16 %v2140, %v2136
    %v3461 = vpack.c.b16 %v2145, %v2141
    %v3462 = vpack.c.b16 %v2146, %v2142
    %v3463 = vpack.c.b16 %v2147, %v2143
    %v3464 = vpack.c.b16 %v2148, %v2144
    %v3465 = vpack.c.b16 %v2153, %v2149
    %v3466 = vpack.c.b16 %v2154, %v2150
    %v3467 = vpack.c.b16 %v2155, %v2151
    %v3468 = vpack.c.b16 %v2156, %v2152
    %v3469 = vpack.c.b16 %v2161, %v2157
    %v3470 = vpack.c.b16 %v2162, %v2158
    %v3471 = vpack.c.b16 %v2163, %v2159
    %v3472 = vpack.c.b16 %v2164, %v2160
    %v3473 = vpack.c.b16 %v2169, %v2165
    %v3474 = vpack.c.b16 %v2170, %v2166
    %v3475 = vpack.c.b16 %v2171, %v2167
    %v3476 = vpack.c.b16 %v2172, %v2168
    %v3477 = vpack.c.b16 %v2177, %v2173
    %v3478 = vpack.c.b16 %v2178, %v2174
    %v3479 = vpack.c.b16 %v2179, %v2175
    %v3480 = vpack.c.b16 %v2180, %v2176
    %v3481 = vpack.c.b16 %v2185, %v2181
    %v3482 = vpack.c.b16 %v2186, %v2182
    %v3483 = vpack.c.b16 %v2187, %v2183
    %v3484 = vpack.c.b16 %v2188, %v2184
    %v3485 = vpack.c.b16 %v2193, %v2189
    %v3486 = vpack.c.b16 %v2194, %v2190
    %v3487 = vpack.c.b16 %v2195, %v2191
    %v3488 = vpack.c.b16 %v2196, %v2192
    %v3489 = vpack.c.b16 %v2201, %v2197
    %v3490 = vpack.c.b16 %v2202, %v2198
    %v3491 = vpack.c.b16 %v2203, %v2199
    %v3492 = vpack.c.b16 %v2204, %v2200
    %v3493 = vpack.c.b16 %v2209, %v2205
    %v3494 = vpack.c.b16 %v2210, %v2206
    %v3495 = vpack.c.b16 %v2211, %v2207
    %v3496 = vpack.c.b16 %v2212, %v2208
    %v3497 = vpack.c.b16 %v2217, %v2213
    %v3498 = vpack.c.b16 %v2218, %v2214
    %v3499 = vpack.c.b16 %v2219, %v2215
    %v3500 = vpack.c.b16 %v2220, %v2216
    %v3501 = vpack.c.b16 %v2225, %v2221
    %v3502 = vpack.c.b16 %v2226, %v2222
    %v3503 = vpack.c.b16 %v2227, %v2223
    %v3504 = vpack.c.b16 %v2228, %v2224
    %v3505 = vpack.c.b16 %v2233, %v2229
    %v3506 = vpack.c.b16 %v2234, %v2230
    %v3507 = vpack.c.b16 %v2235, %v2231
    %v3508 = vpack.c.b16 %v2236, %v2232
    %v3509 = vpack.c.b16 %v2241, %v2237
    %v3510 = vpack.c.b16 %v2242, %v2238
    %v3511 = vpack.c.b16 %v2243, %v2239
    %v3512 = vpack.c.b16 %v2244, %v2240
    %v3513 = vpack.c.b16 %v2249, %v2245
    %v3514 = vpack.c.b16 %v2250, %v2246
    %v3515 = vpack.c.b16 %v2251, %v2247
    %v3516 = vpack.c.b16 %v2252, %v2248
    %v3517 = vpack.c.b16 %v2257, %v2253
    %v3518 = vpack.c.b16 %v2258, %v2254
    %v3519 = vpack.c.b16 %v2259, %v2255
    %v3520 = vpack.c.b16 %v2260, %v2256
    %v3521 = vpack.c.b16 %v2265, %v2261
    %v3522 = vpack.c.b16 %v2266, %v2262
    %v3523 = vpack.c.b16 %v2267, %v2263
    %v3524 = vpack.c.b16 %v2268, %v2264
    %v3525 = vpack.c.b16 %v2273, %v2269
    %v3526 = vpack.c.b16 %v2274, %v2270
    %v3527 = vpack.c.b16 %v2275, %v2271
    %v3528 = vpack.c.b16 %v2276, %v2272
    %v3529 = vpack.c.b16 %v2281, %v2277
    %v3530 = vpack.c.b16 %v2282, %v2278
    %v3531 = vpack.c.b16 %v2283, %v2279
    %v3532 = vpack.c.b16 %v2284, %v2280
    %v3533 = vpack.c.b16 %v2289, %v2285
    %v3534 = vpack.c.b16 %v2290, %v2286
    %v3535 = vpack.c.b16 %v2291, %v2287
    %v3536 = vpack.c.b16 %v2292, %v2288
    %v3537 = vpack.c.b16 %v2297, %v2293
    %v3538 = vpack.c.b16 %v2298, %v2294
    %v3539 = vpack.c.b16 %v2299, %v2295
    %v3540 = vpack.c.b16 %v2300, %v2296
    %v3541 = vpack.c.b16 %v2305, %v2301
    %v3542 = vpack.c.b16 %v2306, %v2302
    %v3543 = vpack.c.b16 %v2307, %v2303
    %v3544 = vpack.c.b16 %v2308, %v2304
    %v3545 = vpack.c.b16 %v2313, %v2309
    %v3546 = vpack.c.b16 %v2314, %v2310
    %v3547 = vpack.c.b16 %v2315, %v2311
    %v3548 = vpack.c.b16 %v2316, %v2312
    %v3549 = vpack.c.b16 %v2321, %v2317
    %v3550 = vpack.c.b16 %v2322, %v2318
    %v3551 = vpack.c.b16 %v2323, %v2319
    %v3552 = vpack.c.b16 %v2324, %v2320
    %v3553 = vpack.c.b16 %v2329, %v2325
    %v3554 = vpack.c.b16 %v2330, %v2326
    %v3555 = vpack.c.b16 %v2331, %v2327
    %v3556 = vpack.c.b16 %v2332, %v2328
    %v3557 = vpack.c.b16 %v2337, %v2333
    %v3558 = vpack.c.b16 %v2338, %v2334
    %v3559 = vpack.c.b16 %v2339, %v2335
    %v3560 = vpack.c.b16 %v2340, %v2336
    %v3561 = vpack.c.b16 %v2345, %v2341
    %v3562 = vpack.c.b16 %v2346, %v2342
    %v3563 = vpack.c.b16 %v2347, %v2343
    %v3564 = vpack.c.b16 %v2348, %v2344
    %v3565 = vpack.c.b16 %v2353, %v2349
    %v3566 = vpack.c.b16 %v2354, %v2350
    %v3567 = vpack.c.b16 %v2355, %v2351
    %v3568 = vpack.c.b16 %v2356, %v2352
    %v3569 = vpack.c.b16 %v2361, %v2357
    %v3570 = vpack.c.b16 %v2362, %v2358
    %v3571 = vpack.c.b16 %v2363, %v2359
    %v3572 = vpack.c.b16 %v2364, %v2360
    %v3573 = vpack.c.b16 %v2369, %v2365
    %v3574 = vpack.c.b16 %v2370, %v2366
    %v3575 = vpack.c.b16 %v2371, %v2367
    %v3576 = vpack.c.b16 %v2372, %v2368
    %v3577 = vpack.c.b16 %v2377, %v2373
    %v3578 = vpack.c.b16 %v2378, %v2374
    %v3579 = vpack.c.b16 %v2379, %v2375
    %v3580 = vpack.c.b16 %v2380, %v2376
    %v3581 = vpack.c.b16 %v2385, %v2381
    %v3582 = vpack.c.b16 %v2386, %v2382
    %v3583 = vpack.c.b16 %v2387, %v2383
    %v3584 = vpack.c.b16 %v2388, %v2384
    %v3585 = vpack.c.b16 %v2393, %v2389
    %v3586 = vpack.c.b16 %v2394, %v2390
    %v3587 = vpack.c.b16 %v2395, %v2391
    %v3588 = vpack.c.b16 %v2396, %v2392
    %v3589 = vpack.c.b16 %v2401, %v2397
    %v3590 = vpack.c.b16 %v2402, %v2398
    %v3591 = vpack.c.b16 %v2403, %v2399
    %v3592 = vpack.c.b16 %v2404, %v2400
    %v3593 = vpack.c.b16 %v2409, %v2405
    %v3594 = vpack.c.b16 %v2410, %v2406
    %v3595 = vpack.c.b16 %v2411, %v2407
    %v3596 = vpack.c.b16 %v2412, %v2408
    %v3597 = vpack.c.b16 %v2417, %v2413
    %v3598 = vpack.c.b16 %v2418, %v2414
    %v3599 = vpack.c.b16 %v2419, %v2415
    %v3600 = vpack.c.b16 %v2420, %v2416
    %v3601 = vpack.c.b16 %v2425, %v2421
    %v3602 = vpack.c.b16 %v2426, %v2422
    %v3603 = vpack.c.b16 %v2427, %v2423
    %v3604 = vpack.c.b16 %v2428, %v2424
    %v3605 = vpack.c.b16 %v2433, %v2429
    %v3606 = vpack.c.b16 %v2434, %v2430
    %v3607 = vpack.c.b16 %v2435, %v2431
    %v3608 = vpack.c.b16 %v2436, %v2432
    %v3609 = vpack.c.b16 %v2441, %v2437
    %v3610 = vpack.c.b16 %v2442, %v2438
    %v3611 = vpack.c.b16 %v2443, %v2439
    %v3612 = vpack.c.b16 %v2444, %v2440
    %v3613 = vpack.c.b16 %v2449, %v2445
    %v3614 = vpack.c.b16 %v2450, %v2446
    %v3615 = vpack.c.b16 %v2451, %v2447
    %v3616 = vpack.c.b16 %v2452, %v2448
    %v3617 = vpack.c.b16 %v2457, %v2453
    %v3618 = vpack.c.b16 %v2458, %v2454
    %v3619 = vpack.c.b16 %v2459, %v2455
    %v3620 = vpack.c.b16 %v2460, %v2456
    %v3621 = vpack.c.b16 %v2465, %v2461
    %v3622 = vpack.c.b16 %v2466, %v2462
    %v3623 = vpack.c.b16 %v2467, %v2463
    %v3624 = vpack.c.b16 %v2468, %v2464
    %v3625 = vpack.c.b16 %v2473, %v2469
    %v3626 = vpack.c.b16 %v2474, %v2470
    %v3627 = vpack.c.b16 %v2475, %v2471
    %v3628 = vpack.c.b16 %v2476, %v2472
    %v3629 = vpack.c.b16 %v2481, %v2477
    %v3630 = vpack.c.b16 %v2482, %v2478
    %v3631 = vpack.c.b16 %v2483, %v2479
    %v3632 = vpack.c.b16 %v2484, %v2480
    %v3633 = vpack.c.b16 %v2489, %v2485
    %v3634 = vpack.c.b16 %v2490, %v2486
    %v3635 = vpack.c.b16 %v2491, %v2487
    %v3636 = vpack.c.b16 %v2492, %v2488
    %v3637 = vpack.c.b16 %v2497, %v2493
    %v3638 = vpack.c.b16 %v2498, %v2494
    %v3639 = vpack.c.b16 %v2499, %v2495
    %v3640 = vpack.c.b16 %v2500, %v2496
    %v3641 = vpack.c.b16 %v2505, %v2501
    %v3642 = vpack.c.b16 %v2506, %v2502
    %v3643 = vpack.c.b16 %v2507, %v2503
    %v3644 = vpack.c.b16 %v2508, %v2504
    %v3645 = vpack.c.b16 %v2513, %v2509
    %v3646 = vpack.c.b16 %v2514, %v2510
    %v3647 = vpack.c.b16 %v2515, %v2511
    %v3648 = vpack.c.b16 %v2516, %v2512
    %v3649 = vpack.c.b16 %v2521, %v2517
    %v3650 = vpack.c.b16 %v2522, %v2518
    %v3651 = vpack.c.b16 %v2523, %v2519
    %v3652 = vpack.c.b16 %v2524, %v2520
    %v3653 = vpack.c.b16 %v2529, %v2525
    %v3654 = vpack.c.b16 %v2530, %v2526
    %v3655 = vpack.c.b16 %v2531, %v2527
    %v3656 = vpack.c.b16 %v2532, %v2528
    %v3657 = vpack.c.b16 %v2537, %v2533
    %v3658 = vpack.c.b16 %v2538, %v2534
    %v3659 = vpack.c.b16 %v2539, %v2535
    %v3660 = vpack.c.b16 %v2540, %v2536
    %v3661 = vpack.c.b16 %v2545, %v2541
    %v3662 = vpack.c.b16 %v2546, %v2542
    %v3663 = vpack.c.b16 %v2547, %v2543
    %v3664 = vpack.c.b16 %v2548, %v2544
    %v3665 = vpack.c.b16 %v2553, %v2549
    %v3666 = vpack.c.b16 %v2554, %v2550
    %v3667 = vpack.c.b16 %v2555, %v2551
    %v3668 = vpack.c.b16 %v2556, %v2552
    %v3669 = vpack.c.b16 %v2561, %v2557
    %v3670 = vpack.c.b16 %v2562, %v2558
    %v3671 = vpack.c.b16 %v2563, %v2559
    %v3672 = vpack.c.b16 %v2564, %v2560
    %v3673 = vpack.c.b16 %v2569, %v2565
    %v3674 = vpack.c.b16 %v2570, %v2566
    %v3675 = vpack.c.b16 %v2571, %v2567
    %v3676 = vpack.c.b16 %v2572, %v2568
    %v3677 = vpack.c.b16 %v2577, %v2573
    %v3678 = vpack.c.b16 %v2578, %v2574
    %v3679 = vpack.c.b16 %v2579, %v2575
    %v3680 = vpack.c.b16 %v2580, %v2576
    %v3681 = vpack.c.b16 %v2585, %v2581
    %v3682 = vpack.c.b16 %v2586, %v2582
    %v3683 = vpack.c.b16 %v2587, %v2583
    %v3684 = vpack.c.b16 %v2588, %v2584
    %v3685 = vpack.c.b16 %v2593, %v2589
    %v3686 = vpack.c.b16 %v2594, %v2590
    %v3687 = vpack.c.b16 %v2595, %v2591
    %v3688 = vpack.c.b16 %v2596, %v2592
    %v3689 = vpack.c.b16 %v2601, %v2597
    %v3690 = vpack.c.b16 %v2602, %v2598
    %v3691 = vpack.c.b16 %v2603, %v2599
    %v3692 = vpack.c.b16 %v2604, %v2600
    %v3693 = vpack.c.b16 %v2609, %v2605
    %v3694 = vpack.c.b16 %v2610, %v2606
    %v3695 = vpack.c.b16 %v2611, %v2607
    %v3696 = vpack.c.b16 %v2612, %v2608
    %v3697 = vpack.c.b16 %v2617, %v2613
    %v3698 = vpack.c.b16 %v2618, %v2614
    %v3699 = vpack.c.b16 %v2619, %v2615
    %v3700 = vpack.c.b16 %v2620, %v2616
    %v3701 = vpack.c.b16 %v2625, %v2621
    %v3702 = vpack.c.b16 %v2626, %v2622
    %v3703 = vpack.c.b16 %v2627, %v2623
    %v3704 = vpack.c.b16 %v2628, %v2624
    %v3705 = vpack.c.b16 %v2633, %v2629
    %v3706 = vpack.c.b16 %v2634, %v2630
    %v3707 = vpack.c.b16 %v2635, %v2631
    %v3708 = vpack.c.b16 %v2636, %v2632
    %v3709 = vpack.c.b16 %v2641, %v2637
    %v3710 = vpack.c.b16 %v2642, %v2638
    %v3711 = vpack.c.b16 %v2643, %v2639
    %v3712 = vpack.c.b16 %v2644, %v2640
    %v3713 = vpack.c.b16 %v2649, %v2645
    %v3714 = vpack.c.b16 %v2650, %v2646
    %v3715 = vpack.c.b16 %v2651, %v2647
    %v3716 = vpack.c.b16 %v2652, %v2648
    %v3717 = vpack.c.b16 %v2657, %v2653
    %v3718 = vpack.c.b16 %v2658, %v2654
    %v3719 = vpack.c.b16 %v2659, %v2655
    %v3720 = vpack.c.b16 %v2660, %v2656
    %v3721 = vpack.c.b16 %v2665, %v2661
    %v3722 = vpack.c.b16 %v2666, %v2662
    %v3723 = vpack.c.b16 %v2667, %v2663
    %v3724 = vpack.c.b16 %v2668, %v2664
    %v3725 = vpack.c.b16 %v2673, %v2669
    %v3726 = vpack.c.b16 %v2674, %v2670
    %v3727 = vpack.c.b16 %v2675, %v2671
    %v3728 = vpack.c.b16 %v2676, %v2672
    %v3729 = vpack.c.b16 %v2681, %v2677
    %v3730 = vpack.c.b16 %v2682, %v2678
    %v3731 = vpack.c.b16 %v2683, %v2679
    %v3732 = vpack.c.b16 %v2684, %v2680
    %v3733 = vpack.c.b16 %v2689, %v2685
    %v3734 = vpack.c.b16 %v2690, %v2686
    %v3735 = vpack.c.b16 %v2691, %v2687
    %v3736 = vpack.c.b16 %v2692, %v2688
    %v3737 = vpack.c.b16 %v2697, %v2693
    %v3738 = vpack.c.b16 %v2698, %v2694
    %v3739 = vpack.c.b16 %v2699, %v2695
    %v3740 = vpack.c.b16 %v2700, %v2696
    %v3741 = vpack.c.b16 %v2705, %v2701
    %v3742 = vpack.c.b16 %v2706, %v2702
    %v3743 = vpack.c.b16 %v2707, %v2703
    %v3744 = vpack.c.b16 %v2708, %v2704
    %v3745 = vpack.c.b16 %v2713, %v2709
    %v3746 = vpack.c.b16 %v2714, %v2710
    %v3747 = vpack.c.b16 %v2715, %v2711
    %v3748 = vpack.c.b16 %v2716, %v2712
    %v3749 = vpack.c.b16 %v2721, %v2717
    %v3750 = vpack.c.b16 %v2722, %v2718
    %v3751 = vpack.c.b16 %v2723, %v2719
    %v3752 = vpack.c.b16 %v2724, %v2720
    %v3753 = vpack.c.b16 %v2729, %v2725
    %v3754 = vpack.c.b16 %v2730, %v2726
    %v3755 = vpack.c.b16 %v2731, %v2727
    %v3756 = vpack.c.b16 %v2732, %v2728
    %v3757 = vpack.c.b16 %v2737, %v2733
    %v3758 = vpack.c.b16 %v2738, %v2734
    %v3759 = vpack.c.b16 %v2739, %v2735
    %v3760 = vpack.c.b16 %v2740, %v2736
    %v3761 = vpack.c.b16 %v2745, %v2741
    %v3762 = vpack.c.b16 %v2746, %v2742
    %v3763 = vpack.c.b16 %v2747, %v2743
    %v3764 = vpack.c.b16 %v2748, %v2744
    %v3765 = vpack.c.b16 %v2753, %v2749
    %v3766 = vpack.c.b16 %v2754, %v2750
    %v3767 = vpack.c.b16 %v2755, %v2751
    %v3768 = vpack.c.b16 %v2756, %v2752
    %v3769 = vpack.c.b16 %v2761, %v2757
    %v3770 = vpack.c.b16 %v2762, %v2758
    %v3771 = vpack.c.b16 %v2763, %v2759
    %v3772 = vpack.c.b16 %v2764, %v2760
    %v3773 = vpack.c.b16 %v2769, %v2765
    %v3774 = vpack.c.b16 %v2770, %v2766
    %v3775 = vpack.c.b16 %v2771, %v2767
    %v3776 = vpack.c.b16 %v2772, %v2768
    %v3777 = vpack.c.b16 %v2777, %v2773
    %v3778 = vpack.c.b16 %v2778, %v2774
    %v3779 = vpack.c.b16 %v2779, %v2775
    %v3780 = vpack.c.b16 %v2780, %v2776
    %v3781 = vpack.c.b16 %v2785, %v2781
    %v3782 = vpack.c.b16 %v2786, %v2782
    %v3783 = vpack.c.b16 %v2787, %v2783
    %v3784 = vpack.c.b16 %v2788, %v2784
    %v3785 = vpack.c.b16 %v2793, %v2789
    %v3786 = vpack.c.b16 %v2794, %v2790
    %v3787 = vpack.c.b16 %v2795, %v2791
    %v3788 = vpack.c.b16 %v2796, %v2792
    %v3789 = vpack.c.b16 %v2801, %v2797
    %v3790 = vpack.c.b16 %v2802, %v2798
    %v3791 = vpack.c.b16 %v2803, %v2799
    %v3792 = vpack.c.b16 %v2804, %v2800
    %v3793 = vpack.c.b16 %v2809, %v2805
    %v3794 = vpack.c.b16 %v2810, %v2806
    %v3795 = vpack.c.b16 %v2811, %v2807
    %v3796 = vpack.c.b16 %v2812, %v2808
    %v3797 = vpack.c.b16 %v2817, %v2813
    %v3798 = vpack.c.b16 %v2818, %v2814
    %v3799 = vpack.c.b16 %v2819, %v2815
    %v3800 = vpack.c.b16 %v2820, %v2816
    %v3801 = vpack.c.b16 %v2825, %v2821
    %v3802 = vpack.c.b16 %v2826, %v2822
    %v3803 = vpack.c.b16 %v2827, %v2823
    %v3804 = vpack.c.b16 %v2828, %v2824
    %v3805 = vpack.c.b16 %v2833, %v2829
    %v3806 = vpack.c.b16 %v2834, %v2830
    %v3807 = vpack.c.b16 %v2835, %v2831
    %v3808 = vpack.c.b16 %v2836, %v2832
    %v3809 = vpack.c.b16 %v2841, %v2837
    %v3810 = vpack.c.b16 %v2842, %v2838
    %v3811 = vpack.c.b16 %v2843, %v2839
    %v3812 = vpack.c.b16 %v2844, %v2840
    %v3813 = vpack.c.b16 %v2849, %v2845
    %v3814 = vpack.c.b16 %v2850, %v2846
    %v3815 = vpack.c.b16 %v2851, %v2847
    %v3816 = vpack.c.b16 %v2852, %v2848
    %v3817 = vpack.c.b16 %v2857, %v2853
    %v3818 = vpack.c.b16 %v2858, %v2854
    %v3819 = vpack.c.b16 %v2859, %v2855
    %v3820 = vpack.c.b16 %v2860, %v2856
    %v3821 = vpack.c.b16 %v2865, %v2861
    %v3822 = vpack.c.b16 %v2866, %v2862
    %v3823 = vpack.c.b16 %v2867, %v2863
    %v3824 = vpack.c.b16 %v2868, %v2864
    %v3825 = vpack.c.b16 %v2873, %v2869
    %v3826 = vpack.c.b16 %v2874, %v2870
    %v3827 = vpack.c.b16 %v2875, %v2871
    %v3828 = vpack.c.b16 %v2876, %v2872
    %v3829 = vpack.c.b16 %v2881, %v2877
    %v3830 = vpack.c.b16 %v2882, %v2878
    %v3831 = vpack.c.b16 %v2883, %v2879
    %v3832 = vpack.c.b16 %v2884, %v2880
    %v3833 = vpack.c.b16 %v2889, %v2885
    %v3834 = vpack.c.b16 %v2890, %v2886
    %v3835 = vpack.c.b16 %v2891, %v2887
    %v3836 = vpack.c.b16 %v2892, %v2888
    %v3837 = vpack.c.b16 %v2897, %v2893
    %v3838 = vpack.c.b16 %v2898, %v2894
    %v3839 = vpack.c.b16 %v2899, %v2895
    %v3840 = vpack.c.b16 %v2900, %v2896
    %v3841 = vpack.c.b16 %v2905, %v2901
    %v3842 = vpack.c.b16 %v2906, %v2902
    %v3843 = vpack.c.b16 %v2907, %v2903
    %v3844 = vpack.c.b16 %v2908, %v2904
    %v3845 = vpack.c.b16 %v2913, %v2909
    %v3846 = vpack.c.b16 %v2914, %v2910
    %v3847 = vpack.c.b16 %v2915, %v2911
    %v3848 = vpack.c.b16 %v2916, %v2912
    %v3849 = vpack.c.b16 %v2921, %v2917
    %v3850 = vpack.c.b16 %v2922, %v2918
    %v3851 = vpack.c.b16 %v2923, %v2919
    %v3852 = vpack.c.b16 %v2924, %v2920
    %v3853 = vpack.c.b16 %v2929, %v2925
    %v3854 = vpack.c.b16 %v2930, %v2926
    %v3855 = vpack.c.b16 %v2931, %v2927
    %v3856 = vpack.c.b16 %v2932, %v2928
    %v3857 = vpack.c.b16 %v2937, %v2933
    %v3858 = vpack.c.b16 %v2938, %v2934
    %v3859 = vpack.c.b16 %v2939, %v2935
    %v3860 = vpack.c.b16 %v2940, %v2936
    %v3861 = vpack.c.b16 %v2945, %v2941
    %v3862 = vpack.c.b16 %v2946, %v2942
    %v3863 = vpack.c.b16 %v2947, %v2943
    %v3864 = vpack.c.b16 %v2948, %v2944
    %v3865 = vpack.c.b16 %v2953, %v2949
    %v3866 = vpack.c.b16 %v2954, %v2950
    %v3867 = vpack.c.b16 %v2955, %v2951
    %v3868 = vpack.c.b16 %v2956, %v2952
    %v3869 = vpack.c.b16 %v2961, %v2957
    %v3870 = vpack.c.b16 %v2962, %v2958
    %v3871 = vpack.c.b16 %v2963, %v2959
    %v3872 = vpack.c.b16 %v2964, %v2960
    %v3873 = vpack.c.b16 %v2969, %v2965
    %v3874 = vpack.c.b16 %v2970, %v2966
    %v3875 = vpack.c.b16 %v2971, %v2967
    %v3876 = vpack.c.b16 %v2972, %v2968
    %v3877 = vpack.c.b16 %v2977, %v2973
    %v3878 = vpack.c.b16 %v2978, %v2974
    %v3879 = vpack.c.b16 %v2979, %v2975
    %v3880 = vpack.c.b16 %v2980, %v2976
    %v3881 = vpack.c.b16 %v2985, %v2981
    %v3882 = vpack.c.b16 %v2986, %v2982
    %v3883 = vpack.c.b16 %v2987, %v2983
    %v3884 = vpack.c.b16 %v2988, %v2984
    %v3885 = vpack.c.b16 %v2993, %v2989
    %v3886 = vpack.c.b16 %v2994, %v2990
    %v3887 = vpack.c.b16 %v2995, %v2991
    %v3888 = vpack.c.b16 %v2996, %v2992
    %v3889 = vpack.c.b16 %v3001, %v2997
    %v3890 = vpack.c.b16 %v3002, %v2998
    %v3891 = vpack.c.b16 %v3003, %v2999
    %v3892 = vpack.c.b16 %v3004, %v3000
    %v3893 = vpack.c.b16 %v3009, %v3005
    %v3894 = vpack.c.b16 %v3010, %v3006
    %v3895 = vpack.c.b16 %v3011, %v3007
    %v3896 = vpack.c.b16 %v3012, %v3008
    %v3897 = vpack.c.b16 %v3017, %v3013
    %v3898 = vpack.c.b16 %v3018, %v3014
    %v3899 = vpack.c.b16 %v3019, %v3015
    %v3900 = vpack.c.b16 %v3020, %v3016
    %v3901 = vpack.c.b16 %v3025, %v3021
    %v3902 = vpack.c.b16 %v3026, %v3022
    %v3903 = vpack.c.b16 %v3027, %v3023
    %v3904 = vpack.c.b16 %v3028, %v3024
    %v3905 = vpack.c.b16 %v3033, %v3029
    %v3906 = vpack.c.b16 %v3034, %v3030
    %v3907 = vpack.c.b16 %v3035, %v3031
    %v3908 = vpack.c.b16 %v3036, %v3032
    %v3909 = vpack.c.b16 %v3041, %v3037
    %v3910 = vpack.c.b16 %v3042, %v3038
    %v3911 = vpack.c.b16 %v3043, %v3039
    %v3912 = vpack.c.b16 %v3044, %v3040
    %v3913 = vpack.c.b16 %v3049, %v3045
    %v3914 = vpack.c.b16 %v3050, %v3046
    %v3915 = vpack.c.b16 %v3051, %v3047
    %v3916 = vpack.c.b16 %v3052, %v3048
    %v3917 = vpack.c.b16 %v3057, %v3053
    %v3918 = vpack.c.b16 %v3058, %v3054
    %v3919 = vpack.c.b16 %v3059, %v3055
    %v3920 = vpack.c.b16 %v3060, %v3056
    %v3921 = vpack.c.b16 %v3065, %v3061
    %v3922 = vpack.c.b16 %v3066, %v3062
    %v3923 = vpack.c.b16 %v3067, %v3063
    %v3924 = vpack.c.b16 %v3068, %v3064
    %v3925 = vpack.c.b16 %v3073, %v3069
    %v3926 = vpack.c.b16 %v3074, %v3070
    %v3927 = vpack.c.b16 %v3075, %v3071
    %v3928 = vpack.c.b16 %v3076, %v3072
    %v3929 = vpack.c.b16 %v3081, %v3077
    %v3930 = vpack.c.b16 %v3082, %v3078
    %v3931 = vpack.c.b16 %v3083, %v3079
    %v3932 = vpack.c.b16 %v3084, %v3080
    %v3933 = vpack.c.b16 %v3089, %v3085
    %v3934 = vpack.c.b16 %v3090, %v3086
    %v3935 = vpack.c.b16 %v3091, %v3087
    %v3936 = vpack.c.b16 %v3092, %v3088
    %v3937 = vpack.c.b16 %v3097, %v3093
    %v3938 = vpack.c.b16 %v3098, %v3094
    %v3939 = vpack.c.b16 %v3099, %v3095
    %v3940 = vpack.c.b16 %v3100, %v3096
    %v3941 = vpack.c.b16 %v3105, %v3101
    %v3942 = vpack.c.b16 %v3106, %v3102
    %v3943 = vpack.c.b16 %v3107, %v3103
    %v3944 = vpack.c.b16 %v3108, %v3104
    %v3945 = vpack.c.b16 %v3113, %v3109
    %v3946 = vpack.c.b16 %v3114, %v3110
    %v3947 = vpack.c.b16 %v3115, %v3111
    %v3948 = vpack.c.b16 %v3116, %v3112
    %v3949 = vpack.c.b16 %v3121, %v3117
    %v3950 = vpack.c.b16 %v3122, %v3118
    %v3951 = vpack.c.b16 %v3123, %v3119
    %v3952 = vpack.c.b16 %v3124, %v3120
    %v3953 = vpack.c.b16 %v3129, %v3125
    %v3954 = vpack.c.b16 %v3130, %v3126
    %v3955 = vpack.c.b16 %v3131, %v3127
    %v3956 = vpack.c.b16 %v3132, %v3128
    %v3957 = vpack.c.b16 %v3137, %v3133
    %v3958 = vpack.c.b16 %v3138, %v3134
    %v3959 = vpack.c.b16 %v3139, %v3135
    %v3960 = vpack.c.b16 %v3140, %v3136
    %v3961 = vpack.c.b16 %v3145, %v3141
    %v3962 = vpack.c.b16 %v3146, %v3142
    %v3963 = vpack.c.b16 %v3147, %v3143
    %v3964 = vpack.c.b16 %v3148, %v3144
    %v3965 = vpack.c.b16 %v3153, %v3149
    %v3966 = vpack.c.b16 %v3154, %v3150
    %v3967 = vpack.c.b16 %v3155, %v3151
    %v3968 = vpack.c.b16 %v3156, %v3152
    %v3969 = vpack.c.b16 %v3161, %v3157
    %v3970 = vpack.c.b16 %v3162, %v3158
    %v3971 = vpack.c.b16 %v3163, %v3159
    %v3972 = vpack.c.b16 %v3164, %v3160
    %v3973 = vpack.c.b16 %v3169, %v3165
    %v3974 = vpack.c.b16 %v3170, %v3166
    %v3975 = vpack.c.b16 %v3171, %v3167
    %v3976 = vpack.c.b16 %v3172, %v3168
    %v3977 = vpack.c.b16 %v3177, %v3173
    %v3978 = vpack.c.b16 %v3178, %v3174
    %v3979 = vpack.c.b16 %v3179, %v3175
    %v3980 = vpack.c.b16 %v3180, %v3176
    %v3981 = vpack.c.b16 %v3185, %v3181
    %v3982 = vpack.c.b16 %v3186, %v3182
    %v3983 = vpack.c.b16 %v3187, %v3183
    %v3984 = vpack.c.b16 %v3188, %v3184
    %v3985 = vpack.c.b16 %v3193, %v3189
    %v3986 = vpack.c.b16 %v3194, %v3190
    %v3987 = vpack.c.b16 %v3195, %v3191
    %v3988 = vpack.c.b16 %v3196, %v3192
    %v3989 = vpack.c.b16 %v3201, %v3197
    %v3990 = vpack.c.b16 %v3202, %v3198
    %v3991 = vpack.c.b16 %v3203, %v3199
    %v3992 = vpack.c.b16 %v3204, %v3200
    %v3993 = vpack.c.b16 %v3209, %v3205
    %v3994 = vpack.c.b16 %v3210, %v3206
    %v3995 = vpack.c.b16 %v3211, %v3207
    %v3996 = vpack.c.b16 %v3212, %v3208
    %v3997 = vpack.c.b16 %v3217, %v3213
    %v3998 = vpack.c.b16 %v3218, %v3214
    %v3999 = vpack.c.b16 %v3219, %v3215
    %v4000 = vpack.c.b16 %v3220, %v3216
    %v4001 = vpack.c.b16 %v3225, %v3221
    %v4002 = vpack.c.b16 %v3226, %v3222
    %v4003 = vpack.c.b16 %v3227, %v3223
    %v4004 = vpack.c.b16 %v3228, %v3224
    %v4005 = vpack.c.b16 %v3233, %v3229
    %v4006 = vpack.c.b16 %v3234, %v3230
    %v4007 = vpack.c.b16 %v3235, %v3231
    %v4008 = vpack.c.b16 %v3236, %v3232
    %v4009 = vpack.c.b16 %v3241, %v3237
    %v4010 = vpack.c.b16 %v3242, %v3238
    %v4011 = vpack.c.b16 %v3243, %v3239
    %v4012 = vpack.c.b16 %v3244, %v3240
    %4781 = vmatprep.subr.bf16.mxu0 %v3246
    %4782 = vmatpush1.bf16.msra.mxu0 %v3245
    %4783 = vmatprep.subr.bf16.mxu0 %v3250
    %4784 = vmatpush1.bf16.msra.mxu0 %v3249
    %4785 = vmatprep.subr.bf16.mxu0 %v3254
    %4786 = vmatpush1.bf16.msra.mxu0 %v3253
    %4787 = vmatprep.subr.bf16.mxu0 %v3258
    %4788 = vmatpush1.bf16.msra.mxu0 %v3257
    %4789 = vmatprep.subr.bf16.mxu0 %v3262
    %4790 = vmatpush1.bf16.msra.mxu0 %v3261
    %4791 = vmatprep.subr.bf16.mxu0 %v3266
    %4792 = vmatpush1.bf16.msra.mxu0 %v3265
    %4793 = vmatprep.subr.bf16.mxu0 %v3270
    %4794 = vmatpush1.bf16.msra.mxu0 %v3269
    %4795 = vmatprep.subr.bf16.mxu0 %v3274
    %4796 = vmatpush1.bf16.msra.mxu0 %v3273
    %4797 = vmatprep.subr.bf16.mxu0 %v3278
    %4798 = vmatpush1.bf16.msra.mxu0 %v3277
    %4799 = vmatprep.subr.bf16.mxu0 %v3282
    %4800 = vmatpush1.bf16.msra.mxu0 %v3281
    %4801 = vmatprep.subr.bf16.mxu0 %v3286
    %4802 = vmatpush1.bf16.msra.mxu0 %v3285
    %4803 = vmatprep.subr.bf16.mxu0 %v3290
    %4804 = vmatpush1.bf16.msra.mxu0 %v3289
    %4805 = vmatprep.subr.bf16.mxu0 %v3294
    %4806 = vmatpush1.bf16.msra.mxu0 %v3293
    %4807 = vmatprep.subr.bf16.mxu0 %v3298
    %4808 = vmatpush1.bf16.msra.mxu0 %v3297
    %4809 = vmatprep.subr.bf16.mxu0 %v3302
    %4810 = vmatpush1.bf16.msra.mxu0 %v3301
    %4811 = vmatprep.subr.bf16.mxu0 %v3306
    %4812 = vmatpush1.bf16.msra.mxu0 %v3305
    %4813 = vmatprep.mubr.bf16.mxu0 %v128
    %4814 = vmatmul.mubr.bf16.gmra.mrb[0].mxu0 %v127
    %v4815 = vpop.f32.mrb[0].mxu0
    %v4816 = vadd.f32 %v924, %v4815
    %v4817 = vpop.f32.mrb[0].mxu0
    %v4818 = vadd.f32 %v928, %v4817
    %v4819 = vpop.f32.mrb[0].mxu0
    %v4820 = vpop.f32.mrb[0].mxu0
    %4821 = vdwg.mxu0
    %4822 = vmatprep.subr.bf16.mxu0 %v3310
    %4823 = vmatpush1.bf16.msra.mxu0 %v3309
    %4824 = vmatprep.subr.bf16.mxu0 %v3314
    %4825 = vmatpush1.bf16.msra.mxu0 %v3313
    %4826 = vmatprep.subr.bf16.mxu0 %v3318
    %4827 = vmatpush1.bf16.msra.mxu0 %v3317
    %4828 = vmatprep.subr.bf16.mxu0 %v3322
    %4829 = vmatpush1.bf16.msra.mxu0 %v3321
    %4830 = vmatprep.subr.bf16.mxu0 %v3326
    %4831 = vmatpush1.bf16.msra.mxu0 %v3325
    %4832 = vmatprep.subr.bf16.mxu0 %v3330
    %4833 = vmatpush1.bf16.msra.mxu0 %v3329
    %4834 = vmatprep.subr.bf16.mxu0 %v3334
    %4835 = vmatpush1.bf16.msra.mxu0 %v3333
    %4836 = vmatprep.subr.bf16.mxu0 %v3338
    %4837 = vmatpush1.bf16.msra.mxu0 %v3337
    %4838 = vmatprep.subr.bf16.mxu0 %v3342
    %4839 = vmatpush1.bf16.msra.mxu0 %v3341
    %4840 = vmatprep.subr.bf16.mxu0 %v3346
    %4841 = vmatpush1.bf16.msra.mxu0 %v3345
    %4842 = vmatprep.subr.bf16.mxu0 %v3350
    %4843 = vmatpush1.bf16.msra.mxu0 %v3349
    %4844 = vmatprep.subr.bf16.mxu0 %v3354
    %4845 = vmatpush1.bf16.msra.mxu0 %v3353
    %4846 = vmatprep.subr.bf16.mxu0 %v3358
    %4847 = vmatpush1.bf16.msra.mxu0 %v3357
    %4848 = vmatprep.subr.bf16.mxu0 %v3362
    %4849 = vmatpush1.bf16.msra.mxu0 %v3361
    %4850 = vmatprep.subr.bf16.mxu0 %v3366
    %4851 = vmatpush1.bf16.msra.mxu0 %v3365
    %4852 = vmatprep.subr.bf16.mxu0 %v3370
    %4853 = vmatpush1.bf16.msra.mxu0 %v3369
    %4854 = vmatprep.mubr.bf16.mxu0 %v130
    %4855 = vmatmul.mubr.bf16.gmra.mrb[0].mxu0 %v129
    %v4856 = vpop.f32.mrb[0].mxu0
    %v4857 = vadd.f32 %v4816, %v4856
    %v4858 = vpop.f32.mrb[0].mxu0
    %v4859 = vadd.f32 %v4818, %v4858
    %v4860 = vpop.f32.mrb[0].mxu0
    %v4861 = vpop.f32.mrb[0].mxu0
    %4862 = vdwg.mxu0
    %4863 = vmatprep.subr.bf16.mxu0 %v3374
    %4864 = vmatpush1.bf16.msra.mxu0 %v3373
    %4865 = vmatprep.subr.bf16.mxu0 %v3378
    %4866 = vmatpush1.bf16.msra.mxu0 %v3377
    %4867 = vmatprep.subr.bf16.mxu0 %v3382
    %4868 = vmatpush1.bf16.msra.mxu0 %v3381
    %4869 = vmatprep.subr.bf16.mxu0 %v3386
    %4870 = vmatpush1.bf16.msra.mxu0 %v3385
    %4871 = vmatprep.subr.bf16.mxu0 %v3390
    %4872 = vmatpush1.bf16.msra.mxu0 %v3389
    %4873 = vmatprep.subr.bf16.mxu0 %v3394
    %4874 = vmatpush1.bf16.msra.mxu0 %v3393
    %4875 = vmatprep.subr.bf16.mxu0 %v3398
    %4876 = vmatpush1.bf16.msra.mxu0 %v3397
    %4877 = vmatprep.subr.bf16.mxu0 %v3402
    %4878 = vmatpush1.bf16.msra.mxu0 %v3401
    %4879 = vmatprep.subr.bf16.mxu0 %v3406
    %4880 = vmatpush1.bf16.msra.mxu0 %v3405
    %4881 = vmatprep.subr.bf16.mxu0 %v3410
    %4882 = vmatpush1.bf16.msra.mxu0 %v3409
    %4883 = vmatprep.subr.bf16.mxu0 %v3414
    %4884 = vmatpush1.bf16.msra.mxu0 %v3413
    %4885 = vmatprep.subr.bf16.mxu0 %v3418
    %4886 = vmatpush1.bf16.msra.mxu0 %v3417
    %4887 = vmatprep.subr.bf16.mxu0 %v3422
    %4888 = vmatpush1.bf16.msra.mxu0 %v3421
    %4889 = vmatprep.subr.bf16.mxu0 %v3426
    %4890 = vmatpush1.bf16.msra.mxu0 %v3425
    %4891 = vmatprep.subr.bf16.mxu0 %v3430
    %4892 = vmatpush1.bf16.msra.mxu0 %v3429
    %4893 = vmatprep.subr.bf16.mxu0 %v3434
    %4894 = vmatpush1.bf16.msra.mxu0 %v3433
    %4895 = vmatprep.mubr.bf16.mxu0 %v132
    %4896 = vmatmul.mubr.bf16.gmra.mrb[0].mxu0 %v131
    %v4897 = vpop.f32.mrb[0].mxu0
    %v4898 = vadd.f32 %v4857, %v4897
    %v4899 = vpop.f32.mrb[0].mxu0
    %v4900 = vadd.f32 %v4859, %v4899
    %v4901 = vpop.f32.mrb[0].mxu0
    %v4902 = vpop.f32.mrb[0].mxu0
    %4903 = vdwg.mxu0
    %4904 = vmatprep.subr.bf16.mxu0 %v3438
    %4905 = vmatpush1.bf16.msra.mxu0 %v3437
    %4906 = vmatprep.subr.bf16.mxu0 %v3442
    %4907 = vmatpush1.bf16.msra.mxu0 %v3441
    %4908 = vmatprep.subr.bf16.mxu0 %v3446
    %4909 = vmatpush1.bf16.msra.mxu0 %v3445
    %4910 = vmatprep.subr.bf16.mxu0 %v3450
    %4911 = vmatpush1.bf16.msra.mxu0 %v3449
    %4912 = vmatprep.subr.bf16.mxu0 %v3454
    %4913 = vmatpush1.bf16.msra.mxu0 %v3453
    %4914 = vmatprep.subr.bf16.mxu0 %v3458
    %4915 = vmatpush1.bf16.msra.mxu0 %v3457
    %4916 = vmatprep.subr.bf16.mxu0 %v3462
    %4917 = vmatpush1.bf16.msra.mxu0 %v3461
    %4918 = vmatprep.subr.bf16.mxu0 %v3466
    %4919 = vmatpush1.bf16.msra.mxu0 %v3465
    %4920 = vmatprep.subr.bf16.mxu0 %v3470
    %4921 = vmatpush1.bf16.msra.mxu0 %v3469
    %4922 = vmatprep.subr.bf16.mxu0 %v3474
    %4923 = vmatpush1.bf16.msra.mxu0 %v3473
    %4924 = vmatprep.subr.bf16.mxu0 %v3478
    %4925 = vmatpush1.bf16.msra.mxu0 %v3477
    %4926 = vmatprep.subr.bf16.mxu0 %v3482
    %4927 = vmatpush1.bf16.msra.mxu0 %v3481
    %4928 = vmatprep.subr.bf16.mxu0 %v3486
    %4929 = vmatpush1.bf16.msra.mxu0 %v3485
    %4930 = vmatprep.subr.bf16.mxu0 %v3490
    %4931 = vmatpush1.bf16.msra.mxu0 %v3489
    %4932 = vmatprep.subr.bf16.mxu0 %v3494
    %4933 = vmatpush1.bf16.msra.mxu0 %v3493
    %4934 = vmatprep.subr.bf16.mxu0 %v3498
    %4935 = vmatpush1.bf16.msra.mxu0 %v3497
    %4936 = vmatprep.mubr.bf16.mxu0 %v134
    %4937 = vmatmul.mubr.bf16.gmra.mrb[0].mxu0 %v133
    %v4938 = vpop.f32.mrb[0].mxu0
    %v4939 = vadd.f32 %v4898, %v4938
    %v4940 = vpop.f32.mrb[0].mxu0
    %v4941 = vadd.f32 %v4900, %v4940
    %v4942 = vpop.f32.mrb[0].mxu0
    %v4943 = vpop.f32.mrb[0].mxu0
    %4944 = vdwg.mxu0
    %4945 = vmatprep.subr.bf16.mxu0 %v3502
    %4946 = vmatpush1.bf16.msra.mxu0 %v3501
    %4947 = vmatprep.subr.bf16.mxu0 %v3506
    %4948 = vmatpush1.bf16.msra.mxu0 %v3505
    %4949 = vmatprep.subr.bf16.mxu0 %v3510
    %4950 = vmatpush1.bf16.msra.mxu0 %v3509
    %4951 = vmatprep.subr.bf16.mxu0 %v3514
    %4952 = vmatpush1.bf16.msra.mxu0 %v3513
    %4953 = vmatprep.subr.bf16.mxu0 %v3518
    %4954 = vmatpush1.bf16.msra.mxu0 %v3517
    %4955 = vmatprep.subr.bf16.mxu0 %v3522
    %4956 = vmatpush1.bf16.msra.mxu0 %v3521
    %4957 = vmatprep.subr.bf16.mxu0 %v3526
    %4958 = vmatpush1.bf16.msra.mxu0 %v3525
    %4959 = vmatprep.subr.bf16.mxu0 %v3530
    %4960 = vmatpush1.bf16.msra.mxu0 %v3529
    %4961 = vmatprep.subr.bf16.mxu0 %v3534
    %4962 = vmatpush1.bf16.msra.mxu0 %v3533
    %4963 = vmatprep.subr.bf16.mxu0 %v3538
    %4964 = vmatpush1.bf16.msra.mxu0 %v3537
    %4965 = vmatprep.subr.bf16.mxu0 %v3542
    %4966 = vmatpush1.bf16.msra.mxu0 %v3541
    %4967 = vmatprep.subr.bf16.mxu0 %v3546
    %4968 = vmatpush1.bf16.msra.mxu0 %v3545
    %4969 = vmatprep.subr.bf16.mxu0 %v3550
    %4970 = vmatpush1.bf16.msra.mxu0 %v3549
    %4971 = vmatprep.subr.bf16.mxu0 %v3554
    %4972 = vmatpush1.bf16.msra.mxu0 %v3553
    %4973 = vmatprep.subr.bf16.mxu0 %v3558
    %4974 = vmatpush1.bf16.msra.mxu0 %v3557
    %4975 = vmatprep.subr.bf16.mxu0 %v3562
    %4976 = vmatpush1.bf16.msra.mxu0 %v3561
    %4977 = vmatprep.mubr.bf16.mxu0 %v136
    %4978 = vmatmul.mubr.bf16.gmra.mrb[0].mxu0 %v135
    %v4979 = vpop.f32.mrb[0].mxu0
    %v4980 = vadd.f32 %v4939, %v4979
    %v4981 = vpop.f32.mrb[0].mxu0
    %v4982 = vadd.f32 %v4941, %v4981
    %v4983 = vpop.f32.mrb[0].mxu0
    %v4984 = vpop.f32.mrb[0].mxu0
    %4985 = vdwg.mxu0
    %4986 = vmatprep.subr.bf16.mxu0 %v3566
    %4987 = vmatpush1.bf16.msra.mxu0 %v3565
    %4988 = vmatprep.subr.bf16.mxu0 %v3570
    %4989 = vmatpush1.bf16.msra.mxu0 %v3569
    %4990 = vmatprep.subr.bf16.mxu0 %v3574
    %4991 = vmatpush1.bf16.msra.mxu0 %v3573
    %4992 = vmatprep.subr.bf16.mxu0 %v3578
    %4993 = vmatpush1.bf16.msra.mxu0 %v3577
    %4994 = vmatprep.subr.bf16.mxu0 %v3582
    %4995 = vmatpush1.bf16.msra.mxu0 %v3581
    %4996 = vmatprep.subr.bf16.mxu0 %v3586
    %4997 = vmatpush1.bf16.msra.mxu0 %v3585
    %4998 = vmatprep.subr.bf16.mxu0 %v3590
    %4999 = vmatpush1.bf16.msra.mxu0 %v3589
    %5000 = vmatprep.subr.bf16.mxu0 %v3594
    %5001 = vmatpush1.bf16.msra.mxu0 %v3593
    %5002 = vmatprep.subr.bf16.mxu0 %v3598
    %5003 = vmatpush1.bf16.msra.mxu0 %v3597
    %5004 = vmatprep.subr.bf16.mxu0 %v3602
    %5005 = vmatpush1.bf16.msra.mxu0 %v3601
    %5006 = vmatprep.subr.bf16.mxu0 %v3606
    %5007 = vmatpush1.bf16.msra.mxu0 %v3605
    %5008 = vmatprep.subr.bf16.mxu0 %v3610
    %5009 = vmatpush1.bf16.msra.mxu0 %v3609
    %5010 = vmatprep.subr.bf16.mxu0 %v3614
    %5011 = vmatpush1.bf16.msra.mxu0 %v3613
    %5012 = vmatprep.subr.bf16.mxu0 %v3618
    %5013 = vmatpush1.bf16.msra.mxu0 %v3617
    %5014 = vmatprep.subr.bf16.mxu0 %v3622
    %5015 = vmatpush1.bf16.msra.mxu0 %v3621
    %5016 = vmatprep.subr.bf16.mxu0 %v3626
    %5017 = vmatpush1.bf16.msra.mxu0 %v3625
    %5018 = vmatprep.mubr.bf16.mxu0 %v138
    %5019 = vmatmul.mubr.bf16.gmra.mrb[0].mxu0 %v137
    %v5020 = vpop.f32.mrb[0].mxu0
    %v5021 = vadd.f32 %v4980, %v5020
    %v5022 = vpop.f32.mrb[0].mxu0
    %v5023 = vadd.f32 %v4982, %v5022
    %v5024 = vpop.f32.mrb[0].mxu0
    %v5025 = vpop.f32.mrb[0].mxu0
    %5026 = vdwg.mxu0
    %5027 = vmatprep.subr.bf16.mxu0 %v3630
    %5028 = vmatpush1.bf16.msra.mxu0 %v3629
    %5029 = vmatprep.subr.bf16.mxu0 %v3634
    %5030 = vmatpush1.bf16.msra.mxu0 %v3633
    %5031 = vmatprep.subr.bf16.mxu0 %v3638
    %5032 = vmatpush1.bf16.msra.mxu0 %v3637
    %5033 = vmatprep.subr.bf16.mxu0 %v3642
    %5034 = vmatpush1.bf16.msra.mxu0 %v3641
    %5035 = vmatprep.subr.bf16.mxu0 %v3646
    %5036 = vmatpush1.bf16.msra.mxu0 %v3645
    %5037 = vmatprep.subr.bf16.mxu0 %v3650
    %5038 = vmatpush1.bf16.msra.mxu0 %v3649
    %5039 = vmatprep.subr.bf16.mxu0 %v3654
    %5040 = vmatpush1.bf16.msra.mxu0 %v3653
    %5041 = vmatprep.subr.bf16.mxu0 %v3658
    %5042 = vmatpush1.bf16.msra.mxu0 %v3657
    %5043 = vmatprep.subr.bf16.mxu0 %v3662
    %5044 = vmatpush1.bf16.msra.mxu0 %v3661
    %5045 = vmatprep.subr.bf16.mxu0 %v3666
    %5046 = vmatpush1.bf16.msra.mxu0 %v3665
    %5047 = vmatprep.subr.bf16.mxu0 %v3670
    %5048 = vmatpush1.bf16.msra.mxu0 %v3669
    %5049 = vmatprep.subr.bf16.mxu0 %v3674
    %5050 = vmatpush1.bf16.msra.mxu0 %v3673
    %5051 = vmatprep.subr.bf16.mxu0 %v3678
    %5052 = vmatpush1.bf16.msra.mxu0 %v3677
    %5053 = vmatprep.subr.bf16.mxu0 %v3682
    %5054 = vmatpush1.bf16.msra.mxu0 %v3681
    %5055 = vmatprep.subr.bf16.mxu0 %v3686
    %5056 = vmatpush1.bf16.msra.mxu0 %v3685
    %5057 = vmatprep.subr.bf16.mxu0 %v3690
    %5058 = vmatpush1.bf16.msra.mxu0 %v3689
    %5059 = vmatprep.mubr.bf16.mxu0 %v140
    %5060 = vmatmul.mubr.bf16.gmra.mrb[0].mxu0 %v139
    %v5061 = vpop.f32.mrb[0].mxu0
    %v5062 = vadd.f32 %v5021, %v5061
    %v5063 = vpop.f32.mrb[0].mxu0
    %v5064 = vadd.f32 %v5023, %v5063
    %v5065 = vpop.f32.mrb[0].mxu0
    %v5066 = vpop.f32.mrb[0].mxu0
    %5067 = vdwg.mxu0
    %5068 = vmatprep.subr.bf16.mxu0 %v3694
    %5069 = vmatpush1.bf16.msra.mxu0 %v3693
    %5070 = vmatprep.subr.bf16.mxu0 %v3698
    %5071 = vmatpush1.bf16.msra.mxu0 %v3697
    %5072 = vmatprep.subr.bf16.mxu0 %v3702
    %5073 = vmatpush1.bf16.msra.mxu0 %v3701
    %5074 = vmatprep.subr.bf16.mxu0 %v3706
    %5075 = vmatpush1.bf16.msra.mxu0 %v3705
    %5076 = vmatprep.subr.bf16.mxu0 %v3710
    %5077 = vmatpush1.bf16.msra.mxu0 %v3709
    %5078 = vmatprep.subr.bf16.mxu0 %v3714
    %5079 = vmatpush1.bf16.msra.mxu0 %v3713
    %5080 = vmatprep.subr.bf16.mxu0 %v3718
    %5081 = vmatpush1.bf16.msra.mxu0 %v3717
    %5082 = vmatprep.subr.bf16.mxu0 %v3722
    %5083 = vmatpush1.bf16.msra.mxu0 %v3721
    %5084 = vmatprep.subr.bf16.mxu0 %v3726
    %5085 = vmatpush1.bf16.msra.mxu0 %v3725
    %5086 = vmatprep.subr.bf16.mxu0 %v3730
    %5087 = vmatpush1.bf16.msra.mxu0 %v3729
    %5088 = vmatprep.subr.bf16.mxu0 %v3734
    %5089 = vmatpush1.bf16.msra.mxu0 %v3733
    %5090 = vmatprep.subr.bf16.mxu0 %v3738
    %5091 = vmatpush1.bf16.msra.mxu0 %v3737
    %5092 = vmatprep.subr.bf16.mxu0 %v3742
    %5093 = vmatpush1.bf16.msra.mxu0 %v3741
    %5094 = vmatprep.subr.bf16.mxu0 %v3746
    %5095 = vmatpush1.bf16.msra.mxu0 %v3745
    %5096 = vmatprep.subr.bf16.mxu0 %v3750
    %5097 = vmatpush1.bf16.msra.mxu0 %v3749
    %5098 = vmatprep.subr.bf16.mxu0 %v3754
    %5099 = vmatpush1.bf16.msra.mxu0 %v3753
    %5100 = vmatprep.mubr.bf16.mxu0 %v142
    %5101 = vmatmul.mubr.bf16.gmra.mrb[0].mxu0 %v141
    %v5102 = vpop.f32.mrb[0].mxu0
    %v5103 = vadd.f32 %v5062, %v5102
    %v5104 = vpop.f32.mrb[0].mxu0
    %v5105 = vadd.f32 %v5064, %v5104
    %v5106 = vpop.f32.mrb[0].mxu0
    %v5107 = vpop.f32.mrb[0].mxu0
    %5108 = vdwg.mxu0
    %5109 = vmatprep.subr.bf16.mxu0 %v3758
    %5110 = vmatpush1.bf16.msra.mxu0 %v3757
    %5111 = vmatprep.subr.bf16.mxu0 %v3762
    %5112 = vmatpush1.bf16.msra.mxu0 %v3761
    %5113 = vmatprep.subr.bf16.mxu0 %v3766
    %5114 = vmatpush1.bf16.msra.mxu0 %v3765
    %5115 = vmatprep.subr.bf16.mxu0 %v3770
    %5116 = vmatpush1.bf16.msra.mxu0 %v3769
    %5117 = vmatprep.subr.bf16.mxu0 %v3774
    %5118 = vmatpush1.bf16.msra.mxu0 %v3773
    %5119 = vmatprep.subr.bf16.mxu0 %v3778
    %5120 = vmatpush1.bf16.msra.mxu0 %v3777
    %5121 = vmatprep.subr.bf16.mxu0 %v3782
    %5122 = vmatpush1.bf16.msra.mxu0 %v3781
    %5123 = vmatprep.subr.bf16.mxu0 %v3786
    %5124 = vmatpush1.bf16.msra.mxu0 %v3785
    %5125 = vmatprep.subr.bf16.mxu0 %v3790
    %5126 = vmatpush1.bf16.msra.mxu0 %v3789
    %5127 = vmatprep.subr.bf16.mxu0 %v3794
    %5128 = vmatpush1.bf16.msra.mxu0 %v3793
    %5129 = vmatprep.subr.bf16.mxu0 %v3798
    %5130 = vmatpush1.bf16.msra.mxu0 %v3797
    %5131 = vmatprep.subr.bf16.mxu0 %v3802
    %5132 = vmatpush1.bf16.msra.mxu0 %v3801
    %5133 = vmatprep.subr.bf16.mxu0 %v3806
    %5134 = vmatpush1.bf16.msra.mxu0 %v3805
    %5135 = vmatprep.subr.bf16.mxu0 %v3810
    %5136 = vmatpush1.bf16.msra.mxu0 %v3809
    %5137 = vmatprep.subr.bf16.mxu0 %v3814
    %5138 = vmatpush1.bf16.msra.mxu0 %v3813
    %5139 = vmatprep.subr.bf16.mxu0 %v3818
    %5140 = vmatpush1.bf16.msra.mxu0 %v3817
    %5141 = vmatprep.mubr.bf16.mxu0 %v144
    %5142 = vmatmul.mubr.bf16.gmra.mrb[0].mxu0 %v143
    %v5143 = vpop.f32.mrb[0].mxu0
    %v5144 = vadd.f32 %v5103, %v5143
    %v5145 = vpop.f32.mrb[0].mxu0
    %v5146 = vadd.f32 %v5105, %v5145
    %v5147 = vpop.f32.mrb[0].mxu0
    %v5148 = vpop.f32.mrb[0].mxu0
    %5149 = vdwg.mxu0
    %5150 = vmatprep.subr.bf16.mxu0 %v3822
    %5151 = vmatpush1.bf16.msra.mxu0 %v3821
    %5152 = vmatprep.subr.bf16.mxu0 %v3826
    %5153 = vmatpush1.bf16.msra.mxu0 %v3825
    %5154 = vmatprep.subr.bf16.mxu0 %v3830
    %5155 = vmatpush1.bf16.msra.mxu0 %v3829
    %5156 = vmatprep.subr.bf16.mxu0 %v3834
    %5157 = vmatpush1.bf16.msra.mxu0 %v3833
    %5158 = vmatprep.subr.bf16.mxu0 %v3838
    %5159 = vmatpush1.bf16.msra.mxu0 %v3837
    %5160 = vmatprep.subr.bf16.mxu0 %v3842
    %5161 = vmatpush1.bf16.msra.mxu0 %v3841
    %5162 = vmatprep.subr.bf16.mxu0 %v3846
    %5163 = vmatpush1.bf16.msra.mxu0 %v3845
    %5164 = vmatprep.subr.bf16.mxu0 %v3850
    %5165 = vmatpush1.bf16.msra.mxu0 %v3849
    %5166 = vmatprep.subr.bf16.mxu0 %v3854
    %5167 = vmatpush1.bf16.msra.mxu0 %v3853
    %5168 = vmatprep.subr.bf16.mxu0 %v3858
    %5169 = vmatpush1.bf16.msra.mxu0 %v3857
    %5170 = vmatprep.subr.bf16.mxu0 %v3862
    %5171 = vmatpush1.bf16.msra.mxu0 %v3861
    %5172 = vmatprep.subr.bf16.mxu0 %v3866
    %5173 = vmatpush1.bf16.msra.mxu0 %v3865
    %5174 = vmatprep.subr.bf16.mxu0 %v3870
    %5175 = vmatpush1.bf16.msra.mxu0 %v3869
    %5176 = vmatprep.subr.bf16.mxu0 %v3874
    %5177 = vmatpush1.bf16.msra.mxu0 %v3873
    %5178 = vmatprep.subr.bf16.mxu0 %v3878
    %5179 = vmatpush1.bf16.msra.mxu0 %v3877
    %5180 = vmatprep.subr.bf16.mxu0 %v3882
    %5181 = vmatpush1.bf16.msra.mxu0 %v3881
    %5182 = vmatprep.mubr.bf16.mxu0 %v146
    %5183 = vmatmul.mubr.bf16.gmra.mrb[0].mxu0 %v145
    %v5184 = vpop.f32.mrb[0].mxu0
    %v5185 = vadd.f32 %v5144, %v5184
    %v5186 = vpop.f32.mrb[0].mxu0
    %v5187 = vadd.f32 %v5146, %v5186
    %v5188 = vpop.f32.mrb[0].mxu0
    %v5189 = vpop.f32.mrb[0].mxu0
    %5190 = vdwg.mxu0
    %5191 = vmatprep.subr.bf16.mxu0 %v3886
    %5192 = vmatpush1.bf16.msra.mxu0 %v3885
    %5193 = vmatprep.subr.bf16.mxu0 %v3890
    %5194 = vmatpush1.bf16.msra.mxu0 %v3889
    %5195 = vmatprep.subr.bf16.mxu0 %v3894
    %5196 = vmatpush1.bf16.msra.mxu0 %v3893
    %5197 = vmatprep.subr.bf16.mxu0 %v3898
    %5198 = vmatpush1.bf16.msra.mxu0 %v3897
    %5199 = vmatprep.subr.bf16.mxu0 %v3902
    %5200 = vmatpush1.bf16.msra.mxu0 %v3901
    %5201 = vmatprep.subr.bf16.mxu0 %v3906
    %5202 = vmatpush1.bf16.msra.mxu0 %v3905
    %5203 = vmatprep.subr.bf16.mxu0 %v3910
    %5204 = vmatpush1.bf16.msra.mxu0 %v3909
    %5205 = vmatprep.subr.bf16.mxu0 %v3914
    %5206 = vmatpush1.bf16.msra.mxu0 %v3913
    %5207 = vmatprep.subr.bf16.mxu0 %v3918
    %5208 = vmatpush1.bf16.msra.mxu0 %v3917
    %5209 = vmatprep.subr.bf16.mxu0 %v3922
    %5210 = vmatpush1.bf16.msra.mxu0 %v3921
    %5211 = vmatprep.subr.bf16.mxu0 %v3926
    %5212 = vmatpush1.bf16.msra.mxu0 %v3925
    %5213 = vmatprep.subr.bf16.mxu0 %v3930
    %5214 = vmatpush1.bf16.msra.mxu0 %v3929
    %5215 = vmatprep.subr.bf16.mxu0 %v3934
    %5216 = vmatpush1.bf16.msra.mxu0 %v3933
    %5217 = vmatprep.subr.bf16.mxu0 %v3938
    %5218 = vmatpush1.bf16.msra.mxu0 %v3937
    %5219 = vmatprep.subr.bf16.mxu0 %v3942
    %5220 = vmatpush1.bf16.msra.mxu0 %v3941
    %5221 = vmatprep.subr.bf16.mxu0 %v3946
    %5222 = vmatpush1.bf16.msra.mxu0 %v3945
    %5223 = vmatprep.mubr.bf16.mxu0 %v148
    %5224 = vmatmul.mubr.bf16.gmra.mrb[0].mxu0 %v147
    %v5225 = vpop.f32.mrb[0].mxu0
    %v5226 = vadd.f32 %v5185, %v5225
    %v5227 = vpop.f32.mrb[0].mxu0
    %v5228 = vadd.f32 %v5187, %v5227
    %v5229 = vpop.f32.mrb[0].mxu0
    %v5230 = vpop.f32.mrb[0].mxu0
    %5231 = vdwg.mxu0
    %5232 = vmatprep.subr.bf16.mxu0 %v3950
    %5233 = vmatpush1.bf16.msra.mxu0 %v3949
    %5234 = vmatprep.subr.bf16.mxu0 %v3954
    %5235 = vmatpush1.bf16.msra.mxu0 %v3953
    %5236 = vmatprep.subr.bf16.mxu0 %v3958
    %5237 = vmatpush1.bf16.msra.mxu0 %v3957
    %5238 = vmatprep.subr.bf16.mxu0 %v3962
    %5239 = vmatpush1.bf16.msra.mxu0 %v3961
    %5240 = vmatprep.subr.bf16.mxu0 %v3966
    %5241 = vmatpush1.bf16.msra.mxu0 %v3965
    %5242 = vmatprep.subr.bf16.mxu0 %v3970
    %5243 = vmatpush1.bf16.msra.mxu0 %v3969
    %5244 = vmatprep.subr.bf16.mxu0 %v3974
    %5245 = vmatpush1.bf16.msra.mxu0 %v3973
    %5246 = vmatprep.subr.bf16.mxu0 %v3978
    %5247 = vmatpush1.bf16.msra.mxu0 %v3977
    %5248 = vmatprep.subr.bf16.mxu0 %v3982
    %5249 = vmatpush1.bf16.msra.mxu0 %v3981
    %5250 = vmatprep.subr.bf16.mxu0 %v3986
    %5251 = vmatpush1.bf16.msra.mxu0 %v3985
    %5252 = vmatprep.subr.bf16.mxu0 %v3990
    %5253 = vmatpush1.bf16.msra.mxu0 %v3989
    %5254 = vmatprep.subr.bf16.mxu0 %v3994
    %5255 = vmatpush1.bf16.msra.mxu0 %v3993
    %5256 = vmatprep.subr.bf16.mxu0 %v3998
    %5257 = vmatpush1.bf16.msra.mxu0 %v3997
    %5258 = vmatprep.subr.bf16.mxu0 %v4002
    %5259 = vmatpush1.bf16.msra.mxu0 %v4001
    %5260 = vmatprep.subr.bf16.mxu0 %v4006
    %5261 = vmatpush1.bf16.msra.mxu0 %v4005
    %5262 = vmatprep.subr.bf16.mxu0 %v4010
    %5263 = vmatpush1.bf16.msra.mxu0 %v4009
    %5264 = vmatprep.mubr.bf16.mxu0 %v150
    %5265 = vmatmul.mubr.bf16.gmra.mrb[0].mxu0 %v149
    %v5266 = vpop.f32.mrb[0].mxu0
    %v5267 = vadd.f32 %v5226, %v5266
    %v5268 = vpop.f32.mrb[0].mxu0
    %v5269 = vadd.f32 %v5228, %v5268
    %v5270 = vpop.f32.mrb[0].mxu0
    %v5271 = vpop.f32.mrb[0].mxu0
    %5272 = vdwg.mxu0
    %5273 = vmatprep.subr.bf16.mxu0 %v3248
    %5274 = vmatpush1.bf16.msra.mxu0 %v3247
    %5275 = vmatprep.subr.bf16.mxu0 %v3252
    %5276 = vmatpush1.bf16.msra.mxu0 %v3251
    %5277 = vmatprep.subr.bf16.mxu0 %v3256
    %5278 = vmatpush1.bf16.msra.mxu0 %v3255
    %5279 = vmatprep.subr.bf16.mxu0 %v3260
    %5280 = vmatpush1.bf16.msra.mxu0 %v3259
    %5281 = vmatprep.subr.bf16.mxu0 %v3264
    %5282 = vmatpush1.bf16.msra.mxu0 %v3263
    %5283 = vmatprep.subr.bf16.mxu0 %v3268
    %5284 = vmatpush1.bf16.msra.mxu0 %v3267
    %5285 = vmatprep.subr.bf16.mxu0 %v3272
    %5286 = vmatpush1.bf16.msra.mxu0 %v3271
    %5287 = vmatprep.subr.bf16.mxu0 %v3276
    %5288 = vmatpush1.bf16.msra.mxu0 %v3275
    %5289 = vmatprep.subr.bf16.mxu0 %v3280
    %5290 = vmatpush1.bf16.msra.mxu0 %v3279
    %5291 = vmatprep.subr.bf16.mxu0 %v3284
    %5292 = vmatpush1.bf16.msra.mxu0 %v3283
    %5293 = vmatprep.subr.bf16.mxu0 %v3288
    %5294 = vmatpush1.bf16.msra.mxu0 %v3287
    %5295 = vmatprep.subr.bf16.mxu0 %v3292
    %5296 = vmatpush1.bf16.msra.mxu0 %v3291
    %5297 = vmatprep.subr.bf16.mxu0 %v3296
    %5298 = vmatpush1.bf16.msra.mxu0 %v3295
    %5299 = vmatprep.subr.bf16.mxu0 %v3300
    %5300 = vmatpush1.bf16.msra.mxu0 %v3299
    %5301 = vmatprep.subr.bf16.mxu0 %v3304
    %5302 = vmatpush1.bf16.msra.mxu0 %v3303
    %5303 = vmatprep.subr.bf16.mxu0 %v3308
    %5304 = vmatpush1.bf16.msra.mxu0 %v3307
    %5305 = vmatprep.mubr.bf16.mxu0 %v128
    %5306 = vmatmul.mubr.bf16.gmra.mrb[0].mxu0 %v127
    %v5307 = vpop.f32.mrb[0].mxu0
    %v5308 = vadd.f32 %v932, %v5307
    %v5309 = vpop.f32.mrb[0].mxu0
    %v5310 = vadd.f32 %v936, %v5309
    %v5311 = vpop.f32.mrb[0].mxu0
    %v5312 = vpop.f32.mrb[0].mxu0
    %5313 = vdwg.mxu0
    %5314 = vmatprep.subr.bf16.mxu0 %v3312
    %5315 = vmatpush1.bf16.msra.mxu0 %v3311
    %5316 = vmatprep.subr.bf16.mxu0 %v3316
    %5317 = vmatpush1.bf16.msra.mxu0 %v3315
    %5318 = vmatprep.subr.bf16.mxu0 %v3320
    %5319 = vmatpush1.bf16.msra.mxu0 %v3319
    %5320 = vmatprep.subr.bf16.mxu0 %v3324
    %5321 = vmatpush1.bf16.msra.mxu0 %v3323
    %5322 = vmatprep.subr.bf16.mxu0 %v3328
    %5323 = vmatpush1.bf16.msra.mxu0 %v3327
    %5324 = vmatprep.subr.bf16.mxu0 %v3332
    %5325 = vmatpush1.bf16.msra.mxu0 %v3331
    %5326 = vmatprep.subr.bf16.mxu0 %v3336
    %5327 = vmatpush1.bf16.msra.mxu0 %v3335
    %5328 = vmatprep.subr.bf16.mxu0 %v3340
    %5329 = vmatpush1.bf16.msra.mxu0 %v3339
    %5330 = vmatprep.subr.bf16.mxu0 %v3344
    %5331 = vmatpush1.bf16.msra.mxu0 %v3343
    %5332 = vmatprep.subr.bf16.mxu0 %v3348
    %5333 = vmatpush1.bf16.msra.mxu0 %v3347
    %5334 = vmatprep.subr.bf16.mxu0 %v3352
    %5335 = vmatpush1.bf16.msra.mxu0 %v3351
    %5336 = vmatprep.subr.bf16.mxu0 %v3356
    %5337 = vmatpush1.bf16.msra.mxu0 %v3355
    %5338 = vmatprep.subr.bf16.mxu0 %v3360
    %5339 = vmatpush1.bf16.msra.mxu0 %v3359
    %5340 = vmatprep.subr.bf16.mxu0 %v3364
    %5341 = vmatpush1.bf16.msra.mxu0 %v3363
    %5342 = vmatprep.subr.bf16.mxu0 %v3368
    %5343 = vmatpush1.bf16.msra.mxu0 %v3367
    %5344 = vmatprep.subr.bf16.mxu0 %v3372
    %5345 = vmatpush1.bf16.msra.mxu0 %v3371
    %5346 = vmatprep.mubr.bf16.mxu0 %v130
    %5347 = vmatmul.mubr.bf16.gmra.mrb[0].mxu0 %v129
    %v5348 = vpop.f32.mrb[0].mxu0
    %v5349 = vadd.f32 %v5308, %v5348
    %v5350 = vpop.f32.mrb[0].mxu0
    %v5351 = vadd.f32 %v5310, %v5350
    %v5352 = vpop.f32.mrb[0].mxu0
    %v5353 = vpop.f32.mrb[0].mxu0
    %5354 = vdwg.mxu0
    %5355 = vmatprep.subr.bf16.mxu0 %v3376
    %5356 = vmatpush1.bf16.msra.mxu0 %v3375
    %5357 = vmatprep.subr.bf16.mxu0 %v3380
    %5358 = vmatpush1.bf16.msra.mxu0 %v3379
    %5359 = vmatprep.subr.bf16.mxu0 %v3384
    %5360 = vmatpush1.bf16.msra.mxu0 %v3383
    %5361 = vmatprep.subr.bf16.mxu0 %v3388
    %5362 = vmatpush1.bf16.msra.mxu0 %v3387
    %5363 = vmatprep.subr.bf16.mxu0 %v3392
    %5364 = vmatpush1.bf16.msra.mxu0 %v3391
    %5365 = vmatprep.subr.bf16.mxu0 %v3396
    %5366 = vmatpush1.bf16.msra.mxu0 %v3395
    %5367 = vmatprep.subr.bf16.mxu0 %v3400
    %5368 = vmatpush1.bf16.msra.mxu0 %v3399
    %5369 = vmatprep.subr.bf16.mxu0 %v3404
    %5370 = vmatpush1.bf16.msra.mxu0 %v3403
    %5371 = vmatprep.subr.bf16.mxu0 %v3408
    %5372 = vmatpush1.bf16.msra.mxu0 %v3407
    %5373 = vmatprep.subr.bf16.mxu0 %v3412
    %5374 = vmatpush1.bf16.msra.mxu0 %v3411
    %5375 = vmatprep.subr.bf16.mxu0 %v3416
    %5376 = vmatpush1.bf16.msra.mxu0 %v3415
    %5377 = vmatprep.subr.bf16.mxu0 %v3420
    %5378 = vmatpush1.bf16.msra.mxu0 %v3419
    %5379 = vmatprep.subr.bf16.mxu0 %v3424
    %5380 = vmatpush1.bf16.msra.mxu0 %v3423
    %5381 = vmatprep.subr.bf16.mxu0 %v3428
    %5382 = vmatpush1.bf16.msra.mxu0 %v3427
    %5383 = vmatprep.subr.bf16.mxu0 %v3432
    %5384 = vmatpush1.bf16.msra.mxu0 %v3431
    %5385 = vmatprep.subr.bf16.mxu0 %v3436
    %5386 = vmatpush1.bf16.msra.mxu0 %v3435
    %5387 = vmatprep.mubr.bf16.mxu0 %v132
    %5388 = vmatmul.mubr.bf16.gmra.mrb[0].mxu0 %v131
    %v5389 = vpop.f32.mrb[0].mxu0
    %v5390 = vadd.f32 %v5349, %v5389
    %v5391 = vpop.f32.mrb[0].mxu0
    %v5392 = vadd.f32 %v5351, %v5391
    %v5393 = vpop.f32.mrb[0].mxu0
    %v5394 = vpop.f32.mrb[0].mxu0
    %5395 = vdwg.mxu0
    %5396 = vmatprep.subr.bf16.mxu0 %v3440
    %5397 = vmatpush1.bf16.msra.mxu0 %v3439
    %5398 = vmatprep.subr.bf16.mxu0 %v3444
    %5399 = vmatpush1.bf16.msra.mxu0 %v3443
    %5400 = vmatprep.subr.bf16.mxu0 %v3448
    %5401 = vmatpush1.bf16.msra.mxu0 %v3447
    %5402 = vmatprep.subr.bf16.mxu0 %v3452
    %5403 = vmatpush1.bf16.msra.mxu0 %v3451
    %5404 = vmatprep.subr.bf16.mxu0 %v3456
    %5405 = vmatpush1.bf16.msra.mxu0 %v3455
    %5406 = vmatprep.subr.bf16.mxu0 %v3460
    %5407 = vmatpush1.bf16.msra.mxu0 %v3459
    %5408 = vmatprep.subr.bf16.mxu0 %v3464
    %5409 = vmatpush1.bf16.msra.mxu0 %v3463
    %5410 = vmatprep.subr.bf16.mxu0 %v3468
    %5411 = vmatpush1.bf16.msra.mxu0 %v3467
    %5412 = vmatprep.subr.bf16.mxu0 %v3472
    %5413 = vmatpush1.bf16.msra.mxu0 %v3471
    %5414 = vmatprep.subr.bf16.mxu0 %v3476
    %5415 = vmatpush1.bf16.msra.mxu0 %v3475
    %5416 = vmatprep.subr.bf16.mxu0 %v3480
    %5417 = vmatpush1.bf16.msra.mxu0 %v3479
    %5418 = vmatprep.subr.bf16.mxu0 %v3484
    %5419 = vmatpush1.bf16.msra.mxu0 %v3483
    %5420 = vmatprep.subr.bf16.mxu0 %v3488
    %5421 = vmatpush1.bf16.msra.mxu0 %v3487
    %5422 = vmatprep.subr.bf16.mxu0 %v3492
    %5423 = vmatpush1.bf16.msra.mxu0 %v3491
    %5424 = vmatprep.subr.bf16.mxu0 %v3496
    %5425 = vmatpush1.bf16.msra.mxu0 %v3495
    %5426 = vmatprep.subr.bf16.mxu0 %v3500
    %5427 = vmatpush1.bf16.msra.mxu0 %v3499
    %5428 = vmatprep.mubr.bf16.mxu0 %v134
    %5429 = vmatmul.mubr.bf16.gmra.mrb[0].mxu0 %v133
    %v5430 = vpop.f32.mrb[0].mxu0
    %v5431 = vadd.f32 %v5390, %v5430
    %v5432 = vpop.f32.mrb[0].mxu0
    %v5433 = vadd.f32 %v5392, %v5432
    %v5434 = vpop.f32.mrb[0].mxu0
    %v5435 = vpop.f32.mrb[0].mxu0
    %5436 = vdwg.mxu0
    %5437 = vmatprep.subr.bf16.mxu0 %v3504
    %5438 = vmatpush1.bf16.msra.mxu0 %v3503
    %5439 = vmatprep.subr.bf16.mxu0 %v3508
    %5440 = vmatpush1.bf16.msra.mxu0 %v3507
    %5441 = vmatprep.subr.bf16.mxu0 %v3512
    %5442 = vmatpush1.bf16.msra.mxu0 %v3511
    %5443 = vmatprep.subr.bf16.mxu0 %v3516
    %5444 = vmatpush1.bf16.msra.mxu0 %v3515
    %5445 = vmatprep.subr.bf16.mxu0 %v3520
    %5446 = vmatpush1.bf16.msra.mxu0 %v3519
    %5447 = vmatprep.subr.bf16.mxu0 %v3524
    %5448 = vmatpush1.bf16.msra.mxu0 %v3523
    %5449 = vmatprep.subr.bf16.mxu0 %v3528
    %5450 = vmatpush1.bf16.msra.mxu0 %v3527
    %5451 = vmatprep.subr.bf16.mxu0 %v3532
    %5452 = vmatpush1.bf16.msra.mxu0 %v3531
    %5453 = vmatprep.subr.bf16.mxu0 %v3536
    %5454 = vmatpush1.bf16.msra.mxu0 %v3535
    %5455 = vmatprep.subr.bf16.mxu0 %v3540
    %5456 = vmatpush1.bf16.msra.mxu0 %v3539
    %5457 = vmatprep.subr.bf16.mxu0 %v3544
    %5458 = vmatpush1.bf16.msra.mxu0 %v3543
    %5459 = vmatprep.subr.bf16.mxu0 %v3548
    %5460 = vmatpush1.bf16.msra.mxu0 %v3547
    %5461 = vmatprep.subr.bf16.mxu0 %v3552
    %5462 = vmatpush1.bf16.msra.mxu0 %v3551
    %5463 = vmatprep.subr.bf16.mxu0 %v3556
    %5464 = vmatpush1.bf16.msra.mxu0 %v3555
    %5465 = vmatprep.subr.bf16.mxu0 %v3560
    %5466 = vmatpush1.bf16.msra.mxu0 %v3559
    %5467 = vmatprep.subr.bf16.mxu0 %v3564
    %5468 = vmatpush1.bf16.msra.mxu0 %v3563
    %5469 = vmatprep.mubr.bf16.mxu0 %v136
    %5470 = vmatmul.mubr.bf16.gmra.mrb[0].mxu0 %v135
    %v5471 = vpop.f32.mrb[0].mxu0
    %v5472 = vadd.f32 %v5431, %v5471
    %v5473 = vpop.f32.mrb[0].mxu0
    %v5474 = vadd.f32 %v5433, %v5473
    %v5475 = vpop.f32.mrb[0].mxu0
    %v5476 = vpop.f32.mrb[0].mxu0
    %5477 = vdwg.mxu0
    %5478 = vmatprep.subr.bf16.mxu0 %v3568
    %5479 = vmatpush1.bf16.msra.mxu0 %v3567
    %5480 = vmatprep.subr.bf16.mxu0 %v3572
    %5481 = vmatpush1.bf16.msra.mxu0 %v3571
    %5482 = vmatprep.subr.bf16.mxu0 %v3576
    %5483 = vmatpush1.bf16.msra.mxu0 %v3575
    %5484 = vmatprep.subr.bf16.mxu0 %v3580
    %5485 = vmatpush1.bf16.msra.mxu0 %v3579
    %5486 = vmatprep.subr.bf16.mxu0 %v3584
    %5487 = vmatpush1.bf16.msra.mxu0 %v3583
    %5488 = vmatprep.subr.bf16.mxu0 %v3588
    %5489 = vmatpush1.bf16.msra.mxu0 %v3587
    %5490 = vmatprep.subr.bf16.mxu0 %v3592
    %5491 = vmatpush1.bf16.msra.mxu0 %v3591
    %5492 = vmatprep.subr.bf16.mxu0 %v3596
    %5493 = vmatpush1.bf16.msra.mxu0 %v3595
    %5494 = vmatprep.subr.bf16.mxu0 %v3600
    %5495 = vmatpush1.bf16.msra.mxu0 %v3599
    %5496 = vmatprep.subr.bf16.mxu0 %v3604
    %5497 = vmatpush1.bf16.msra.mxu0 %v3603
    %5498 = vmatprep.subr.bf16.mxu0 %v3608
    %5499 = vmatpush1.bf16.msra.mxu0 %v3607
    %5500 = vmatprep.subr.bf16.mxu0 %v3612
    %5501 = vmatpush1.bf16.msra.mxu0 %v3611
    %5502 = vmatprep.subr.bf16.mxu0 %v3616
    %5503 = vmatpush1.bf16.msra.mxu0 %v3615
    %5504 = vmatprep.subr.bf16.mxu0 %v3620
    %5505 = vmatpush1.bf16.msra.mxu0 %v3619
    %5506 = vmatprep.subr.bf16.mxu0 %v3624
    %5507 = vmatpush1.bf16.msra.mxu0 %v3623
    %5508 = vmatprep.subr.bf16.mxu0 %v3628
    %5509 = vmatpush1.bf16.msra.mxu0 %v3627
    %5510 = vmatprep.mubr.bf16.mxu0 %v138
    %5511 = vmatmul.mubr.bf16.gmra.mrb[0].mxu0 %v137
    %v5512 = vpop.f32.mrb[0].mxu0
    %v5513 = vadd.f32 %v5472, %v5512
    %v5514 = vpop.f32.mrb[0].mxu0
    %v5515 = vadd.f32 %v5474, %v5514
    %v5516 = vpop.f32.mrb[0].mxu0
    %v5517 = vpop.f32.mrb[0].mxu0
    %5518 = vdwg.mxu0
    %5519 = vmatprep.subr.bf16.mxu0 %v3632
    %5520 = vmatpush1.bf16.msra.mxu0 %v3631
    %5521 = vmatprep.subr.bf16.mxu0 %v3636
    %5522 = vmatpush1.bf16.msra.mxu0 %v3635
    %5523 = vmatprep.subr.bf16.mxu0 %v3640
    %5524 = vmatpush1.bf16.msra.mxu0 %v3639
    %5525 = vmatprep.subr.bf16.mxu0 %v3644
    %5526 = vmatpush1.bf16.msra.mxu0 %v3643
    %5527 = vmatprep.subr.bf16.mxu0 %v3648
    %5528 = vmatpush1.bf16.msra.mxu0 %v3647
    %5529 = vmatprep.subr.bf16.mxu0 %v3652
    %5530 = vmatpush1.bf16.msra.mxu0 %v3651
    %5531 = vmatprep.subr.bf16.mxu0 %v3656
    %5532 = vmatpush1.bf16.msra.mxu0 %v3655
    %5533 = vmatprep.subr.bf16.mxu0 %v3660
    %5534 = vmatpush1.bf16.msra.mxu0 %v3659
    %5535 = vmatprep.subr.bf16.mxu0 %v3664
    %5536 = vmatpush1.bf16.msra.mxu0 %v3663
    %5537 = vmatprep.subr.bf16.mxu0 %v3668
    %5538 = vmatpush1.bf16.msra.mxu0 %v3667
    %5539 = vmatprep.subr.bf16.mxu0 %v3672
    %5540 = vmatpush1.bf16.msra.mxu0 %v3671
    %5541 = vmatprep.subr.bf16.mxu0 %v3676
    %5542 = vmatpush1.bf16.msra.mxu0 %v3675
    %5543 = vmatprep.subr.bf16.mxu0 %v3680
    %5544 = vmatpush1.bf16.msra.mxu0 %v3679
    %5545 = vmatprep.subr.bf16.mxu0 %v3684
    %5546 = vmatpush1.bf16.msra.mxu0 %v3683
    %5547 = vmatprep.subr.bf16.mxu0 %v3688
    %5548 = vmatpush1.bf16.msra.mxu0 %v3687
    %5549 = vmatprep.subr.bf16.mxu0 %v3692
    %5550 = vmatpush1.bf16.msra.mxu0 %v3691
    %5551 = vmatprep.mubr.bf16.mxu0 %v140
    %5552 = vmatmul.mubr.bf16.gmra.mrb[0].mxu0 %v139
    %v5553 = vpop.f32.mrb[0].mxu0
    %v5554 = vadd.f32 %v5513, %v5553
    %v5555 = vpop.f32.mrb[0].mxu0
    %v5556 = vadd.f32 %v5515, %v5555
    %v5557 = vpop.f32.mrb[0].mxu0
    %v5558 = vpop.f32.mrb[0].mxu0
    %5559 = vdwg.mxu0
    %5560 = vmatprep.subr.bf16.mxu0 %v3696
    %5561 = vmatpush1.bf16.msra.mxu0 %v3695
    %5562 = vmatprep.subr.bf16.mxu0 %v3700
    %5563 = vmatpush1.bf16.msra.mxu0 %v3699
    %5564 = vmatprep.subr.bf16.mxu0 %v3704
    %5565 = vmatpush1.bf16.msra.mxu0 %v3703
    %5566 = vmatprep.subr.bf16.mxu0 %v3708
    %5567 = vmatpush1.bf16.msra.mxu0 %v3707
    %5568 = vmatprep.subr.bf16.mxu0 %v3712
    %5569 = vmatpush1.bf16.msra.mxu0 %v3711
    %5570 = vmatprep.subr.bf16.mxu0 %v3716
    %5571 = vmatpush1.bf16.msra.mxu0 %v3715
    %5572 = vmatprep.subr.bf16.mxu0 %v3720
    %5573 = vmatpush1.bf16.msra.mxu0 %v3719
    %5574 = vmatprep.subr.bf16.mxu0 %v3724
    %5575 = vmatpush1.bf16.msra.mxu0 %v3723
    %5576 = vmatprep.subr.bf16.mxu0 %v3728
    %5577 = vmatpush1.bf16.msra.mxu0 %v3727
    %5578 = vmatprep.subr.bf16.mxu0 %v3732
    %5579 = vmatpush1.bf16.msra.mxu0 %v3731
    %5580 = vmatprep.subr.bf16.mxu0 %v3736
    %5581 = vmatpush1.bf16.msra.mxu0 %v3735
    %5582 = vmatprep.subr.bf16.mxu0 %v3740
    %5583 = vmatpush1.bf16.msra.mxu0 %v3739
    %5584 = vmatprep.subr.bf16.mxu0 %v3744
    %5585 = vmatpush1.bf16.msra.mxu0 %v3743
    %5586 = vmatprep.subr.bf16.mxu0 %v3748
    %5587 = vmatpush1.bf16.msra.mxu0 %v3747
    %5588 = vmatprep.subr.bf16.mxu0 %v3752
    %5589 = vmatpush1.bf16.msra.mxu0 %v3751
    %5590 = vmatprep.subr.bf16.mxu0 %v3756
    %5591 = vmatpush1.bf16.msra.mxu0 %v3755
    %5592 = vmatprep.mubr.bf16.mxu0 %v142
    %5593 = vmatmul.mubr.bf16.gmra.mrb[0].mxu0 %v141
    %v5594 = vpop.f32.mrb[0].mxu0
    %v5595 = vadd.f32 %v5554, %v5594
    %v5596 = vpop.f32.mrb[0].mxu0
    %v5597 = vadd.f32 %v5556, %v5596
    %v5598 = vpop.f32.mrb[0].mxu0
    %v5599 = vpop.f32.mrb[0].mxu0
    %5600 = vdwg.mxu0
    %5601 = vmatprep.subr.bf16.mxu0 %v3760
    %5602 = vmatpush1.bf16.msra.mxu0 %v3759
    %5603 = vmatprep.subr.bf16.mxu0 %v3764
    %5604 = vmatpush1.bf16.msra.mxu0 %v3763
    %5605 = vmatprep.subr.bf16.mxu0 %v3768
    %5606 = vmatpush1.bf16.msra.mxu0 %v3767
    %5607 = vmatprep.subr.bf16.mxu0 %v3772
    %5608 = vmatpush1.bf16.msra.mxu0 %v3771
    %5609 = vmatprep.subr.bf16.mxu0 %v3776
    %5610 = vmatpush1.bf16.msra.mxu0 %v3775
    %5611 = vmatprep.subr.bf16.mxu0 %v3780
    %5612 = vmatpush1.bf16.msra.mxu0 %v3779
    %5613 = vmatprep.subr.bf16.mxu0 %v3784
    %5614 = vmatpush1.bf16.msra.mxu0 %v3783
    %5615 = vmatprep.subr.bf16.mxu0 %v3788
    %5616 = vmatpush1.bf16.msra.mxu0 %v3787
    %5617 = vmatprep.subr.bf16.mxu0 %v3792
    %5618 = vmatpush1.bf16.msra.mxu0 %v3791
    %5619 = vmatprep.subr.bf16.mxu0 %v3796
    %5620 = vmatpush1.bf16.msra.mxu0 %v3795
    %5621 = vmatprep.subr.bf16.mxu0 %v3800
    %5622 = vmatpush1.bf16.msra.mxu0 %v3799
    %5623 = vmatprep.subr.bf16.mxu0 %v3804
    %5624 = vmatpush1.bf16.msra.mxu0 %v3803
    %5625 = vmatprep.subr.bf16.mxu0 %v3808
    %5626 = vmatpush1.bf16.msra.mxu0 %v3807
    %5627 = vmatprep.subr.bf16.mxu0 %v3812
    %5628 = vmatpush1.bf16.msra.mxu0 %v3811
    %5629 = vmatprep.subr.bf16.mxu0 %v3816
    %5630 = vmatpush1.bf16.msra.mxu0 %v3815
    %5631 = vmatprep.subr.bf16.mxu0 %v3820
    %5632 = vmatpush1.bf16.msra.mxu0 %v3819
    %5633 = vmatprep.mubr.bf16.mxu0 %v144
    %5634 = vmatmul.mubr.bf16.gmra.mrb[0].mxu0 %v143
    %v5635 = vpop.f32.mrb[0].mxu0
    %v5636 = vadd.f32 %v5595, %v5635
    %v5637 = vpop.f32.mrb[0].mxu0
    %v5638 = vadd.f32 %v5597, %v5637
    %v5639 = vpop.f32.mrb[0].mxu0
    %v5640 = vpop.f32.mrb[0].mxu0
    %5641 = vdwg.mxu0
    %5642 = vmatprep.subr.bf16.mxu0 %v3824
    %5643 = vmatpush1.bf16.msra.mxu0 %v3823
    %5644 = vmatprep.subr.bf16.mxu0 %v3828
    %5645 = vmatpush1.bf16.msra.mxu0 %v3827
    %5646 = vmatprep.subr.bf16.mxu0 %v3832
    %5647 = vmatpush1.bf16.msra.mxu0 %v3831
    %5648 = vmatprep.subr.bf16.mxu0 %v3836
    %5649 = vmatpush1.bf16.msra.mxu0 %v3835
    %5650 = vmatprep.subr.bf16.mxu0 %v3840
    %5651 = vmatpush1.bf16.msra.mxu0 %v3839
    %5652 = vmatprep.subr.bf16.mxu0 %v3844
    %5653 = vmatpush1.bf16.msra.mxu0 %v3843
    %5654 = vmatprep.subr.bf16.mxu0 %v3848
    %5655 = vmatpush1.bf16.msra.mxu0 %v3847
    %5656 = vmatprep.subr.bf16.mxu0 %v3852
    %5657 = vmatpush1.bf16.msra.mxu0 %v3851
    %5658 = vmatprep.subr.bf16.mxu0 %v3856
    %5659 = vmatpush1.bf16.msra.mxu0 %v3855
    %5660 = vmatprep.subr.bf16.mxu0 %v3860
    %5661 = vmatpush1.bf16.msra.mxu0 %v3859
    %5662 = vmatprep.subr.bf16.mxu0 %v3864
    %5663 = vmatpush1.bf16.msra.mxu0 %v3863
    %5664 = vmatprep.subr.bf16.mxu0 %v3868
    %5665 = vmatpush1.bf16.msra.mxu0 %v3867
    %5666 = vmatprep.subr.bf16.mxu0 %v3872
    %5667 = vmatpush1.bf16.msra.mxu0 %v3871
    %5668 = vmatprep.subr.bf16.mxu0 %v3876
    %5669 = vmatpush1.bf16.msra.mxu0 %v3875
    %5670 = vmatprep.subr.bf16.mxu0 %v3880
    %5671 = vmatpush1.bf16.msra.mxu0 %v3879
    %5672 = vmatprep.subr.bf16.mxu0 %v3884
    %5673 = vmatpush1.bf16.msra.mxu0 %v3883
    %5674 = vmatprep.mubr.bf16.mxu0 %v146
    %5675 = vmatmul.mubr.bf16.gmra.mrb[0].mxu0 %v145
    %v5676 = vpop.f32.mrb[0].mxu0
    %v5677 = vadd.f32 %v5636, %v5676
    %v5678 = vpop.f32.mrb[0].mxu0
    %v5679 = vadd.f32 %v5638, %v5678
    %v5680 = vpop.f32.mrb[0].mxu0
    %v5681 = vpop.f32.mrb[0].mxu0
    %5682 = vdwg.mxu0
    %5683 = vmatprep.subr.bf16.mxu0 %v3888
    %5684 = vmatpush1.bf16.msra.mxu0 %v3887
    %5685 = vmatprep.subr.bf16.mxu0 %v3892
    %5686 = vmatpush1.bf16.msra.mxu0 %v3891
    %5687 = vmatprep.subr.bf16.mxu0 %v3896
    %5688 = vmatpush1.bf16.msra.mxu0 %v3895
    %5689 = vmatprep.subr.bf16.mxu0 %v3900
    %5690 = vmatpush1.bf16.msra.mxu0 %v3899
    %5691 = vmatprep.subr.bf16.mxu0 %v3904
    %5692 = vmatpush1.bf16.msra.mxu0 %v3903
    %5693 = vmatprep.subr.bf16.mxu0 %v3908
    %5694 = vmatpush1.bf16.msra.mxu0 %v3907
    %5695 = vmatprep.subr.bf16.mxu0 %v3912
    %5696 = vmatpush1.bf16.msra.mxu0 %v3911
    %5697 = vmatprep.subr.bf16.mxu0 %v3916
    %5698 = vmatpush1.bf16.msra.mxu0 %v3915
    %5699 = vmatprep.subr.bf16.mxu0 %v3920
    %5700 = vmatpush1.bf16.msra.mxu0 %v3919
    %5701 = vmatprep.subr.bf16.mxu0 %v3924
    %5702 = vmatpush1.bf16.msra.mxu0 %v3923
    %5703 = vmatprep.subr.bf16.mxu0 %v3928
    %5704 = vmatpush1.bf16.msra.mxu0 %v3927
    %5705 = vmatprep.subr.bf16.mxu0 %v3932
    %5706 = vmatpush1.bf16.msra.mxu0 %v3931
    %5707 = vmatprep.subr.bf16.mxu0 %v3936
    %5708 = vmatpush1.bf16.msra.mxu0 %v3935
    %5709 = vmatprep.subr.bf16.mxu0 %v3940
    %5710 = vmatpush1.bf16.msra.mxu0 %v3939
    %5711 = vmatprep.subr.bf16.mxu0 %v3944
    %5712 = vmatpush1.bf16.msra.mxu0 %v3943
    %5713 = vmatprep.subr.bf16.mxu0 %v3948
    %5714 = vmatpush1.bf16.msra.mxu0 %v3947
    %5715 = vmatprep.mubr.bf16.mxu0 %v148
    %5716 = vmatmul.mubr.bf16.gmra.mrb[0].mxu0 %v147
    %v5717 = vpop.f32.mrb[0].mxu0
    %v5718 = vadd.f32 %v5677, %v5717
    %v5719 = vpop.f32.mrb[0].mxu0
    %v5720 = vadd.f32 %v5679, %v5719
    %v5721 = vpop.f32.mrb[0].mxu0
    %v5722 = vpop.f32.mrb[0].mxu0
    %5723 = vdwg.mxu0
    %5724 = vmatprep.subr.bf16.mxu0 %v3952
    %5725 = vmatpush1.bf16.msra.mxu0 %v3951
    %5726 = vmatprep.subr.bf16.mxu0 %v3956
    %5727 = vmatpush1.bf16.msra.mxu0 %v3955
    %5728 = vmatprep.subr.bf16.mxu0 %v3960
    %5729 = vmatpush1.bf16.msra.mxu0 %v3959
    %5730 = vmatprep.subr.bf16.mxu0 %v3964
    %5731 = vmatpush1.bf16.msra.mxu0 %v3963
    %5732 = vmatprep.subr.bf16.mxu0 %v3968
    %5733 = vmatpush1.bf16.msra.mxu0 %v3967
    %5734 = vmatprep.subr.bf16.mxu0 %v3972
    %5735 = vmatpush1.bf16.msra.mxu0 %v3971
    %5736 = vmatprep.subr.bf16.mxu0 %v3976
    %5737 = vmatpush1.bf16.msra.mxu0 %v3975
    %5738 = vmatprep.subr.bf16.mxu0 %v3980
    %5739 = vmatpush1.bf16.msra.mxu0 %v3979
    %5740 = vmatprep.subr.bf16.mxu0 %v3984
    %5741 = vmatpush1.bf16.msra.mxu0 %v3983
    %5742 = vmatprep.subr.bf16.mxu0 %v3988
    %5743 = vmatpush1.bf16.msra.mxu0 %v3987
    %5744 = vmatprep.subr.bf16.mxu0 %v3992
    %5745 = vmatpush1.bf16.msra.mxu0 %v3991
    %5746 = vmatprep.subr.bf16.mxu0 %v3996
    %5747 = vmatpush1.bf16.msra.mxu0 %v3995
    %5748 = vmatprep.subr.bf16.mxu0 %v4000
    %5749 = vmatpush1.bf16.msra.mxu0 %v3999
    %5750 = vmatprep.subr.bf16.mxu0 %v4004
    %5751 = vmatpush1.bf16.msra.mxu0 %v4003
    %5752 = vmatprep.subr.bf16.mxu0 %v4008
    %5753 = vmatpush1.bf16.msra.mxu0 %v4007
    %5754 = vmatprep.subr.bf16.mxu0 %v4012
    %5755 = vmatpush1.bf16.msra.mxu0 %v4011
    %5756 = vmatprep.mubr.bf16.mxu0 %v150
    %5757 = vmatmul.mubr.bf16.gmra.mrb[0].mxu0 %v149
    %v5758 = vpop.f32.mrb[0].mxu0
    %v5759 = vadd.f32 %v5718, %v5758
    %v5760 = vpop.f32.mrb[0].mxu0
    %v5761 = vadd.f32 %v5720, %v5760
    %v5762 = vpop.f32.mrb[0].mxu0
    %v5763 = vpop.f32.mrb[0].mxu0
    %5764 = vdwg.mxu0
    %v5765 = vmax.f32 %v5267, 0.0
    %v5766 = vmax.f32 %v5269, 0.0
    %v5767 = vmax.f32 %v5759, 0.0
    %v5768 = vmax.f32 %v5761, 0.0
    %v5769 = vpack.c.bf16 %v5765, %v5765
    %v5770 = vpack.c.bf16 %v5766, %v5766
    %v5771 = vpack.c.bf16 %v5767, %v5767
    %v5772 = vpack.c.bf16 %v5768, %v5768
    %v5773 = vld [vmem:[#allocation6] sm:$0xff]
    %v5774 = vld [vmem:[#allocation6 + $0x8] sm:$0xff]
    %v5775 = vld [vmem:[#allocation6 + $0x10] sm:$0xff]
    %v5776 = vld [vmem:[#allocation6 + $0x18] sm:$0xff]
    %v5777 = vld [vmem:[#allocation6 + $0x20] sm:$0xff]
    %v5778 = vld [vmem:[#allocation6 + $0x28] sm:$0xff]
    %v5779 = vld [vmem:[#allocation6 + $0x30] sm:$0xff]
    %v5780 = vld [vmem:[#allocation6 + $0x38] sm:$0xff]
    %v5781 = vld [vmem:[#allocation6 + $0x40] sm:$0xff]
    %v5782 = vld [vmem:[#allocation6 + $0x48] sm:$0xff]
    %v5783 = vld [vmem:[#allocation6 + $0x50] sm:$0xff]
    %v5784 = vld [vmem:[#allocation6 + $0x58] sm:$0xff]
    %v5785 = vld [vmem:[#allocation6 + $0x60] sm:$0xff]
    %v5786 = vld [vmem:[#allocation6 + $0x68] sm:$0xff]
    %v5787 = vld [vmem:[#allocation6 + $0x70] sm:$0xff]
    %v5788 = vld [vmem:[#allocation6 + $0x78] sm:$0xff]
    %v5789 = vld [vmem:[#allocation6 + $0x80] sm:$0xff]
    %v5790 = vld [vmem:[#allocation6 + $0x88] sm:$0xff]
    %v5791 = vld [vmem:[#allocation6 + $0x90] sm:$0xff]
    %v5792 = vld [vmem:[#allocation6 + $0x98] sm:$0xff]
    %v5793 = vld [vmem:[#allocation6 + $0xa0] sm:$0xff]
    %v5794 = vld [vmem:[#allocation6 + $0xa8] sm:$0xff]
    %v5795 = vld [vmem:[#allocation6 + $0xb0] sm:$0xff]
    %v5796 = vld [vmem:[#allocation6 + $0xb8] sm:$0xff]
    %v5797 = vld [vmem:[#allocation6 + $0xc0] sm:$0xff]
    %v5798 = vld [vmem:[#allocation6 + $0xc8] sm:$0xff]
    %v5799 = vld [vmem:[#allocation6 + $0xd0] sm:$0xff]
    %v5800 = vld [vmem:[#allocation6 + $0xd8] sm:$0xff]
    %v5801 = vld [vmem:[#allocation6 + $0xe0] sm:$0xff]
    %v5802 = vld [vmem:[#allocation6 + $0xe8] sm:$0xff]
    %v5803 = vld [vmem:[#allocation6 + $0xf0] sm:$0xff]
    %v5804 = vld [vmem:[#allocation6 + $0xf8] sm:$0xff]
    %v5805 = vld [vmem:[#allocation6 + $0x100] sm:$0xff]
    %v5806 = vld [vmem:[#allocation6 + $0x108] sm:$0xff]
    %v5807 = vld [vmem:[#allocation6 + $0x110] sm:$0xff]
    %v5808 = vld [vmem:[#allocation6 + $0x118] sm:$0xff]
    %v5809 = vld [vmem:[#allocation6 + $0x120] sm:$0xff]
    %v5810 = vld [vmem:[#allocation6 + $0x128] sm:$0xff]
    %v5811 = vld [vmem:[#allocation6 + $0x130] sm:$0xff]
    %v5812 = vld [vmem:[#allocation6 + $0x138] sm:$0xff]
    %v5813 = vld [vmem:[#allocation6 + $0x140] sm:$0xff]
    %v5814 = vld [vmem:[#allocation6 + $0x148] sm:$0xff]
    %v5815 = vld [vmem:[#allocation6 + $0x150] sm:$0xff]
    %v5816 = vld [vmem:[#allocation6 + $0x158] sm:$0xff]
    %v5817 = vld [vmem:[#allocation6 + $0x160] sm:$0xff]
    %v5818 = vld [vmem:[#allocation6 + $0x168] sm:$0xff]
    %v5819 = vld [vmem:[#allocation6 + $0x170] sm:$0xff]
    %v5820 = vld [vmem:[#allocation6 + $0x178] sm:$0xff]
    %v5821 = vld [vmem:[#allocation6 + $0x180] sm:$0xff]
    %v5822 = vld [vmem:[#allocation6 + $0x188] sm:$0xff]
    %v5823 = vld [vmem:[#allocation6 + $0x190] sm:$0xff]
    %v5824 = vld [vmem:[#allocation6 + $0x198] sm:$0xff]
    %v5825 = vld [vmem:[#allocation6 + $0x1a0] sm:$0xff]
    %v5826 = vld [vmem:[#allocation6 + $0x1a8] sm:$0xff]
    %v5827 = vld [vmem:[#allocation6 + $0x1b0] sm:$0xff]
    %v5828 = vld [vmem:[#allocation6 + $0x1b8] sm:$0xff]
    %v5829 = vld [vmem:[#allocation6 + $0x1c0] sm:$0xff]
    %v5830 = vld [vmem:[#allocation6 + $0x1c8] sm:$0xff]
    %v5831 = vld [vmem:[#allocation6 + $0x1d0] sm:$0xff]
    %v5832 = vld [vmem:[#allocation6 + $0x1d8] sm:$0xff]
    %v5833 = vld [vmem:[#allocation6 + $0x1e0] sm:$0xff]
    %v5834 = vld [vmem:[#allocation6 + $0x1e8] sm:$0xff]
    %v5835 = vld [vmem:[#allocation6 + $0x1f0] sm:$0xff]
    %v5836 = vld [vmem:[#allocation6 + $0x1f8] sm:$0xff]
    %v5837 = vld [vmem:[#allocation6 + $0x200] sm:$0xff]
    %v5838 = vld [vmem:[#allocation6 + $0x208] sm:$0xff]
    %v5839 = vld [vmem:[#allocation6 + $0x210] sm:$0xff]
    %v5840 = vld [vmem:[#allocation6 + $0x218] sm:$0xff]
    %v5841 = vld [vmem:[#allocation6 + $0x220] sm:$0xff]
    %v5842 = vld [vmem:[#allocation6 + $0x228] sm:$0xff]
    %v5843 = vld [vmem:[#allocation6 + $0x230] sm:$0xff]
    %v5844 = vld [vmem:[#allocation6 + $0x238] sm:$0xff]
    %v5845 = vld [vmem:[#allocation6 + $0x240] sm:$0xff]
    %v5846 = vld [vmem:[#allocation6 + $0x248] sm:$0xff]
    %v5847 = vld [vmem:[#allocation6 + $0x250] sm:$0xff]
    %v5848 = vld [vmem:[#allocation6 + $0x258] sm:$0xff]
    %v5849 = vld [vmem:[#allocation6 + $0x260] sm:$0xff]
    %v5850 = vld [vmem:[#allocation6 + $0x268] sm:$0xff]
    %v5851 = vld [vmem:[#allocation6 + $0x270] sm:$0xff]
    %v5852 = vld [vmem:[#allocation6 + $0x278] sm:$0xff]
    %v5853 = vld [vmem:[#allocation6 + $0x280] sm:$0xff]
    %v5854 = vld [vmem:[#allocation6 + $0x288] sm:$0xff]
    %v5855 = vld [vmem:[#allocation6 + $0x290] sm:$0xff]
    %v5856 = vld [vmem:[#allocation6 + $0x298] sm:$0xff]
    %v5857 = vld [vmem:[#allocation6 + $0x2a0] sm:$0xff]
    %v5858 = vld [vmem:[#allocation6 + $0x2a8] sm:$0xff]
    %v5859 = vld [vmem:[#allocation6 + $0x2b0] sm:$0xff]
    %v5860 = vld [vmem:[#allocation6 + $0x2b8] sm:$0xff]
    %v5861 = vld [vmem:[#allocation6 + $0x2c0] sm:$0xff]
    %v5862 = vld [vmem:[#allocation6 + $0x2c8] sm:$0xff]
    %v5863 = vld [vmem:[#allocation6 + $0x2d0] sm:$0xff]
    %v5864 = vld [vmem:[#allocation6 + $0x2d8] sm:$0xff]
    %v5865 = vld [vmem:[#allocation6 + $0x2e0] sm:$0xff]
    %v5866 = vld [vmem:[#allocation6 + $0x2e8] sm:$0xff]
    %v5867 = vld [vmem:[#allocation6 + $0x2f0] sm:$0xff]
    %v5868 = vld [vmem:[#allocation6 + $0x2f8] sm:$0xff]
    %v5869 = vld [vmem:[#allocation6 + $0x300] sm:$0xff]
    %v5870 = vld [vmem:[#allocation6 + $0x308] sm:$0xff]
    %v5871 = vld [vmem:[#allocation6 + $0x310] sm:$0xff]
    %v5872 = vld [vmem:[#allocation6 + $0x318] sm:$0xff]
    %v5873 = vld [vmem:[#allocation6 + $0x320] sm:$0xff]
    %v5874 = vld [vmem:[#allocation6 + $0x328] sm:$0xff]
    %v5875 = vld [vmem:[#allocation6 + $0x330] sm:$0xff]
    %v5876 = vld [vmem:[#allocation6 + $0x338] sm:$0xff]
    %v5877 = vld [vmem:[#allocation6 + $0x340] sm:$0xff]
    %v5878 = vld [vmem:[#allocation6 + $0x348] sm:$0xff]
    %v5879 = vld [vmem:[#allocation6 + $0x350] sm:$0xff]
    %v5880 = vld [vmem:[#allocation6 + $0x358] sm:$0xff]
    %v5881 = vld [vmem:[#allocation6 + $0x360] sm:$0xff]
    %v5882 = vld [vmem:[#allocation6 + $0x368] sm:$0xff]
    %v5883 = vld [vmem:[#allocation6 + $0x370] sm:$0xff]
    %v5884 = vld [vmem:[#allocation6 + $0x378] sm:$0xff]
    %v5885 = vld [vmem:[#allocation6 + $0x380] sm:$0xff]
    %v5886 = vld [vmem:[#allocation6 + $0x388] sm:$0xff]
    %v5887 = vld [vmem:[#allocation6 + $0x390] sm:$0xff]
    %v5888 = vld [vmem:[#allocation6 + $0x398] sm:$0xff]
    %v5889 = vld [vmem:[#allocation6 + $0x3a0] sm:$0xff]
    %v5890 = vld [vmem:[#allocation6 + $0x3a8] sm:$0xff]
    %v5891 = vld [vmem:[#allocation6 + $0x3b0] sm:$0xff]
    %v5892 = vld [vmem:[#allocation6 + $0x3b8] sm:$0xff]
    %v5893 = vld [vmem:[#allocation6 + $0x3c0] sm:$0xff]
    %v5894 = vld [vmem:[#allocation6 + $0x3c8] sm:$0xff]
    %v5895 = vld [vmem:[#allocation6 + $0x3d0] sm:$0xff]
    %v5896 = vld [vmem:[#allocation6 + $0x3d8] sm:$0xff]
    %v5897 = vld [vmem:[#allocation6 + $0x3e0] sm:$0xff]
    %v5898 = vld [vmem:[#allocation6 + $0x3e8] sm:$0xff]
    %v5899 = vld [vmem:[#allocation6 + $0x3f0] sm:$0xff]
    %v5900 = vld [vmem:[#allocation6 + $0x3f8] sm:$0xff]
    %v5901 = vld [vmem:[#allocation7] sm:$0xf]
    %v5903 = vlaneseq
    %v5904 = vshrl.u32 %v5903, 7
    %v5905 = vsub.s32 0, %v5904
    %v5906 = vrot.slane %v5901, %v5905
    %v5907 = vlaneseq
    %v5908 = vshrl.u32 %v5907, 7
    %v5909 = vsub.s32 1, %v5908
    %v5910 = vrot.slane %v5901, %v5909
    %v5911 = vlaneseq
    %v5912 = vshrl.u32 %v5911, 7
    %v5913 = vsub.s32 2, %v5912
    %v5914 = vrot.slane %v5901, %v5913
    %v5915 = vlaneseq
    %v5916 = vshrl.u32 %v5915, 7
    %v5917 = vsub.s32 3, %v5916
    %v5918 = vrot.slane %v5901, %v5917
    %v6051 = vunpack.c.l.b16 %v5773
    %v6052 = vunpack.c.h.b16 %v5773
    %v6053 = vunpack.c.l.b16 %v5774
    %v6054 = vunpack.c.h.b16 %v5774
    %v6055 = vunpack.c.l.b16 %v5775
    %v6056 = vunpack.c.h.b16 %v5775
    %v6057 = vunpack.c.l.b16 %v5776
    %v6058 = vunpack.c.h.b16 %v5776
    %v6059 = vunpack.c.l.b16 %v5777
    %v6060 = vunpack.c.h.b16 %v5777
    %v6061 = vunpack.c.l.b16 %v5778
    %v6062 = vunpack.c.h.b16 %v5778
    %v6063 = vunpack.c.l.b16 %v5779
    %v6064 = vunpack.c.h.b16 %v5779
    %v6065 = vunpack.c.l.b16 %v5780
    %v6066 = vunpack.c.h.b16 %v5780
    %v6067 = vunpack.c.l.b16 %v5781
    %v6068 = vunpack.c.h.b16 %v5781
    %v6069 = vunpack.c.l.b16 %v5782
    %v6070 = vunpack.c.h.b16 %v5782
    %v6071 = vunpack.c.l.b16 %v5783
    %v6072 = vunpack.c.h.b16 %v5783
    %v6073 = vunpack.c.l.b16 %v5784
    %v6074 = vunpack.c.h.b16 %v5784
    %v6075 = vunpack.c.l.b16 %v5785
    %v6076 = vunpack.c.h.b16 %v5785
    %v6077 = vunpack.c.l.b16 %v5786
    %v6078 = vunpack.c.h.b16 %v5786
    %v6079 = vunpack.c.l.b16 %v5787
    %v6080 = vunpack.c.h.b16 %v5787
    %v6081 = vunpack.c.l.b16 %v5788
    %v6082 = vunpack.c.h.b16 %v5788
    %v6083 = vunpack.c.l.b16 %v5789
    %v6084 = vunpack.c.h.b16 %v5789
    %v6085 = vunpack.c.l.b16 %v5790
    %v6086 = vunpack.c.h.b16 %v5790
    %v6087 = vunpack.c.l.b16 %v5791
    %v6088 = vunpack.c.h.b16 %v5791
    %v6089 = vunpack.c.l.b16 %v5792
    %v6090 = vunpack.c.h.b16 %v5792
    %v6091 = vunpack.c.l.b16 %v5793
    %v6092 = vunpack.c.h.b16 %v5793
    %v6093 = vunpack.c.l.b16 %v5794
    %v6094 = vunpack.c.h.b16 %v5794
    %v6095 = vunpack.c.l.b16 %v5795
    %v6096 = vunpack.c.h.b16 %v5795
    %v6097 = vunpack.c.l.b16 %v5796
    %v6098 = vunpack.c.h.b16 %v5796
    %v6099 = vunpack.c.l.b16 %v5797
    %v6100 = vunpack.c.h.b16 %v5797
    %v6101 = vunpack.c.l.b16 %v5798
    %v6102 = vunpack.c.h.b16 %v5798
    %v6103 = vunpack.c.l.b16 %v5799
    %v6104 = vunpack.c.h.b16 %v5799
    %v6105 = vunpack.c.l.b16 %v5800
    %v6106 = vunpack.c.h.b16 %v5800
    %v6107 = vunpack.c.l.b16 %v5801
    %v6108 = vunpack.c.h.b16 %v5801
    %v6109 = vunpack.c.l.b16 %v5802
    %v6110 = vunpack.c.h.b16 %v5802
    %v6111 = vunpack.c.l.b16 %v5803
    %v6112 = vunpack.c.h.b16 %v5803
    %v6113 = vunpack.c.l.b16 %v5804
    %v6114 = vunpack.c.h.b16 %v5804
    %v6115 = vunpack.c.l.b16 %v5805
    %v6116 = vunpack.c.h.b16 %v5805
    %v6117 = vunpack.c.l.b16 %v5806
    %v6118 = vunpack.c.h.b16 %v5806
    %v6119 = vunpack.c.l.b16 %v5807
    %v6120 = vunpack.c.h.b16 %v5807
    %v6121 = vunpack.c.l.b16 %v5808
    %v6122 = vunpack.c.h.b16 %v5808
    %v6123 = vunpack.c.l.b16 %v5809
    %v6124 = vunpack.c.h.b16 %v5809
    %v6125 = vunpack.c.l.b16 %v5810
    %v6126 = vunpack.c.h.b16 %v5810
    %v6127 = vunpack.c.l.b16 %v5811
    %v6128 = vunpack.c.h.b16 %v5811
    %v6129 = vunpack.c.l.b16 %v5812
    %v6130 = vunpack.c.h.b16 %v5812
    %v6131 = vunpack.c.l.b16 %v5813
    %v6132 = vunpack.c.h.b16 %v5813
    %v6133 = vunpack.c.l.b16 %v5814
    %v6134 = vunpack.c.h.b16 %v5814
    %v6135 = vunpack.c.l.b16 %v5815
    %v6136 = vunpack.c.h.b16 %v5815
    %v6137 = vunpack.c.l.b16 %v5816
    %v6138 = vunpack.c.h.b16 %v5816
    %v6139 = vunpack.c.l.b16 %v5817
    %v6140 = vunpack.c.h.b16 %v5817
    %v6141 = vunpack.c.l.b16 %v5818
    %v6142 = vunpack.c.h.b16 %v5818
    %v6143 = vunpack.c.l.b16 %v5819
    %v6144 = vunpack.c.h.b16 %v5819
    %v6145 = vunpack.c.l.b16 %v5820
    %v6146 = vunpack.c.h.b16 %v5820
    %v6147 = vunpack.c.l.b16 %v5821
    %v6148 = vunpack.c.h.b16 %v5821
    %v6149 = vunpack.c.l.b16 %v5822
    %v6150 = vunpack.c.h.b16 %v5822
    %v6151 = vunpack.c.l.b16 %v5823
    %v6152 = vunpack.c.h.b16 %v5823
    %v6153 = vunpack.c.l.b16 %v5824
    %v6154 = vunpack.c.h.b16 %v5824
    %v6155 = vunpack.c.l.b16 %v5825
    %v6156 = vunpack.c.h.b16 %v5825
    %v6157 = vunpack.c.l.b16 %v5826
    %v6158 = vunpack.c.h.b16 %v5826
    %v6159 = vunpack.c.l.b16 %v5827
    %v6160 = vunpack.c.h.b16 %v5827
    %v6161 = vunpack.c.l.b16 %v5828
    %v6162 = vunpack.c.h.b16 %v5828
    %v6163 = vunpack.c.l.b16 %v5829
    %v6164 = vunpack.c.h.b16 %v5829
    %v6165 = vunpack.c.l.b16 %v5830
    %v6166 = vunpack.c.h.b16 %v5830
    %v6167 = vunpack.c.l.b16 %v5831
    %v6168 = vunpack.c.h.b16 %v5831
    %v6169 = vunpack.c.l.b16 %v5832
    %v6170 = vunpack.c.h.b16 %v5832
    %v6171 = vunpack.c.l.b16 %v5833
    %v6172 = vunpack.c.h.b16 %v5833
    %v6173 = vunpack.c.l.b16 %v5834
    %v6174 = vunpack.c.h.b16 %v5834
    %v6175 = vunpack.c.l.b16 %v5835
    %v6176 = vunpack.c.h.b16 %v5835
    %v6177 = vunpack.c.l.b16 %v5836
    %v6178 = vunpack.c.h.b16 %v5836
    %v6179 = vunpack.c.l.b16 %v5837
    %v6180 = vunpack.c.h.b16 %v5837
    %v6181 = vunpack.c.l.b16 %v5838
    %v6182 = vunpack.c.h.b16 %v5838
    %v6183 = vunpack.c.l.b16 %v5839
    %v6184 = vunpack.c.h.b16 %v5839
    %v6185 = vunpack.c.l.b16 %v5840
    %v6186 = vunpack.c.h.b16 %v5840
    %v6187 = vunpack.c.l.b16 %v5841
    %v6188 = vunpack.c.h.b16 %v5841
    %v6189 = vunpack.c.l.b16 %v5842
    %v6190 = vunpack.c.h.b16 %v5842
    %v6191 = vunpack.c.l.b16 %v5843
    %v6192 = vunpack.c.h.b16 %v5843
    %v6193 = vunpack.c.l.b16 %v5844
    %v6194 = vunpack.c.h.b16 %v5844
    %v6195 = vunpack.c.l.b16 %v5845
    %v6196 = vunpack.c.h.b16 %v5845
    %v6197 = vunpack.c.l.b16 %v5846
    %v6198 = vunpack.c.h.b16 %v5846
    %v6199 = vunpack.c.l.b16 %v5847
    %v6200 = vunpack.c.h.b16 %v5847
    %v6201 = vunpack.c.l.b16 %v5848
    %v6202 = vunpack.c.h.b16 %v5848
    %v6203 = vunpack.c.l.b16 %v5849
    %v6204 = vunpack.c.h.b16 %v5849
    %v6205 = vunpack.c.l.b16 %v5850
    %v6206 = vunpack.c.h.b16 %v5850
    %v6207 = vunpack.c.l.b16 %v5851
    %v6208 = vunpack.c.h.b16 %v5851
    %v6209 = vunpack.c.l.b16 %v5852
    %v6210 = vunpack.c.h.b16 %v5852
    %v6211 = vunpack.c.l.b16 %v5853
    %v6212 = vunpack.c.h.b16 %v5853
    %v6213 = vunpack.c.l.b16 %v5854
    %v6214 = vunpack.c.h.b16 %v5854
    %v6215 = vunpack.c.l.b16 %v5855
    %v6216 = vunpack.c.h.b16 %v5855
    %v6217 = vunpack.c.l.b16 %v5856
    %v6218 = vunpack.c.h.b16 %v5856
    %v6219 = vunpack.c.l.b16 %v5857
    %v6220 = vunpack.c.h.b16 %v5857
    %v6221 = vunpack.c.l.b16 %v5858
    %v6222 = vunpack.c.h.b16 %v5858
    %v6223 = vunpack.c.l.b16 %v5859
    %v6224 = vunpack.c.h.b16 %v5859
    %v6225 = vunpack.c.l.b16 %v5860
    %v6226 = vunpack.c.h.b16 %v5860
    %v6227 = vunpack.c.l.b16 %v5861
    %v6228 = vunpack.c.h.b16 %v5861
    %v6229 = vunpack.c.l.b16 %v5862
    %v6230 = vunpack.c.h.b16 %v5862
    %v6231 = vunpack.c.l.b16 %v5863
    %v6232 = vunpack.c.h.b16 %v5863
    %v6233 = vunpack.c.l.b16 %v5864
    %v6234 = vunpack.c.h.b16 %v5864
    %v6235 = vunpack.c.l.b16 %v5865
    %v6236 = vunpack.c.h.b16 %v5865
    %v6237 = vunpack.c.l.b16 %v5866
    %v6238 = vunpack.c.h.b16 %v5866
    %v6239 = vunpack.c.l.b16 %v5867
    %v6240 = vunpack.c.h.b16 %v5867
    %v6241 = vunpack.c.l.b16 %v5868
    %v6242 = vunpack.c.h.b16 %v5868
    %v6243 = vunpack.c.l.b16 %v5869
    %v6244 = vunpack.c.h.b16 %v5869
    %v6245 = vunpack.c.l.b16 %v5870
    %v6246 = vunpack.c.h.b16 %v5870
    %v6247 = vunpack.c.l.b16 %v5871
    %v6248 = vunpack.c.h.b16 %v5871
    %v6249 = vunpack.c.l.b16 %v5872
    %v6250 = vunpack.c.h.b16 %v5872
    %v6251 = vunpack.c.l.b16 %v5873
    %v6252 = vunpack.c.h.b16 %v5873
    %v6253 = vunpack.c.l.b16 %v5874
    %v6254 = vunpack.c.h.b16 %v5874
    %v6255 = vunpack.c.l.b16 %v5875
    %v6256 = vunpack.c.h.b16 %v5875
    %v6257 = vunpack.c.l.b16 %v5876
    %v6258 = vunpack.c.h.b16 %v5876
    %v6259 = vunpack.c.l.b16 %v5877
    %v6260 = vunpack.c.h.b16 %v5877
    %v6261 = vunpack.c.l.b16 %v5878
    %v6262 = vunpack.c.h.b16 %v5878
    %v6263 = vunpack.c.l.b16 %v5879
    %v6264 = vunpack.c.h.b16 %v5879
    %v6265 = vunpack.c.l.b16 %v5880
    %v6266 = vunpack.c.h.b16 %v5880
    %v6267 = vunpack.c.l.b16 %v5881
    %v6268 = vunpack.c.h.b16 %v5881
    %v6269 = vunpack.c.l.b16 %v5882
    %v6270 = vunpack.c.h.b16 %v5882
    %v6271 = vunpack.c.l.b16 %v5883
    %v6272 = vunpack.c.h.b16 %v5883
    %v6273 = vunpack.c.l.b16 %v5884
    %v6274 = vunpack.c.h.b16 %v5884
    %v6275 = vunpack.c.l.b16 %v5885
    %v6276 = vunpack.c.h.b16 %v5885
    %v6277 = vunpack.c.l.b16 %v5886
    %v6278 = vunpack.c.h.b16 %v5886
    %v6279 = vunpack.c.l.b16 %v5887
    %v6280 = vunpack.c.h.b16 %v5887
    %v6281 = vunpack.c.l.b16 %v5888
    %v6282 = vunpack.c.h.b16 %v5888
    %v6283 = vunpack.c.l.b16 %v5889
    %v6284 = vunpack.c.h.b16 %v5889
    %v6285 = vunpack.c.l.b16 %v5890
    %v6286 = vunpack.c.h.b16 %v5890
    %v6287 = vunpack.c.l.b16 %v5891
    %v6288 = vunpack.c.h.b16 %v5891
    %v6289 = vunpack.c.l.b16 %v5892
    %v6290 = vunpack.c.h.b16 %v5892
    %v6291 = vunpack.c.l.b16 %v5893
    %v6292 = vunpack.c.h.b16 %v5893
    %v6293 = vunpack.c.l.b16 %v5894
    %v6294 = vunpack.c.h.b16 %v5894
    %v6295 = vunpack.c.l.b16 %v5895
    %v6296 = vunpack.c.h.b16 %v5895
    %v6297 = vunpack.c.l.b16 %v5896
    %v6298 = vunpack.c.h.b16 %v5896
    %v6299 = vunpack.c.l.b16 %v5897
    %v6300 = vunpack.c.h.b16 %v5897
    %v6301 = vunpack.c.l.b16 %v5898
    %v6302 = vunpack.c.h.b16 %v5898
    %v6303 = vunpack.c.l.b16 %v5899
    %v6304 = vunpack.c.h.b16 %v5899
    %v6305 = vunpack.c.l.b16 %v5900
    %v6306 = vunpack.c.h.b16 %v5900
    %v6307 = vpack.c.b16 %v6055, %v6051
    %v6308 = vpack.c.b16 %v6056, %v6052
    %v6309 = vpack.c.b16 %v6057, %v6053
    %v6310 = vpack.c.b16 %v6058, %v6054
    %v6311 = vpack.c.b16 %v6063, %v6059
    %v6312 = vpack.c.b16 %v6064, %v6060
    %v6313 = vpack.c.b16 %v6065, %v6061
    %v6314 = vpack.c.b16 %v6066, %v6062
    %v6315 = vpack.c.b16 %v6071, %v6067
    %v6316 = vpack.c.b16 %v6072, %v6068
    %v6317 = vpack.c.b16 %v6073, %v6069
    %v6318 = vpack.c.b16 %v6074, %v6070
    %v6319 = vpack.c.b16 %v6079, %v6075
    %v6320 = vpack.c.b16 %v6080, %v6076
    %v6321 = vpack.c.b16 %v6081, %v6077
    %v6322 = vpack.c.b16 %v6082, %v6078
    %v6323 = vpack.c.b16 %v6087, %v6083
    %v6324 = vpack.c.b16 %v6088, %v6084
    %v6325 = vpack.c.b16 %v6089, %v6085
    %v6326 = vpack.c.b16 %v6090, %v6086
    %v6327 = vpack.c.b16 %v6095, %v6091
    %v6328 = vpack.c.b16 %v6096, %v6092
    %v6329 = vpack.c.b16 %v6097, %v6093
    %v6330 = vpack.c.b16 %v6098, %v6094
    %v6331 = vpack.c.b16 %v6103, %v6099
    %v6332 = vpack.c.b16 %v6104, %v6100
    %v6333 = vpack.c.b16 %v6105, %v6101
    %v6334 = vpack.c.b16 %v6106, %v6102
    %v6335 = vpack.c.b16 %v6111, %v6107
    %v6336 = vpack.c.b16 %v6112, %v6108
    %v6337 = vpack.c.b16 %v6113, %v6109
    %v6338 = vpack.c.b16 %v6114, %v6110
    %v6339 = vpack.c.b16 %v6119, %v6115
    %v6340 = vpack.c.b16 %v6120, %v6116
    %v6341 = vpack.c.b16 %v6121, %v6117
    %v6342 = vpack.c.b16 %v6122, %v6118
    %v6343 = vpack.c.b16 %v6127, %v6123
    %v6344 = vpack.c.b16 %v6128, %v6124
    %v6345 = vpack.c.b16 %v6129, %v6125
    %v6346 = vpack.c.b16 %v6130, %v6126
    %v6347 = vpack.c.b16 %v6135, %v6131
    %v6348 = vpack.c.b16 %v6136, %v6132
    %v6349 = vpack.c.b16 %v6137, %v6133
    %v6350 = vpack.c.b16 %v6138, %v6134
    %v6351 = vpack.c.b16 %v6143, %v6139
    %v6352 = vpack.c.b16 %v6144, %v6140
    %v6353 = vpack.c.b16 %v6145, %v6141
    %v6354 = vpack.c.b16 %v6146, %v6142
    %v6355 = vpack.c.b16 %v6151, %v6147
    %v6356 = vpack.c.b16 %v6152, %v6148
    %v6357 = vpack.c.b16 %v6153, %v6149
    %v6358 = vpack.c.b16 %v6154, %v6150
    %v6359 = vpack.c.b16 %v6159, %v6155
    %v6360 = vpack.c.b16 %v6160, %v6156
    %v6361 = vpack.c.b16 %v6161, %v6157
    %v6362 = vpack.c.b16 %v6162, %v6158
    %v6363 = vpack.c.b16 %v6167, %v6163
    %v6364 = vpack.c.b16 %v6168, %v6164
    %v6365 = vpack.c.b16 %v6169, %v6165
    %v6366 = vpack.c.b16 %v6170, %v6166
    %v6367 = vpack.c.b16 %v6175, %v6171
    %v6368 = vpack.c.b16 %v6176, %v6172
    %v6369 = vpack.c.b16 %v6177, %v6173
    %v6370 = vpack.c.b16 %v6178, %v6174
    %v6371 = vpack.c.b16 %v6183, %v6179
    %v6372 = vpack.c.b16 %v6184, %v6180
    %v6373 = vpack.c.b16 %v6185, %v6181
    %v6374 = vpack.c.b16 %v6186, %v6182
    %v6375 = vpack.c.b16 %v6191, %v6187
    %v6376 = vpack.c.b16 %v6192, %v6188
    %v6377 = vpack.c.b16 %v6193, %v6189
    %v6378 = vpack.c.b16 %v6194, %v6190
    %v6379 = vpack.c.b16 %v6199, %v6195
    %v6380 = vpack.c.b16 %v6200, %v6196
    %v6381 = vpack.c.b16 %v6201, %v6197
    %v6382 = vpack.c.b16 %v6202, %v6198
    %v6383 = vpack.c.b16 %v6207, %v6203
    %v6384 = vpack.c.b16 %v6208, %v6204
    %v6385 = vpack.c.b16 %v6209, %v6205
    %v6386 = vpack.c.b16 %v6210, %v6206
    %v6387 = vpack.c.b16 %v6215, %v6211
    %v6388 = vpack.c.b16 %v6216, %v6212
    %v6389 = vpack.c.b16 %v6217, %v6213
    %v6390 = vpack.c.b16 %v6218, %v6214
    %v6391 = vpack.c.b16 %v6223, %v6219
    %v6392 = vpack.c.b16 %v6224, %v6220
    %v6393 = vpack.c.b16 %v6225, %v6221
    %v6394 = vpack.c.b16 %v6226, %v6222
    %v6395 = vpack.c.b16 %v6231, %v6227
    %v6396 = vpack.c.b16 %v6232, %v6228
    %v6397 = vpack.c.b16 %v6233, %v6229
    %v6398 = vpack.c.b16 %v6234, %v6230
    %v6399 = vpack.c.b16 %v6239, %v6235
    %v6400 = vpack.c.b16 %v6240, %v6236
    %v6401 = vpack.c.b16 %v6241, %v6237
    %v6402 = vpack.c.b16 %v6242, %v6238
    %v6403 = vpack.c.b16 %v6247, %v6243
    %v6404 = vpack.c.b16 %v6248, %v6244
    %v6405 = vpack.c.b16 %v6249, %v6245
    %v6406 = vpack.c.b16 %v6250, %v6246
    %v6407 = vpack.c.b16 %v6255, %v6251
    %v6408 = vpack.c.b16 %v6256, %v6252
    %v6409 = vpack.c.b16 %v6257, %v6253
    %v6410 = vpack.c.b16 %v6258, %v6254
    %v6411 = vpack.c.b16 %v6263, %v6259
    %v6412 = vpack.c.b16 %v6264, %v6260
    %v6413 = vpack.c.b16 %v6265, %v6261
    %v6414 = vpack.c.b16 %v6266, %v6262
    %v6415 = vpack.c.b16 %v6271, %v6267
    %v6416 = vpack.c.b16 %v6272, %v6268
    %v6417 = vpack.c.b16 %v6273, %v6269
    %v6418 = vpack.c.b16 %v6274, %v6270
    %v6419 = vpack.c.b16 %v6279, %v6275
    %v6420 = vpack.c.b16 %v6280, %v6276
    %v6421 = vpack.c.b16 %v6281, %v6277
    %v6422 = vpack.c.b16 %v6282, %v6278
    %v6423 = vpack.c.b16 %v6287, %v6283
    %v6424 = vpack.c.b16 %v6288, %v6284
    %v6425 = vpack.c.b16 %v6289, %v6285
    %v6426 = vpack.c.b16 %v6290, %v6286
    %v6427 = vpack.c.b16 %v6295, %v6291
    %v6428 = vpack.c.b16 %v6296, %v6292
    %v6429 = vpack.c.b16 %v6297, %v6293
    %v6430 = vpack.c.b16 %v6298, %v6294
    %v6431 = vpack.c.b16 %v6303, %v6299
    %v6432 = vpack.c.b16 %v6304, %v6300
    %v6433 = vpack.c.b16 %v6305, %v6301
    %v6434 = vpack.c.b16 %v6306, %v6302
    %6563 = vmatprep.subr.bf16.mxu0 %v6308
    %6564 = vmatpush1.bf16.msra.mxu0 %v6307
    %6565 = vmatprep.subr.bf16.mxu0 %v6312
    %6566 = vmatpush1.bf16.msra.mxu0 %v6311
    %6567 = vmatprep.subr.bf16.mxu0 %v6316
    %6568 = vmatpush1.bf16.msra.mxu0 %v6315
    %6569 = vmatprep.subr.bf16.mxu0 %v6320
    %6570 = vmatpush1.bf16.msra.mxu0 %v6319
    %6571 = vmatprep.subr.bf16.mxu0 %v6324
    %6572 = vmatpush1.bf16.msra.mxu0 %v6323
    %6573 = vmatprep.subr.bf16.mxu0 %v6328
    %6574 = vmatpush1.bf16.msra.mxu0 %v6327
    %6575 = vmatprep.subr.bf16.mxu0 %v6332
    %6576 = vmatpush1.bf16.msra.mxu0 %v6331
    %6577 = vmatprep.subr.bf16.mxu0 %v6336
    %6578 = vmatpush1.bf16.msra.mxu0 %v6335
    %6579 = vmatprep.subr.bf16.mxu0 %v6340
    %6580 = vmatpush1.bf16.msra.mxu0 %v6339
    %6581 = vmatprep.subr.bf16.mxu0 %v6344
    %6582 = vmatpush1.bf16.msra.mxu0 %v6343
    %6583 = vmatprep.subr.bf16.mxu0 %v6348
    %6584 = vmatpush1.bf16.msra.mxu0 %v6347
    %6585 = vmatprep.subr.bf16.mxu0 %v6352
    %6586 = vmatpush1.bf16.msra.mxu0 %v6351
    %6587 = vmatprep.subr.bf16.mxu0 %v6356
    %6588 = vmatpush1.bf16.msra.mxu0 %v6355
    %6589 = vmatprep.subr.bf16.mxu0 %v6360
    %6590 = vmatpush1.bf16.msra.mxu0 %v6359
    %6591 = vmatprep.subr.bf16.mxu0 %v6364
    %6592 = vmatpush1.bf16.msra.mxu0 %v6363
    %6593 = vmatprep.subr.bf16.mxu0 %v6368
    %6594 = vmatpush1.bf16.msra.mxu0 %v6367
    %6595 = vmatprep.mubr.bf16.mxu0 %v5770
    %6596 = vmatmul.mubr.bf16.gmra.mrb[0].mxu0 %v5769
    %v6597 = vpop.f32.mrb[0].mxu0
    %v6598 = vadd.f32 %v5906, %v6597
    %v6599 = vpop.f32.mrb[0].mxu0
    %v6600 = vadd.f32 %v5910, %v6599
    %v6601 = vpop.f32.mrb[0].mxu0
    %v6602 = vpop.f32.mrb[0].mxu0
    %6603 = vdwg.mxu0
    %6604 = vmatprep.subr.bf16.mxu0 %v6372
    %6605 = vmatpush1.bf16.msra.mxu0 %v6371
    %6606 = vmatprep.subr.bf16.mxu0 %v6376
    %6607 = vmatpush1.bf16.msra.mxu0 %v6375
    %6608 = vmatprep.subr.bf16.mxu0 %v6380
    %6609 = vmatpush1.bf16.msra.mxu0 %v6379
    %6610 = vmatprep.subr.bf16.mxu0 %v6384
    %6611 = vmatpush1.bf16.msra.mxu0 %v6383
    %6612 = vmatprep.subr.bf16.mxu0 %v6388
    %6613 = vmatpush1.bf16.msra.mxu0 %v6387
    %6614 = vmatprep.subr.bf16.mxu0 %v6392
    %6615 = vmatpush1.bf16.msra.mxu0 %v6391
    %6616 = vmatprep.subr.bf16.mxu0 %v6396
    %6617 = vmatpush1.bf16.msra.mxu0 %v6395
    %6618 = vmatprep.subr.bf16.mxu0 %v6400
    %6619 = vmatpush1.bf16.msra.mxu0 %v6399
    %6620 = vmatprep.subr.bf16.mxu0 %v6404
    %6621 = vmatpush1.bf16.msra.mxu0 %v6403
    %6622 = vmatprep.subr.bf16.mxu0 %v6408
    %6623 = vmatpush1.bf16.msra.mxu0 %v6407
    %6624 = vmatprep.subr.bf16.mxu0 %v6412
    %6625 = vmatpush1.bf16.msra.mxu0 %v6411
    %6626 = vmatprep.subr.bf16.mxu0 %v6416
    %6627 = vmatpush1.bf16.msra.mxu0 %v6415
    %6628 = vmatprep.subr.bf16.mxu0 %v6420
    %6629 = vmatpush1.bf16.msra.mxu0 %v6419
    %6630 = vmatprep.subr.bf16.mxu0 %v6424
    %6631 = vmatpush1.bf16.msra.mxu0 %v6423
    %6632 = vmatprep.subr.bf16.mxu0 %v6428
    %6633 = vmatpush1.bf16.msra.mxu0 %v6427
    %6634 = vmatprep.subr.bf16.mxu0 %v6432
    %6635 = vmatpush1.bf16.msra.mxu0 %v6431
    %6636 = vmatprep.mubr.bf16.mxu0 %v5772
    %6637 = vmatmul.mubr.bf16.gmra.mrb[0].mxu0 %v5771
    %v6638 = vpop.f32.mrb[0].mxu0
    %v6639 = vadd.f32 %v6598, %v6638
    %v6640 = vpop.f32.mrb[0].mxu0
    %v6641 = vadd.f32 %v6600, %v6640
    %v6642 = vpop.f32.mrb[0].mxu0
    %v6643 = vpop.f32.mrb[0].mxu0
    %6644 = vdwg.mxu0
    %6645 = vmatprep.subr.bf16.mxu0 %v6310
    %6646 = vmatpush1.bf16.msra.mxu0 %v6309
    %6647 = vmatprep.subr.bf16.mxu0 %v6314
    %6648 = vmatpush1.bf16.msra.mxu0 %v6313
    %6649 = vmatprep.subr.bf16.mxu0 %v6318
    %6650 = vmatpush1.bf16.msra.mxu0 %v6317
    %6651 = vmatprep.subr.bf16.mxu0 %v6322
    %6652 = vmatpush1.bf16.msra.mxu0 %v6321
    %6653 = vmatprep.subr.bf16.mxu0 %v6326
    %6654 = vmatpush1.bf16.msra.mxu0 %v6325
    %6655 = vmatprep.subr.bf16.mxu0 %v6330
    %6656 = vmatpush1.bf16.msra.mxu0 %v6329
    %6657 = vmatprep.subr.bf16.mxu0 %v6334
    %6658 = vmatpush1.bf16.msra.mxu0 %v6333
    %6659 = vmatprep.subr.bf16.mxu0 %v6338
    %6660 = vmatpush1.bf16.msra.mxu0 %v6337
    %6661 = vmatprep.subr.bf16.mxu0 %v6342
    %6662 = vmatpush1.bf16.msra.mxu0 %v6341
    %6663 = vmatprep.subr.bf16.mxu0 %v6346
    %6664 = vmatpush1.bf16.msra.mxu0 %v6345
    %6665 = vmatprep.subr.bf16.mxu0 %v6350
    %6666 = vmatpush1.bf16.msra.mxu0 %v6349
    %6667 = vmatprep.subr.bf16.mxu0 %v6354
    %6668 = vmatpush1.bf16.msra.mxu0 %v6353
    %6669 = vmatprep.subr.bf16.mxu0 %v6358
    %6670 = vmatpush1.bf16.msra.mxu0 %v6357
    %6671 = vmatprep.subr.bf16.mxu0 %v6362
    %6672 = vmatpush1.bf16.msra.mxu0 %v6361
    %6673 = vmatprep.subr.bf16.mxu0 %v6366
    %6674 = vmatpush1.bf16.msra.mxu0 %v6365
    %6675 = vmatprep.subr.bf16.mxu0 %v6370
    %6676 = vmatpush1.bf16.msra.mxu0 %v6369
    %6677 = vmatprep.mubr.bf16.mxu0 %v5770
    %6678 = vmatmul.mubr.bf16.gmra.mrb[0].mxu0 %v5769
    %v6679 = vpop.f32.mrb[0].mxu0
    %v6680 = vadd.f32 %v5914, %v6679
    %v6681 = vpop.f32.mrb[0].mxu0
    %v6682 = vadd.f32 %v5918, %v6681
    %v6683 = vpop.f32.mrb[0].mxu0
    %v6684 = vpop.f32.mrb[0].mxu0
    %6685 = vdwg.mxu0
    %6686 = vmatprep.subr.bf16.mxu0 %v6374
    %6687 = vmatpush1.bf16.msra.mxu0 %v6373
    %6688 = vmatprep.subr.bf16.mxu0 %v6378
    %6689 = vmatpush1.bf16.msra.mxu0 %v6377
    %6690 = vmatprep.subr.bf16.mxu0 %v6382
    %6691 = vmatpush1.bf16.msra.mxu0 %v6381
    %6692 = vmatprep.subr.bf16.mxu0 %v6386
    %6693 = vmatpush1.bf16.msra.mxu0 %v6385
    %6694 = vmatprep.subr.bf16.mxu0 %v6390
    %6695 = vmatpush1.bf16.msra.mxu0 %v6389
    %6696 = vmatprep.subr.bf16.mxu0 %v6394
    %6697 = vmatpush1.bf16.msra.mxu0 %v6393
    %6698 = vmatprep.subr.bf16.mxu0 %v6398
    %6699 = vmatpush1.bf16.msra.mxu0 %v6397
    %6700 = vmatprep.subr.bf16.mxu0 %v6402
    %6701 = vmatpush1.bf16.msra.mxu0 %v6401
    %6702 = vmatprep.subr.bf16.mxu0 %v6406
    %6703 = vmatpush1.bf16.msra.mxu0 %v6405
    %6704 = vmatprep.subr.bf16.mxu0 %v6410
    %6705 = vmatpush1.bf16.msra.mxu0 %v6409
    %6706 = vmatprep.subr.bf16.mxu0 %v6414
    %6707 = vmatpush1.bf16.msra.mxu0 %v6413
    %6708 = vmatprep.subr.bf16.mxu0 %v6418
    %6709 = vmatpush1.bf16.msra.mxu0 %v6417
    %6710 = vmatprep.subr.bf16.mxu0 %v6422
    %6711 = vmatpush1.bf16.msra.mxu0 %v6421
    %6712 = vmatprep.subr.bf16.mxu0 %v6426
    %6713 = vmatpush1.bf16.msra.mxu0 %v6425
    %6714 = vmatprep.subr.bf16.mxu0 %v6430
    %6715 = vmatpush1.bf16.msra.mxu0 %v6429
    %6716 = vmatprep.subr.bf16.mxu0 %v6434
    %6717 = vmatpush1.bf16.msra.mxu0 %v6433
    %6718 = vmatprep.mubr.bf16.mxu0 %v5772
    %6719 = vmatmul.mubr.bf16.gmra.mrb[0].mxu0 %v5771
    %v6720 = vpop.f32.mrb[0].mxu0
    %v6721 = vadd.f32 %v6680, %v6720
    %v6722 = vpop.f32.mrb[0].mxu0
    %v6723 = vadd.f32 %v6682, %v6722
    %v6724 = vpop.f32.mrb[0].mxu0
    %v6725 = vpop.f32.mrb[0].mxu0
    %6726 = vdwg.mxu0
    %v6727 = vmax.f32 %v6639, 0.0
    %v6728 = vmax.f32 %v6641, 0.0
    %v6729 = vmax.f32 %v6721, 0.0
    %v6730 = vmax.f32 %v6723, 0.0
    %v6731 = vpack.c.bf16 %v6727, %v6727
    %v6732 = vpack.c.bf16 %v6728, %v6728
    %v6733 = vpack.c.bf16 %v6729, %v6729
    %v6734 = vpack.c.bf16 %v6730, %v6730
    %v6735 = vld [vmem:[#allocation9] sm:$0xf]
    %v6736 = vld [vmem:[#allocation9 + $0x4] sm:$0xf]
    %v6737 = vld [vmem:[#allocation9 + $0x8] sm:$0xf]
    %v6738 = vld [vmem:[#allocation9 + $0xc] sm:$0xf]
    %v6739 = vld [vmem:[#allocation9 + $0x10] sm:$0xf]
    %v6740 = vld [vmem:[#allocation9 + $0x14] sm:$0xf]
    %v6741 = vld [vmem:[#allocation9 + $0x18] sm:$0xf]
    %v6742 = vld [vmem:[#allocation9 + $0x1c] sm:$0xf]
    %v6743 = vld [vmem:[#allocation9 + $0x20] sm:$0xf]
    %v6744 = vld [vmem:[#allocation9 + $0x24] sm:$0xf]
    %v6745 = vld [vmem:[#allocation9 + $0x28] sm:$0xf]
    %v6746 = vld [vmem:[#allocation9 + $0x2c] sm:$0xf]
    %v6747 = vld [vmem:[#allocation9 + $0x30] sm:$0xf]
    %v6748 = vld [vmem:[#allocation9 + $0x34] sm:$0xf]
    %v6749 = vld [vmem:[#allocation9 + $0x38] sm:$0xf]
    %v6750 = vld [vmem:[#allocation9 + $0x3c] sm:$0xf]
    %v6751 = vld [vmem:[#allocation9 + $0x40] sm:$0xf]
    %v6752 = vld [vmem:[#allocation9 + $0x44] sm:$0xf]
    %v6753 = vld [vmem:[#allocation9 + $0x48] sm:$0xf]
    %v6754 = vld [vmem:[#allocation9 + $0x4c] sm:$0xf]
    %v6755 = vld [vmem:[#allocation9 + $0x50] sm:$0xf]
    %v6756 = vld [vmem:[#allocation9 + $0x54] sm:$0xf]
    %v6757 = vld [vmem:[#allocation9 + $0x58] sm:$0xf]
    %v6758 = vld [vmem:[#allocation9 + $0x5c] sm:$0xf]
    %v6759 = vld [vmem:[#allocation9 + $0x60] sm:$0xf]
    %v6760 = vld [vmem:[#allocation9 + $0x64] sm:$0xf]
    %v6761 = vld [vmem:[#allocation9 + $0x68] sm:$0xf]
    %v6762 = vld [vmem:[#allocation9 + $0x6c] sm:$0xf]
    %v6763 = vld [vmem:[#allocation9 + $0x70] sm:$0xf]
    %v6764 = vld [vmem:[#allocation9 + $0x74] sm:$0xf]
    %v6765 = vld [vmem:[#allocation9 + $0x78] sm:$0xf]
    %v6766 = vld [vmem:[#allocation9 + $0x7c] sm:$0xf]
    %v6767 = vld [vmem:[#allocation9 + $0x80] sm:$0xf]
    %v6768 = vld [vmem:[#allocation9 + $0x84] sm:$0xf]
    %v6769 = vld [vmem:[#allocation9 + $0x88] sm:$0xf]
    %v6770 = vld [vmem:[#allocation9 + $0x8c] sm:$0xf]
    %v6771 = vld [vmem:[#allocation9 + $0x90] sm:$0xf]
    %v6772 = vld [vmem:[#allocation9 + $0x94] sm:$0xf]
    %v6773 = vld [vmem:[#allocation9 + $0x98] sm:$0xf]
    %v6774 = vld [vmem:[#allocation9 + $0x9c] sm:$0xf]
    %v6775 = vld [vmem:[#allocation9 + $0xa0] sm:$0xf]
    %v6776 = vld [vmem:[#allocation9 + $0xa4] sm:$0xf]
    %v6777 = vld [vmem:[#allocation9 + $0xa8] sm:$0xf]
    %v6778 = vld [vmem:[#allocation9 + $0xac] sm:$0xf]
    %v6779 = vld [vmem:[#allocation9 + $0xb0] sm:$0xf]
    %v6780 = vld [vmem:[#allocation9 + $0xb4] sm:$0xf]
    %v6781 = vld [vmem:[#allocation9 + $0xb8] sm:$0xf]
    %v6782 = vld [vmem:[#allocation9 + $0xbc] sm:$0xf]
    %v6783 = vld [vmem:[#allocation9 + $0xc0] sm:$0xf]
    %v6784 = vld [vmem:[#allocation9 + $0xc4] sm:$0xf]
    %v6785 = vld [vmem:[#allocation9 + $0xc8] sm:$0xf]
    %v6786 = vld [vmem:[#allocation9 + $0xcc] sm:$0xf]
    %v6787 = vld [vmem:[#allocation9 + $0xd0] sm:$0xf]
    %v6788 = vld [vmem:[#allocation9 + $0xd4] sm:$0xf]
    %v6789 = vld [vmem:[#allocation9 + $0xd8] sm:$0xf]
    %v6790 = vld [vmem:[#allocation9 + $0xdc] sm:$0xf]
    %v6791 = vld [vmem:[#allocation9 + $0xe0] sm:$0xf]
    %v6792 = vld [vmem:[#allocation9 + $0xe4] sm:$0xf]
    %v6793 = vld [vmem:[#allocation9 + $0xe8] sm:$0xf]
    %v6794 = vld [vmem:[#allocation9 + $0xec] sm:$0xf]
    %v6795 = vld [vmem:[#allocation9 + $0xf0] sm:$0xf]
    %v6796 = vld [vmem:[#allocation9 + $0xf4] sm:$0xf]
    %v6797 = vld [vmem:[#allocation9 + $0xf8] sm:$0xf]
    %v6798 = vld [vmem:[#allocation9 + $0xfc] sm:$0xf]
    %v6799 = vld [vmem:[#allocation10] sm:$0x1]
    %v6801 = vlaneseq
    %v6802 = vshrl.u32 %v6801, 7
    %v6803 = vsub.s32 0, %v6802
    %v6804 = vrot.slane %v6799, %v6803
    %v6870 = vunpack.c.l.b16 %v6735
    %v6871 = vunpack.c.l.b16 %v6736
    %v6872 = vunpack.c.l.b16 %v6737
    %v6873 = vunpack.c.l.b16 %v6738
    %v6874 = vunpack.c.l.b16 %v6739
    %v6875 = vunpack.c.l.b16 %v6740
    %v6876 = vunpack.c.l.b16 %v6741
    %v6877 = vunpack.c.l.b16 %v6742
    %v6878 = vunpack.c.l.b16 %v6743
    %v6879 = vunpack.c.l.b16 %v6744
    %v6880 = vunpack.c.l.b16 %v6745
    %v6881 = vunpack.c.l.b16 %v6746
    %v6882 = vunpack.c.l.b16 %v6747
    %v6883 = vunpack.c.l.b16 %v6748
    %v6884 = vunpack.c.l.b16 %v6749
    %v6885 = vunpack.c.l.b16 %v6750
    %v6886 = vunpack.c.l.b16 %v6751
    %v6887 = vunpack.c.l.b16 %v6752
    %v6888 = vunpack.c.l.b16 %v6753
    %v6889 = vunpack.c.l.b16 %v6754
    %v6890 = vunpack.c.l.b16 %v6755
    %v6891 = vunpack.c.l.b16 %v6756
    %v6892 = vunpack.c.l.b16 %v6757
    %v6893 = vunpack.c.l.b16 %v6758
    %v6894 = vunpack.c.l.b16 %v6759
    %v6895 = vunpack.c.l.b16 %v6760
    %v6896 = vunpack.c.l.b16 %v6761
    %v6897 = vunpack.c.l.b16 %v6762
    %v6898 = vunpack.c.l.b16 %v6763
    %v6899 = vunpack.c.l.b16 %v6764
    %v6900 = vunpack.c.l.b16 %v6765
    %v6901 = vunpack.c.l.b16 %v6766
    %v6902 = vunpack.c.l.b16 %v6767
    %v6903 = vunpack.c.l.b16 %v6768
    %v6904 = vunpack.c.l.b16 %v6769
    %v6905 = vunpack.c.l.b16 %v6770
    %v6906 = vunpack.c.l.b16 %v6771
    %v6907 = vunpack.c.l.b16 %v6772
    %v6908 = vunpack.c.l.b16 %v6773
    %v6909 = vunpack.c.l.b16 %v6774
    %v6910 = vunpack.c.l.b16 %v6775
    %v6911 = vunpack.c.l.b16 %v6776
    %v6912 = vunpack.c.l.b16 %v6777
    %v6913 = vunpack.c.l.b16 %v6778
    %v6914 = vunpack.c.l.b16 %v6779
    %v6915 = vunpack.c.l.b16 %v6780
    %v6916 = vunpack.c.l.b16 %v6781
    %v6917 = vunpack.c.l.b16 %v6782
    %v6918 = vunpack.c.l.b16 %v6783
    %v6919 = vunpack.c.l.b16 %v6784
    %v6920 = vunpack.c.l.b16 %v6785
    %v6921 = vunpack.c.l.b16 %v6786
    %v6922 = vunpack.c.l.b16 %v6787
    %v6923 = vunpack.c.l.b16 %v6788
    %v6924 = vunpack.c.l.b16 %v6789
    %v6925 = vunpack.c.l.b16 %v6790
    %v6926 = vunpack.c.l.b16 %v6791
    %v6927 = vunpack.c.l.b16 %v6792
    %v6928 = vunpack.c.l.b16 %v6793
    %v6929 = vunpack.c.l.b16 %v6794
    %v6930 = vunpack.c.l.b16 %v6795
    %v6931 = vunpack.c.l.b16 %v6796
    %v6932 = vunpack.c.l.b16 %v6797
    %v6933 = vunpack.c.l.b16 %v6798
    %v6934 = vpack.c.b16 %v6871, %v6870
    %v6935 = vpack.c.b16 %v6873, %v6872
    %v6936 = vpack.c.b16 %v6875, %v6874
    %v6937 = vpack.c.b16 %v6877, %v6876
    %v6938 = vpack.c.b16 %v6879, %v6878
    %v6939 = vpack.c.b16 %v6881, %v6880
    %v6940 = vpack.c.b16 %v6883, %v6882
    %v6941 = vpack.c.b16 %v6885, %v6884
    %v6942 = vpack.c.b16 %v6887, %v6886
    %v6943 = vpack.c.b16 %v6889, %v6888
    %v6944 = vpack.c.b16 %v6891, %v6890
    %v6945 = vpack.c.b16 %v6893, %v6892
    %v6946 = vpack.c.b16 %v6895, %v6894
    %v6947 = vpack.c.b16 %v6897, %v6896
    %v6948 = vpack.c.b16 %v6899, %v6898
    %v6949 = vpack.c.b16 %v6901, %v6900
    %v6950 = vpack.c.b16 %v6903, %v6902
    %v6951 = vpack.c.b16 %v6905, %v6904
    %v6952 = vpack.c.b16 %v6907, %v6906
    %v6953 = vpack.c.b16 %v6909, %v6908
    %v6954 = vpack.c.b16 %v6911, %v6910
    %v6955 = vpack.c.b16 %v6913, %v6912
    %v6956 = vpack.c.b16 %v6915, %v6914
    %v6957 = vpack.c.b16 %v6917, %v6916
    %v6958 = vpack.c.b16 %v6919, %v6918
    %v6959 = vpack.c.b16 %v6921, %v6920
    %v6960 = vpack.c.b16 %v6923, %v6922
    %v6961 = vpack.c.b16 %v6925, %v6924
    %v6962 = vpack.c.b16 %v6927, %v6926
    %v6963 = vpack.c.b16 %v6929, %v6928
    %v6964 = vpack.c.b16 %v6931, %v6930
    %v6965 = vpack.c.b16 %v6933, %v6932
    %6998 = vmatprep.subr.bf16.mxu0 0
    %6999 = vmatpush1.bf16.msra.mxu0 %v6934
    %7000 = vmatprep.subr.bf16.mxu0 0
    %7001 = vmatpush1.bf16.msra.mxu0 %v6935
    %7002 = vmatprep.subr.bf16.mxu0 0
    %7003 = vmatpush1.bf16.msra.mxu0 %v6936
    %7004 = vmatprep.subr.bf16.mxu0 0
    %7005 = vmatpush1.bf16.msra.mxu0 %v6937
    %7006 = vmatprep.subr.bf16.mxu0 0
    %7007 = vmatpush1.bf16.msra.mxu0 %v6938
    %7008 = vmatprep.subr.bf16.mxu0 0
    %7009 = vmatpush1.bf16.msra.mxu0 %v6939
    %7010 = vmatprep.subr.bf16.mxu0 0
    %7011 = vmatpush1.bf16.msra.mxu0 %v6940
    %7012 = vmatprep.subr.bf16.mxu0 0
    %7013 = vmatpush1.bf16.msra.mxu0 %v6941
    %7014 = vmatprep.subr.bf16.mxu0 0
    %7015 = vmatpush1.bf16.msra.mxu0 %v6942
    %7016 = vmatprep.subr.bf16.mxu0 0
    %7017 = vmatpush1.bf16.msra.mxu0 %v6943
    %7018 = vmatprep.subr.bf16.mxu0 0
    %7019 = vmatpush1.bf16.msra.mxu0 %v6944
    %7020 = vmatprep.subr.bf16.mxu0 0
    %7021 = vmatpush1.bf16.msra.mxu0 %v6945
    %7022 = vmatprep.subr.bf16.mxu0 0
    %7023 = vmatpush1.bf16.msra.mxu0 %v6946
    %7024 = vmatprep.subr.bf16.mxu0 0
    %7025 = vmatpush1.bf16.msra.mxu0 %v6947
    %7026 = vmatprep.subr.bf16.mxu0 0
    %7027 = vmatpush1.bf16.msra.mxu0 %v6948
    %7028 = vmatprep.subr.bf16.mxu0 0
    %7029 = vmatpush1.bf16.msra.mxu0 %v6949
    %7030 = vmatprep.mubr.bf16.mxu0 %v6732
    %7031 = vmatmul.mubr.bf16.gmra.mrb[0].mxu0 %v6731
    %v7032 = vpop.f32.mrb[0].mxu0
    %v7033 = vadd.f32 %v6804, %v7032
    %v7034 = vpop.f32.mrb[0].mxu0
    %v7035 = vpop.f32.mrb[0].mxu0
    %v7036 = vpop.f32.mrb[0].mxu0
    %7037 = vdwg.mxu0
    %7038 = vmatprep.subr.bf16.mxu0 0
    %7039 = vmatpush1.bf16.msra.mxu0 %v6950
    %7040 = vmatprep.subr.bf16.mxu0 0
    %7041 = vmatpush1.bf16.msra.mxu0 %v6951
    %7042 = vmatprep.subr.bf16.mxu0 0
    %7043 = vmatpush1.bf16.msra.mxu0 %v6952
    %7044 = vmatprep.subr.bf16.mxu0 0
    %7045 = vmatpush1.bf16.msra.mxu0 %v6953
    %7046 = vmatprep.subr.bf16.mxu0 0
    %7047 = vmatpush1.bf16.msra.mxu0 %v6954
    %7048 = vmatprep.subr.bf16.mxu0 0
    %7049 = vmatpush1.bf16.msra.mxu0 %v6955
    %7050 = vmatprep.subr.bf16.mxu0 0
    %7051 = vmatpush1.bf16.msra.mxu0 %v6956
    %7052 = vmatprep.subr.bf16.mxu0 0
    %7053 = vmatpush1.bf16.msra.mxu0 %v6957
    %7054 = vmatprep.subr.bf16.mxu0 0
    %7055 = vmatpush1.bf16.msra.mxu0 %v6958
    %7056 = vmatprep.subr.bf16.mxu0 0
    %7057 = vmatpush1.bf16.msra.mxu0 %v6959
    %7058 = vmatprep.subr.bf16.mxu0 0
    %7059 = vmatpush1.bf16.msra.mxu0 %v6960
    %7060 = vmatprep.subr.bf16.mxu0 0
    %7061 = vmatpush1.bf16.msra.mxu0 %v6961
    %7062 = vmatprep.subr.bf16.mxu0 0
    %7063 = vmatpush1.bf16.msra.mxu0 %v6962
    %7064 = vmatprep.subr.bf16.mxu0 0
    %7065 = vmatpush1.bf16.msra.mxu0 %v6963
    %7066 = vmatprep.subr.bf16.mxu0 0
    %7067 = vmatpush1.bf16.msra.mxu0 %v6964
    %7068 = vmatprep.subr.bf16.mxu0 0
    %7069 = vmatpush1.bf16.msra.mxu0 %v6965
    %7070 = vmatprep.mubr.bf16.mxu0 %v6734
    %7071 = vmatmul.mubr.bf16.gmra.mrb[0].mxu0 %v6733
    %v7072 = vpop.f32.mrb[0].mxu0
    %v7073 = vadd.f32 %v7033, %v7072
    %v7074 = vpop.f32.mrb[0].mxu0
    %v7075 = vpop.f32.mrb[0].mxu0
    %v7076 = vpop.f32.mrb[0].mxu0
    %7077 = vdwg.mxu0
    %7078 = vst [vmem:[%s7] sm:$0xff] %v7073
    // Predicated region
    $region54: #{mlp_forward.1} parent=1 // pred_check
      _
    $region55: #{mlp_forward.1} parent=1 // pred_check_branch
      %7080 = sbr.rel (0) target = $region57
    $region56: #{mlp_forward.1} parent=1 // pred_region
      _
    $region57: #{mlp_forward.1} parent=1 // pred_fallthru
      _
    // Predicated region
    $region58: #{mlp_forward.1} parent=1 // pred_check
      _
    $region59: #{mlp_forward.1} parent=1 // pred_check_branch
      %7082 = sbr.rel (0) target = $region61
    $region60: #{mlp_forward.1} parent=1 // pred_region
      _
    $region61: #{mlp_forward.1} parent=1 // pred_fallthru
      _
    %7083 = vsyncpa [#allocation3], 1
    %7084 = vsyncpa [#allocation5], 1
    %7085 = vsyncpa [#allocation8], 1
    %7086 = vsyncpa [#allocation11], 1

</llo_original>
